<compile_context>
chip_gen: v7x
topology: tpu7x:2x2x1
jax: 0.10.0
libtpu: 0.0.40
codegen_flags: <defaults>
</compile_context>

<pallas_src>
import jax
import jax.numpy as jnp
import numpy as np
from jax.experimental import pallas as pl
from jax.experimental.pallas import tpu as pltpu


def _rup(n, m):
    return ((n + m - 1) // m) * m


# ------------------------- the fused Pallas kernel -------------------------

def _make_lenet_kernel(blk1, blk2, num_classes):

    def _sigmoid(z):
        # single EUP op (tanh), exact; keeps VALU free at large row blocks
        return 0.5 * (1.0 + jnp.tanh(0.5 * z))

    def kernel(x_ref, w1_ref, w2_ref, wl1_ref, bl1_ref, wl2_ref, bl2_ref,
               wl3_ref, bl3_ref, y_ref, loss_ref):
        # conv1 (+ implicit im2col + 2x2 avg-pool quadrant placement, folded into w1)
        z1 = jnp.dot(x_ref[...], w1_ref[...], preferred_element_type=jnp.float32)
        s1 = _sigmoid(z1)                                   # (rows, 4*blk1)
        f1 = 0.25 * (s1[:, 0:blk1] + s1[:, blk1:2 * blk1]
                     + s1[:, 2 * blk1:3 * blk1] + s1[:, 3 * blk1:4 * blk1])

        # conv2 (same trick)
        z2 = jnp.dot(f1.astype(jnp.bfloat16), w2_ref[...],
                     preferred_element_type=jnp.float32)
        s2 = _sigmoid(z2)                                   # (rows, 4*blk2)
        p2 = 0.25 * (s2[:, 0:blk2] + s2[:, blk2:2 * blk2]
                     + s2[:, 2 * blk2:3 * blk2] + s2[:, 3 * blk2:4 * blk2])

        # MLP head (no nonlinearity between linears, per the torch module)
        h = jnp.dot(p2.astype(jnp.bfloat16), wl1_ref[...],
                    preferred_element_type=jnp.float32) + bl1_ref[...]
        h = jnp.dot(h.astype(jnp.bfloat16), wl2_ref[...],
                    preferred_element_type=jnp.float32) + bl2_ref[...]
        logits = jnp.dot(h.astype(jnp.bfloat16), wl3_ref[...],
                         preferred_element_type=jnp.float32) + bl3_ref[...]

        # log_softmax over the real classes only (padded lanes -> -1e30)
        lane = jax.lax.broadcasted_iota(jnp.int32, logits.shape, 1)
        logits = jnp.where(lane < num_classes, logits, -1e30)
        m = jnp.max(logits, axis=-1, keepdims=True)
        lse = m + jnp.log(jnp.sum(jnp.exp(logits - m), axis=-1, keepdims=True))
        logp = logits - lse

        # lane-dense per-row / per-lane NLL contributions; padded rows and
        # padded class lanes carry a zero one-hot -> contribute exactly 0.
        loss_ref[...] = -(y_ref[...] * logp)                # (rows, 128)

    return kernel


# ------------------------- one-time weight preprocessing -------------------------

def prepare_params(params, input_shape=16, num_classes=10):
    """Fold conv im2col + 2x2 avg-pool quadrant placement into dense, lane-padded
    matrices over the UNPADDED input image.  Runs once (outside the jitted loss)."""
    K = 5
    S = input_shape
    Hp = S + 4                                  # conv1 pad=2 each side
    P1 = S // 2                                 # spatial after conv1+pool
    O2 = P1 - K + 1                             # conv2 output spatial
    Q2 = O2 // 2                                # spatial after conv2+pool

    w1 = params["conv1_w"].astype(jnp.float32)  # (6, 3, 5, 5)
    w2 = params["conv2_w"].astype(jnp.float32)  # (16, 6, 5, 5)
    co1, ci1 = w1.shape[0], w1.shape[1]
    co2, ci2 = w2.shape[0], w2.shape[1]
    CO1P = co1                                  # 6: 8*8*6 = 384 = 3*128, no pad needed
    CO2P = 32                                   # 2*2*32 = 128

    kin = _rup(ci1 * S * S, 128)                # 768 (already a multiple of 128)
    blk1 = _rup(P1 * P1 * CO1P, 128)            # 384
    blk2 = _rup(Q2 * Q2 * CO2P, 128)            # 128

    # ---- conv1: rows = (cin, r, c) of the UNPADDED image,
    #             cols = (quadrant, ph, pw, co1) lane-order
    r20 = np.arange(Hp)
    blocks1 = []
    for di in (0, 1):
        A = (r20[:, None, None] ==
             2 * np.arange(P1)[None, :, None] + di + np.arange(K)[None, None, :]
             ).astype(np.float32)               # (Hp, P1, K)
        for dj in (0, 1):
            B = (r20[:, None, None] ==
                 2 * np.arange(P1)[None, :, None] + dj + np.arange(K)[None, None, :]
                 ).astype(np.float32)
            blk = jnp.einsum('rph,cqw,oihw->ircpqo', A, B, w1)   # (ci1,Hp,Hp,P1,P1,co1)
            blk = blk[:, 2:2 + S, 2:2 + S]       # drop the zero-pad rows/cols
            blk = jnp.pad(blk, ((0, 0),) * 5 + ((0, CO1P - co1),))
            blk = blk.reshape(ci1 * S * S, P1 * P1 * CO1P)
            blk = jnp.pad(blk, ((0, kin - ci1 * S * S),
                                (0, blk1 - P1 * P1 * CO1P)))
            blocks1.append(blk)
    W1 = jnp.concatenate(blocks1, axis=1).astype(jnp.bfloat16)   # (768, 4*384)

    # ---- conv2: rows = (ph, pw, ci1) [matches F1 lanes], cols = (quad, i, j, co2pad)
    r8 = np.arange(P1)
    blocks2 = []
    for di in (0, 1):
        C = (r8[:, None, None] ==
             2 * np.arange(Q2)[None, :, None] + di + np.arange(K)[None, None, :]
             ).astype(np.float32)               # (P1, Q2, K)
        for dj in (0, 1):
            D = (r8[:, None, None] ==
                 2 * np.arange(Q2)[None, :, None] + dj + np.arange(K)[None, None, :]
                 ).astype(np.float32)
            blk = jnp.einsum('aih,bjw,ochw->abcijo', C, D, w2)   # (P1,P1,ci2,Q2,Q2,co2)
            blk = jnp.pad(blk, ((0, 0), (0, 0), (0, CO1P - ci2),
                                (0, 0), (0, 0), (0, CO2P - co2)))
            blk = blk.reshape(P1 * P1 * CO1P, Q2 * Q2 * CO2P)
            blk = jnp.pad(blk, ((0, blk1 - P1 * P1 * CO1P),
                                (0, blk2 - Q2 * Q2 * CO2P)))
            blocks2.append(blk)
    W2 = jnp.concatenate(blocks2, axis=1).astype(jnp.bfloat16)   # (384, 4*128)

    # ---- linear1: remap torch's channel-major flatten (co, i, j) to lane order (i, j, co)
    h1, h2 = params["lin1_w"].shape[0], params["lin2_w"].shape[0]
    l1 = params["lin1_w"].T.reshape(co2, Q2, Q2, h1)             # rows (co, i, j)
    l1 = jnp.transpose(l1, (1, 2, 0, 3))                         # (i, j, co, h1)
    l1 = jnp.pad(l1, ((0, 0), (0, 0), (0, CO2P - co2), (0, 128 - h1)))
    WL1 = l1.reshape(Q2 * Q2 * CO2P, 128)
    WL1 = jnp.pad(WL1, ((0, blk2 - Q2 * Q2 * CO2P), (0, 0))).astype(jnp.bfloat16)
    BL1 = jnp.pad(params["lin1_b"], (0, 128 - h1)).reshape(1, 128).astype(jnp.float32)

    WL2 = jnp.pad(params["lin2_w"].T, ((0, 128 - h1), (0, 128 - h2))).astype(jnp.bfloat16)
    BL2 = jnp.pad(params["lin2_b"], (0, 128 - h2)).reshape(1, 128).astype(jnp.float32)
    WL3 = jnp.pad(params["lin3_w"].T,
                  ((0, 128 - h2), (0, 128 - num_classes))).astype(jnp.bfloat16)
    BL3 = jnp.pad(params["lin3_b"], (0, 128 - num_classes)).reshape(1, 128).astype(jnp.float32)

    return {"W1": W1, "W2": W2, "WL1": WL1, "BL1": BL1,
            "WL2": WL2, "BL2": BL2, "WL3": WL3, "BL3": BL3}


# ------------------------- loss wrapper (one pallas_call) -------------------------

def lenet_loss(x_nchw, y_true, prepped, num_classes=10):
    B = x_nchw.shape[0]
    kin = prepped["W1"].shape[0]
    blk1 = prepped["W1"].shape[1] // 4
    blk2 = prepped["W2"].shape[1] // 4

    # batch row-block grid: weights stay VMEM-resident (constant index_maps),
    # row blocks shard across TensorCores ("parallel") on v7x.
    RBLK = min(256, _rup(max(B, 8), 8))         # rows per grid step (sublane multiple)
    RB = _rup(max(B, 8), RBLK)                  # total padded rows
    nblk = RB // RBLK

    # activations: lane order (cin, r, c) of the UNPADDED image (no conv pad needed)
    xf = x_nchw.astype(jnp.float32).reshape(B, -1)
    xf = jnp.pad(xf, ((0, RB - B), (0, kin - xf.shape[1]))).astype(jnp.bfloat16)

    y1 = jax.nn.one_hot(y_true, num_classes, dtype=jnp.float32)
    y1 = jnp.pad(y1, ((0, RB - B), (0, 128 - num_classes)))

    kernel = _make_lenet_kernel(blk1, blk2, num_classes)

    def _const_spec(arr):
        # full-array block, constant index -> DMA'd once, resident across grid steps
        return pl.BlockSpec(arr.shape, lambda i: (0, 0))

    per_elem = pl.pallas_call(
        kernel,
        out_shape=jax.ShapeDtypeStruct((RB, 128), jnp.float32),
        grid=(nblk,),
        in_specs=[pl.BlockSpec((RBLK, kin), lambda i: (i, 0)),
                  _const_spec(prepped["W1"]), _const_spec(prepped["W2"]),
                  _const_spec(prepped["WL1"]), _const_spec(prepped["BL1"]),
                  _const_spec(prepped["WL2"]), _const_spec(prepped["BL2"]),
                  _const_spec(prepped["WL3"]), _const_spec(prepped["BL3"]),
                  pl.BlockSpec((RBLK, 128), lambda i: (i, 0))],
        out_specs=pl.BlockSpec((RBLK, 128), lambda i: (i, 0)),
        compiler_params=pltpu.CompilerParams(dimension_semantics=("parallel",)),
    )(xf, prepped["W1"], prepped["W2"], prepped["WL1"], prepped["BL1"],
      prepped["WL2"], prepped["BL2"], prepped["WL3"], prepped["BL3"], y1)

    # padded rows / lanes contribute exactly 0, so a flat sum is the NLL total
    return jnp.sum(per_elem) / B


# ------------------------- deterministic params & pure-JAX reference -------------------------

def init_params(key, input_shape=16, num_classes=10):
    feat = ((input_shape // 2 - 4) // 2) ** 2 * 16
    ks = jax.random.split(key, 8)

    def n(k, shape, scale):
        return scale * jax.random.normal(k, shape, jnp.float32)

    return {
        "conv1_w": n(ks[0], (6, 3, 5, 5), 0.1),      # torch Conv2d weight (O, I, kh, kw)
        "conv2_w": n(ks[1], (16, 6, 5, 5), 0.1),
        "lin1_w": n(ks[2], (120, feat), 0.05),       # torch Linear weight (out, in)
        "lin1_b": n(ks[3], (120,), 0.05),
        "lin2_w": n(ks[4], (84, 120), 0.05),
        "lin2_b": n(ks[5], (84,), 0.05),
        "lin3_w": n(ks[6], (num_classes, 84), 0.05),
        "lin3_b": n(ks[7], (num_classes,), 0.05),
    }


def reference_loss(x_nchw, y_true, params):
    sig = lambda z: 1.0 / (1.0 + jnp.exp(-z))
    out = jax.lax.conv_general_dilated(
        x_nchw, params["conv1_w"], (1, 1), ((2, 2), (2, 2)),
        dimension_numbers=("NCHW", "OIHW", "NCHW"))
    out = sig(out)
    b, c, h, w = out.shape
    out = out.reshape(b, c, h // 2, 2, w // 2, 2).mean(axis=(3, 5))
    out = jax.lax.conv_general_dilated(
        out, params["conv2_w"], (1, 1), ((0, 0), (0, 0)),
        dimension_numbers=("NCHW", "OIHW", "NCHW"))
    out = sig(out)
    b, c, h, w = out.shape
    out = out.reshape(b, c, h // 2, 2, w // 2, 2).mean(axis=(3, 5))
    out = out.reshape(b, -1)
    out = out @ params["lin1_w"].T + params["lin1_b"]
    out = out @ params["lin2_w"].T + params["lin2_b"]
    out = out @ params["lin3_w"].T + params["lin3_b"]
    logp = jax.nn.log_softmax(out, axis=-1)
    return -jnp.mean(logp[jnp.arange(b), y_true])


if __name__ == "__main__":
    input_shape, batch, num_classes = 16, 2, 10   # TorchLeNet(input_shape=16)

    key = jax.random.PRNGKey(0)
    kx, ky, kp = jax.random.split(key, 3)
    x = jax.random.normal(kx, (batch, 3, input_shape, input_shape), jnp.float32)
    y_true = jax.random.randint(ky, (batch,), 0, num_classes)
    params = init_params(kp, input_shape, num_classes)

    prepped = prepare_params(params, input_shape, num_classes)   # one-time weight prep

    loss = jax.jit(lenet_loss)(x, y_true, prepped)
    loss = jax.block_until_ready(loss)

    ref = reference_loss(x, y_true, params)
    np.testing.assert_allclose(np.asarray(loss), np.asarray(ref), rtol=2e-2, atol=2e-2)
    print("KERNEL_OK")
</pallas_src>

<mosaic_0001>
module attributes {stable_mosaic.version = 11 : i64} {
  func.func @kernel(%arg0: i32, %arg1: memref<8x768xbf16, #tpu.memory_space<vmem>>, %arg2: memref<768x1536xbf16, #tpu.memory_space<vmem>>, %arg3: memref<384x512xbf16, #tpu.memory_space<vmem>>, %arg4: memref<128x128xbf16, #tpu.memory_space<vmem>>, %arg5: memref<1x128xf32, #tpu.memory_space<vmem>>, %arg6: memref<128x128xbf16, #tpu.memory_space<vmem>>, %arg7: memref<1x128xf32, #tpu.memory_space<vmem>>, %arg8: memref<128x128xbf16, #tpu.memory_space<vmem>>, %arg9: memref<1x128xf32, #tpu.memory_space<vmem>>, %arg10: memref<8x128xf32, #tpu.memory_space<vmem>>, %arg11: memref<8x128xf32, #tpu.memory_space<vmem>>) attributes {dimension_semantics = [#tpu.dimension_semantics<parallel>], iteration_bounds = array<i64: 1>, scalar_prefetch = 0 : i64, scratch_operands = 0 : i64, tpu.core_type = #tpu.core_type<tc>, window_params = [{transform_indices = @transform_0, window_bounds = array<i64: 8, 768>}, {pipeline_mode = #tpu.pipeline_mode<synchronous>, transform_indices = @transform_1, window_bounds = array<i64: 768, 1536>}, {pipeline_mode = #tpu.pipeline_mode<synchronous>, transform_indices = @transform_2, window_bounds = array<i64: 384, 512>}, {pipeline_mode = #tpu.pipeline_mode<synchronous>, transform_indices = @transform_3, window_bounds = array<i64: 128, 128>}, {pipeline_mode = #tpu.pipeline_mode<synchronous>, transform_indices = @transform_4, window_bounds = array<i64: 1, 128>}, {pipeline_mode = #tpu.pipeline_mode<synchronous>, transform_indices = @transform_5, window_bounds = array<i64: 128, 128>}, {pipeline_mode = #tpu.pipeline_mode<synchronous>, transform_indices = @transform_6, window_bounds = array<i64: 1, 128>}, {pipeline_mode = #tpu.pipeline_mode<synchronous>, transform_indices = @transform_7, window_bounds = array<i64: 128, 128>}, {pipeline_mode = #tpu.pipeline_mode<synchronous>, transform_indices = @transform_8, window_bounds = array<i64: 1, 128>}, {transform_indices = @transform_9, window_bounds = array<i64: 8, 128>}, {transform_indices = @transform_10, window_bounds = array<i64: 8, 128>}]} {
    %c0 = arith.constant 0 : index
    %c0_0 = arith.constant 0 : index
    %0 = vector.load %arg1[%c0, %c0_0] : memref<8x768xbf16, #tpu.memory_space<vmem>>, vector<8x768xbf16>
    %c0_1 = arith.constant 0 : index
    %c0_2 = arith.constant 0 : index
    %1 = vector.load %arg2[%c0_1, %c0_2] : memref<768x1536xbf16, #tpu.memory_space<vmem>>, vector<768x1536xbf16>
    %cst = arith.constant dense<0.000000e+00> : vector<8x1536xf32>
    %2 = tpu.matmul %0, %1, %cst {dimension_numbers = #tpu.dot_dimension_numbers<[1], [0], [0], [1], [0, 0, 1, 1], [], []>} : vector<8x768xbf16>, vector<768x1536xbf16>, vector<8x1536xf32> -> vector<8x1536xf32>
    %cst_3 = arith.constant 5.000000e-01 : f32
    %3 = vector.broadcast %cst_3 : f32 to vector<8x1536xf32>
    %4 = arith.mulf %3, %2 : vector<8x1536xf32>
    %5 = math.tanh %4 : vector<8x1536xf32>
    %cst_4 = arith.constant 1.000000e+00 : f32
    %6 = vector.broadcast %cst_4 : f32 to vector<8x1536xf32>
    %7 = arith.addf %6, %5 : vector<8x1536xf32>
    %cst_5 = arith.constant 5.000000e-01 : f32
    %8 = vector.broadcast %cst_5 : f32 to vector<8x1536xf32>
    %9 = arith.mulf %8, %7 : vector<8x1536xf32>
    %10 = vector.extract_strided_slice %9 {offsets = [0, 0], sizes = [8, 384], strides = [1, 1]} : vector<8x1536xf32> to vector<8x384xf32>
    %11 = vector.extract_strided_slice %9 {offsets = [0, 384], sizes = [8, 384], strides = [1, 1]} : vector<8x1536xf32> to vector<8x384xf32>
    %12 = arith.addf %10, %11 : vector<8x384xf32>
    %13 = vector.extract_strided_slice %9 {offsets = [0, 768], sizes = [8, 384], strides = [1, 1]} : vector<8x1536xf32> to vector<8x384xf32>
    %14 = arith.addf %12, %13 : vector<8x384xf32>
    %15 = vector.extract_strided_slice %9 {offsets = [0, 1152], sizes = [8, 384], strides = [1, 1]} : vector<8x1536xf32> to vector<8x384xf32>
    %16 = arith.addf %14, %15 : vector<8x384xf32>
    %cst_6 = arith.constant 2.500000e-01 : f32
    %17 = vector.broadcast %cst_6 : f32 to vector<8x384xf32>
    %18 = arith.mulf %17, %16 : vector<8x384xf32>
    %19 = arith.truncf %18 : vector<8x384xf32> to vector<8x384xbf16>
    %c0_7 = arith.constant 0 : index
    %c0_8 = arith.constant 0 : index
    %20 = vector.load %arg3[%c0_7, %c0_8] : memref<384x512xbf16, #tpu.memory_space<vmem>>, vector<384x512xbf16>
    %cst_9 = arith.constant dense<0.000000e+00> : vector<8x512xf32>
    %21 = tpu.matmul %19, %20, %cst_9 {dimension_numbers = #tpu.dot_dimension_numbers<[1], [0], [0], [1], [0, 0, 1, 1], [], []>} : vector<8x384xbf16>, vector<384x512xbf16>, vector<8x512xf32> -> vector<8x512xf32>
    %cst_10 = arith.constant 5.000000e-01 : f32
    %22 = vector.broadcast %cst_10 : f32 to vector<8x512xf32>
    %23 = arith.mulf %22, %21 : vector<8x512xf32>
    %24 = math.tanh %23 : vector<8x512xf32>
    %cst_11 = arith.constant 1.000000e+00 : f32
    %25 = vector.broadcast %cst_11 : f32 to vector<8x512xf32>
    %26 = arith.addf %25, %24 : vector<8x512xf32>
    %cst_12 = arith.constant 5.000000e-01 : f32
    %27 = vector.broadcast %cst_12 : f32 to vector<8x512xf32>
    %28 = arith.mulf %27, %26 : vector<8x512xf32>
    %29 = vector.extract_strided_slice %28 {offsets = [0, 0], sizes = [8, 128], strides = [1, 1]} : vector<8x512xf32> to vector<8x128xf32>
    %30 = vector.extract_strided_slice %28 {offsets = [0, 128], sizes = [8, 128], strides = [1, 1]} : vector<8x512xf32> to vector<8x128xf32>
    %31 = arith.addf %29, %30 : vector<8x128xf32>
    %32 = vector.extract_strided_slice %28 {offsets = [0, 256], sizes = [8, 128], strides = [1, 1]} : vector<8x512xf32> to vector<8x128xf32>
    %33 = arith.addf %31, %32 : vector<8x128xf32>
    %34 = vector.extract_strided_slice %28 {offsets = [0, 384], sizes = [8, 128], strides = [1, 1]} : vector<8x512xf32> to vector<8x128xf32>
    %35 = arith.addf %33, %34 : vector<8x128xf32>
    %cst_13 = arith.constant 2.500000e-01 : f32
    %36 = vector.broadcast %cst_13 : f32 to vector<8x128xf32>
    %37 = arith.mulf %36, %35 : vector<8x128xf32>
    %38 = arith.truncf %37 : vector<8x128xf32> to vector<8x128xbf16>
    %c0_14 = arith.constant 0 : index
    %c0_15 = arith.constant 0 : index
    %39 = vector.load %arg4[%c0_14, %c0_15] : memref<128x128xbf16, #tpu.memory_space<vmem>>, vector<128x128xbf16>
    %cst_16 = arith.constant dense<0.000000e+00> : vector<8x128xf32>
    %40 = tpu.matmul %38, %39, %cst_16 {dimension_numbers = #tpu.dot_dimension_numbers<[1], [0], [0], [1], [0, 0, 1, 1], [], []>} : vector<8x128xbf16>, vector<128x128xbf16>, vector<8x128xf32> -> vector<8x128xf32>
    %c0_17 = arith.constant 0 : index
    %c0_18 = arith.constant 0 : index
    %41 = vector.load %arg5[%c0_17, %c0_18] : memref<1x128xf32, #tpu.memory_space<vmem>>, vector<1x128xf32>
    %42 = vector.broadcast %41 : vector<1x128xf32> to vector<8x128xf32>
    %43 = arith.addf %40, %42 : vector<8x128xf32>
    %44 = arith.truncf %43 : vector<8x128xf32> to vector<8x128xbf16>
    %c0_19 = arith.constant 0 : index
    %c0_20 = arith.constant 0 : index
    %45 = vector.load %arg6[%c0_19, %c0_20] : memref<128x128xbf16, #tpu.memory_space<vmem>>, vector<128x128xbf16>
    %cst_21 = arith.constant dense<0.000000e+00> : vector<8x128xf32>
    %46 = tpu.matmul %44, %45, %cst_21 {dimension_numbers = #tpu.dot_dimension_numbers<[1], [0], [0], [1], [0, 0, 1, 1], [], []>} : vector<8x128xbf16>, vector<128x128xbf16>, vector<8x128xf32> -> vector<8x128xf32>
    %c0_22 = arith.constant 0 : index
    %c0_23 = arith.constant 0 : index
    %47 = vector.load %arg7[%c0_22, %c0_23] : memref<1x128xf32, #tpu.memory_space<vmem>>, vector<1x128xf32>
    %48 = vector.broadcast %47 : vector<1x128xf32> to vector<8x128xf32>
    %49 = arith.addf %46, %48 : vector<8x128xf32>
    %50 = arith.truncf %49 : vector<8x128xf32> to vector<8x128xbf16>
    %c0_24 = arith.constant 0 : index
    %c0_25 = arith.constant 0 : index
    %51 = vector.load %arg8[%c0_24, %c0_25] : memref<128x128xbf16, #tpu.memory_space<vmem>>, vector<128x128xbf16>
    %cst_26 = arith.constant dense<0.000000e+00> : vector<8x128xf32>
    %52 = tpu.matmul %50, %51, %cst_26 {dimension_numbers = #tpu.dot_dimension_numbers<[1], [0], [0], [1], [0, 0, 1, 1], [], []>} : vector<8x128xbf16>, vector<128x128xbf16>, vector<8x128xf32> -> vector<8x128xf32>
    %c0_27 = arith.constant 0 : index
    %c0_28 = arith.constant 0 : index
    %53 = vector.load %arg9[%c0_27, %c0_28] : memref<1x128xf32, #tpu.memory_space<vmem>>, vector<1x128xf32>
    %54 = vector.broadcast %53 : vector<1x128xf32> to vector<8x128xf32>
    %55 = arith.addf %52, %54 : vector<8x128xf32>
    %56 = tpu.iota {dimensions = array<i32: 1>} : vector<8x128xi32>
    %c10_i32 = arith.constant 10 : i32
    %57 = vector.broadcast %c10_i32 : i32 to vector<8x128xi32>
    %58 = arith.cmpi slt, %56, %57 : vector<8x128xi32>
    %cst_29 = arith.constant -1.000000e+30 : f32
    %59 = vector.broadcast %cst_29 : f32 to vector<8x128xf32>
    %60 = arith.select %58, %55, %59 : vector<8x128xi1>, vector<8x128xf32>
    %cst_30 = arith.constant dense<0xFF800000> : vector<8xf32>
    %61 = vector.multi_reduction <maximumf>, %60, %cst_30 [1] : vector<8x128xf32> to vector<8xf32>
    %62 = vector.shape_cast %61 : vector<8xf32> to vector<8x1xf32>
    %63 = vector.broadcast %62 : vector<8x1xf32> to vector<8x128xf32>
    %64 = arith.subf %60, %63 : vector<8x128xf32>
    %65 = math.exp %64 : vector<8x128xf32>
    %cst_31 = arith.constant dense<0.000000e+00> : vector<8xf32>
    %66 = vector.multi_reduction <add>, %65, %cst_31 [1] : vector<8x128xf32> to vector<8xf32>
    %67 = vector.shape_cast %66 : vector<8xf32> to vector<8x1xf32>
    %68 = math.log %67 : vector<8x1xf32>
    %69 = arith.addf %62, %68 : vector<8x1xf32>
    %70 = vector.broadcast %69 : vector<8x1xf32> to vector<8x128xf32>
    %71 = arith.subf %60, %70 : vector<8x128xf32>
    %c0_32 = arith.constant 0 : index
    %c0_33 = arith.constant 0 : index
    %72 = vector.load %arg10[%c0_32, %c0_33] : memref<8x128xf32, #tpu.memory_space<vmem>>, vector<8x128xf32>
    %73 = arith.mulf %72, %71 : vector<8x128xf32>
    %cst_34 = arith.constant 0.000000e+00 : f32
    %74 = vector.broadcast %cst_34 : f32 to vector<8x128xf32>
    %75 = arith.subf %74, %73 : vector<8x128xf32>
    %c0_35 = arith.constant 0 : index
    %c0_36 = arith.constant 0 : index
    %76 = vector.load %arg11[%c0_35, %c0_36] : memref<8x128xf32, #tpu.memory_space<vmem>>, vector<8x128xf32>
    tpu.vector_store %arg11[%c0_35, %c0_36], %75 {strides = array<i32>} : memref<8x128xf32, #tpu.memory_space<vmem>>, vector<8x128xf32>,
    return
  }
  func.func @transform_0(%arg0: i32) -> (i32, i32) {
    %c0_i32 = arith.constant 0 : i32
    %c0_i32_0 = arith.constant 0 : i32
    return %arg0, %c0_i32 : i32, i32
  }
  func.func @transform_1(%arg0: i32) -> (i32, i32) {
    %c0_i32 = arith.constant 0 : i32
    %c0_i32_0 = arith.constant 0 : i32
    %c0_i32_1 = arith.constant 0 : i32
    return %c0_i32, %c0_i32_0 : i32, i32
  }
  func.func @transform_2(%arg0: i32) -> (i32, i32) {
    %c0_i32 = arith.constant 0 : i32
    %c0_i32_0 = arith.constant 0 : i32
    %c0_i32_1 = arith.constant 0 : i32
    return %c0_i32, %c0_i32_0 : i32, i32
  }
  func.func @transform_3(%arg0: i32) -> (i32, i32) {
    %c0_i32 = arith.constant 0 : i32
    %c0_i32_0 = arith.constant 0 : i32
    %c0_i32_1 = arith.constant 0 : i32
    return %c0_i32, %c0_i32_0 : i32, i32
  }
  func.func @transform_4(%arg0: i32) -> (i32, i32) {
    %c0_i32 = arith.constant 0 : i32
    %c0_i32_0 = arith.constant 0 : i32
    %c0_i32_1 = arith.constant 0 : i32
    return %c0_i32, %c0_i32_0 : i32, i32
  }
  func.func @transform_5(%arg0: i32) -> (i32, i32) {
    %c0_i32 = arith.constant 0 : i32
    %c0_i32_0 = arith.constant 0 : i32
    %c0_i32_1 = arith.constant 0 : i32
    return %c0_i32, %c0_i32_0 : i32, i32
  }
  func.func @transform_6(%arg0: i32) -> (i32, i32) {
    %c0_i32 = arith.constant 0 : i32
    %c0_i32_0 = arith.constant 0 : i32
    %c0_i32_1 = arith.constant 0 : i32
    return %c0_i32, %c0_i32_0 : i32, i32
  }
  func.func @transform_7(%arg0: i32) -> (i32, i32) {
    %c0_i32 = arith.constant 0 : i32
    %c0_i32_0 = arith.constant 0 : i32
    %c0_i32_1 = arith.constant 0 : i32
    return %c0_i32, %c0_i32_0 : i32, i32
  }
  func.func @transform_8(%arg0: i32) -> (i32, i32) {
    %c0_i32 = arith.constant 0 : i32
    %c0_i32_0 = arith.constant 0 : i32
    %c0_i32_1 = arith.constant 0 : i32
    return %c0_i32, %c0_i32_0 : i32, i32
  }
  func.func @transform_9(%arg0: i32) -> (i32, i32) {
    %c0_i32 = arith.constant 0 : i32
    %c0_i32_0 = arith.constant 0 : i32
    return %arg0, %c0_i32 : i32, i32
  }
  func.func @transform_10(%arg0: i32) -> (i32, i32) {
    %c0_i32 = arith.constant 0 : i32
    %c0_i32_0 = arith.constant 0 : i32
    return %arg0, %c0_i32 : i32, i32
  }
}

</mosaic_0001>

<llo_original>
// kernel: lenet_loss.1
$region0: #{lenet_loss.1}
  #allocation0 [shape = 'u32[]', space=smem, size = 0x4, offset = 0x4, fixed_abs, tag = 'smem constant byte address 0x4 - core index']
  #allocation1 [shape = 'u32[144,128]{1,0:T(1,128)}', space=vmem, size = 0x12000, scoped, tag = 'internal scratch']
  %s0 = inlined_call_operand.vmem [shape: bf16[8,768], index: 0, kind: input, shape index: {}]
  %s1 = inlined_call_operand.hbm [shape: bf16[768,1536], index: 1, kind: input, shape index: {}]
  %s2 = inlined_call_operand.hbm [shape: bf16[384,512], index: 2, kind: input, shape index: {}]
  %s3 = inlined_call_operand.hbm [shape: bf16[128,128], index: 3, kind: input, shape index: {}]
  %s4 = inlined_call_operand.hbm [shape: f32[1,128], index: 4, kind: input, shape index: {}]
  %s5 = inlined_call_operand.hbm [shape: bf16[128,128], index: 5, kind: input, shape index: {}]
  %s6 = inlined_call_operand.hbm [shape: f32[1,128], index: 6, kind: input, shape index: {}]
  %s7 = inlined_call_operand.hbm [shape: bf16[128,128], index: 7, kind: input, shape index: {}]
  %s8 = inlined_call_operand.hbm [shape: f32[1,128], index: 8, kind: input, shape index: {}]
  %s9 = inlined_call_operand.vmem [shape: f32[8,128], index: 9, kind: input, shape index: {}]
  %s10 = inlined_call_operand.vmem [shape: f32[8,128], index: 10, kind: output, shape index: {}]
  %s11 = sld [smem:[#allocation0]]
  $region82: #{lenet_loss.1} parent=0
    _
  %s13 = ssub.s32 1, %s11
  %s14 = scalar_select 0, %s13, %s11
  $region1: #{lenet_loss.1} parent=0
    #allocation2 [shape = 'u8[2359296]{0}', space=vmem, size = 0x240000, scoped, tag = 'input window, operand 1, single buffered']
    #allocation3 [shape = 's32[1]{0}', space=sflag, size = 0x4, scoped, tag = 'scoped memory for lenet_loss.1']
    #allocation4 [shape = 'u8[393216]{0}', space=vmem, size = 0x60000, scoped, tag = 'input window, operand 2, single buffered']
    #allocation5 [shape = 's32[1]{0}', space=sflag, size = 0x4, scoped, tag = 'scoped memory for lenet_loss.1']
    #allocation6 [shape = 'u8[32768]{0}', space=vmem, size = 0x8000, scoped, tag = 'input window, operand 3, single buffered']
    #allocation7 [shape = 'u8[512]{0}', space=vmem, size = 0x400, scoped, tag = 'input window, operand 4, single buffered']
    #allocation8 [shape = 's32[1]{0}', space=sflag, size = 0x4, scoped, tag = 'scoped memory for lenet_loss.1']
    #allocation9 [shape = 'u8[32768]{0}', space=vmem, size = 0x8000, scoped, tag = 'input window, operand 5, single buffered']
    #allocation10 [shape = 'u8[512]{0}', space=vmem, size = 0x400, scoped, tag = 'input window, operand 6, single buffered']
    #allocation11 [shape = 's32[1]{0}', space=sflag, size = 0x4, scoped, tag = 'scoped memory for lenet_loss.1']
    #allocation12 [shape = 'u8[32768]{0}', space=vmem, size = 0x8000, scoped, tag = 'input window, operand 7, single buffered']
    #allocation13 [shape = 'u8[512]{0}', space=vmem, size = 0x400, scoped, tag = 'input window, operand 8, single buffered']
    #allocation14 [shape = 's32[1]{0}', space=sflag, size = 0x4, scoped, tag = 'scoped memory for lenet_loss.1']
    %15 = vsyncpa [#allocation3], 0
    %16 = vsyncpa [#allocation5], 0
    %17 = vsyncpa [#allocation8], 0
    %18 = vsyncpa [#allocation11], 0
    %19 = vsyncpa [#allocation14], 0
    // Predicated region
    $region2: #{lenet_loss.1} parent=1 // pred_check
      _
    $region3: #{lenet_loss.1} parent=1 // pred_check_branch
      %21 = sbr.rel (0) target = $region5
    $region4: #{lenet_loss.1} parent=1 // pred_region
      _
    $region5: #{lenet_loss.1} parent=1 // pred_fallthru
      _
    // Predicated region
    $region6: #{lenet_loss.1} parent=1 // pred_check
      _
    $region7: #{lenet_loss.1} parent=1 // pred_check_branch
      %23 = sbr.rel (0) target = $region9
    $region8: #{lenet_loss.1} parent=1 // pred_region
      %s25 = ssub.s32 73728, 73728
      %26 = vsyncadd [#allocation3], %s25
      %s27 = sshll.u32 [#allocation2], 4
      %s28 = int_to_ptr.vmem [resolvable:$true] %s27
      %33 = dma.hbm_to_vmem [thread:$0]  %s1, 73728, %s28, [#allocation3], 768, 768, 48
    $region9: #{lenet_loss.1} parent=1 // pred_fallthru
      _
    // Predicated region
    $region10: #{lenet_loss.1} parent=1 // pred_check
      _
    $region11: #{lenet_loss.1} parent=1 // pred_check_branch
      %35 = sbr.rel (0) target = $region13
    $region12: #{lenet_loss.1} parent=1 // pred_region
      %s37 = ssub.s32 12288, 12288
      %38 = vsyncadd [#allocation5], %s37
      %s39 = sshll.u32 [#allocation4], 4
      %s40 = int_to_ptr.vmem [resolvable:$true] %s39
      %45 = dma.hbm_to_vmem [thread:$0]  %s2, 12288, %s40, [#allocation5], 256, 256, 16
    $region13: #{lenet_loss.1} parent=1 // pred_fallthru
      _
    // Predicated region
    $region14: #{lenet_loss.1} parent=1 // pred_check
      _
    $region15: #{lenet_loss.1} parent=1 // pred_check_branch
      %47 = sbr.rel (0) target = $region17
    $region16: #{lenet_loss.1} parent=1 // pred_region
      %s49 = ssub.s32 1024, 1024
      %50 = vsyncadd [#allocation5], %s49
      %s51 = sshll.u32 [#allocation6], 4
      %s52 = int_to_ptr.vmem [resolvable:$true] %s51
      %57 = dma.hbm_to_vmem [thread:$0]  %s3, 1024, %s52, [#allocation5], 64, 64, 4
    $region17: #{lenet_loss.1} parent=1 // pred_fallthru
      _
    // Predicated region
    $region18: #{lenet_loss.1} parent=1 // pred_check
      _
    $region19: #{lenet_loss.1} parent=1 // pred_check_branch
      %59 = sbr.rel (0) target = $region21
    $region20: #{lenet_loss.1} parent=1 // pred_region
      %s61 = ssub.s32 16, 16
      %62 = vsyncadd [#allocation8], %s61
      %s64 = sshll.u32 [#allocation7], 4
      %s65 = int_to_ptr.vmem [resolvable:$true] %s64
      %67 = dma.hbm_to_vmem [thread:$0]  %s4, 16, %s65, [#allocation8]
    $region21: #{lenet_loss.1} parent=1 // pred_fallthru
      _
    // Predicated region
    $region22: #{lenet_loss.1} parent=1 // pred_check
      _
    $region23: #{lenet_loss.1} parent=1 // pred_check_branch
      %69 = sbr.rel (0) target = $region25
    $region24: #{lenet_loss.1} parent=1 // pred_region
      %s71 = ssub.s32 1024, 1024
      %72 = vsyncadd [#allocation8], %s71
      %s73 = sshll.u32 [#allocation9], 4
      %s74 = int_to_ptr.vmem [resolvable:$true] %s73
      %79 = dma.hbm_to_vmem [thread:$0]  %s5, 1024, %s74, [#allocation8], 64, 64, 4
    $region25: #{lenet_loss.1} parent=1 // pred_fallthru
      _
    // Predicated region
    $region26: #{lenet_loss.1} parent=1 // pred_check
      _
    $region27: #{lenet_loss.1} parent=1 // pred_check_branch
      %81 = sbr.rel (0) target = $region29
    $region28: #{lenet_loss.1} parent=1 // pred_region
      %s83 = ssub.s32 16, 16
      %84 = vsyncadd [#allocation11], %s83
      %s86 = sshll.u32 [#allocation10], 4
      %s87 = int_to_ptr.vmem [resolvable:$true] %s86
      %89 = dma.hbm_to_vmem [thread:$0]  %s6, 16, %s87, [#allocation11]
    $region29: #{lenet_loss.1} parent=1 // pred_fallthru
      _
    // Predicated region
    $region30: #{lenet_loss.1} parent=1 // pred_check
      _
    $region31: #{lenet_loss.1} parent=1 // pred_check_branch
      %91 = sbr.rel (0) target = $region33
    $region32: #{lenet_loss.1} parent=1 // pred_region
      %s93 = ssub.s32 1024, 1024
      %94 = vsyncadd [#allocation11], %s93
      %s95 = sshll.u32 [#allocation12], 4
      %s96 = int_to_ptr.vmem [resolvable:$true] %s95
      %101 = dma.hbm_to_vmem [thread:$0]  %s7, 1024, %s96, [#allocation11], 64, 64, 4
    $region33: #{lenet_loss.1} parent=1 // pred_fallthru
      _
    // Predicated region
    $region34: #{lenet_loss.1} parent=1 // pred_check
      _
    $region35: #{lenet_loss.1} parent=1 // pred_check_branch
      %103 = sbr.rel (0) target = $region37
    $region36: #{lenet_loss.1} parent=1 // pred_region
      %s105 = ssub.s32 16, 16
      %106 = vsyncadd [#allocation14], %s105
      %s108 = sshll.u32 [#allocation13], 4
      %s109 = int_to_ptr.vmem [resolvable:$true] %s108
      %111 = dma.hbm_to_vmem [thread:$0]  %s8, 16, %s109, [#allocation14]
    $region37: #{lenet_loss.1} parent=1 // pred_fallthru
      _
    // Predicated region
    $region38: #{lenet_loss.1} parent=1 // pred_check
      _
    $region39: #{lenet_loss.1} parent=1 // pred_check_branch
      %113 = sbr.rel (0) target = $region41
    $region40: #{lenet_loss.1} parent=1 // pred_region
      _
    $region41: #{lenet_loss.1} parent=1 // pred_fallthru
      _
    // Predicated region
    $region42: #{lenet_loss.1} parent=1 // pred_check
      _
    $region43: #{lenet_loss.1} parent=1 // pred_check_branch
      %115 = sbr.rel (0) target = $region45
    $region44: #{lenet_loss.1} parent=1 // pred_region
      %116 = dma.done [#allocation3], 73728
    $region45: #{lenet_loss.1} parent=1 // pred_fallthru
      _
    // Predicated region
    $region46: #{lenet_loss.1} parent=1 // pred_check
      _
    $region47: #{lenet_loss.1} parent=1 // pred_check_branch
      %118 = sbr.rel (0) target = $region49
    $region48: #{lenet_loss.1} parent=1 // pred_region
      %119 = dma.done [#allocation5], 12288
    $region49: #{lenet_loss.1} parent=1 // pred_fallthru
      _
    // Predicated region
    $region50: #{lenet_loss.1} parent=1 // pred_check
      _
    $region51: #{lenet_loss.1} parent=1 // pred_check_branch
      %121 = sbr.rel (0) target = $region53
    $region52: #{lenet_loss.1} parent=1 // pred_region
      %122 = dma.done [#allocation5], 1024
    $region53: #{lenet_loss.1} parent=1 // pred_fallthru
      _
    // Predicated region
    $region54: #{lenet_loss.1} parent=1 // pred_check
      _
    $region55: #{lenet_loss.1} parent=1 // pred_check_branch
      %124 = sbr.rel (0) target = $region57
    $region56: #{lenet_loss.1} parent=1 // pred_region
      %125 = dma.done [#allocation8], 16
    $region57: #{lenet_loss.1} parent=1 // pred_fallthru
      _
    // Predicated region
    $region58: #{lenet_loss.1} parent=1 // pred_check
      _
    $region59: #{lenet_loss.1} parent=1 // pred_check_branch
      %127 = sbr.rel (0) target = $region61
    $region60: #{lenet_loss.1} parent=1 // pred_region
      %128 = dma.done [#allocation8], 1024
    $region61: #{lenet_loss.1} parent=1 // pred_fallthru
      _
    // Predicated region
    $region62: #{lenet_loss.1} parent=1 // pred_check
      _
    $region63: #{lenet_loss.1} parent=1 // pred_check_branch
      %130 = sbr.rel (0) target = $region65
    $region64: #{lenet_loss.1} parent=1 // pred_region
      %131 = dma.done [#allocation11], 16
    $region65: #{lenet_loss.1} parent=1 // pred_fallthru
      _
    // Predicated region
    $region66: #{lenet_loss.1} parent=1 // pred_check
      _
    $region67: #{lenet_loss.1} parent=1 // pred_check_branch
      %133 = sbr.rel (0) target = $region69
    $region68: #{lenet_loss.1} parent=1 // pred_region
      %134 = dma.done [#allocation11], 1024
    $region69: #{lenet_loss.1} parent=1 // pred_fallthru
      _
    // Predicated region
    $region70: #{lenet_loss.1} parent=1 // pred_check
      _
    $region71: #{lenet_loss.1} parent=1 // pred_check_branch
      %136 = sbr.rel (0) target = $region73
    $region72: #{lenet_loss.1} parent=1 // pred_region
      %137 = dma.done [#allocation14], 16
    $region73: #{lenet_loss.1} parent=1 // pred_fallthru
      _
    %v139 = vld [vmem:[%s0] sm:$0xff]
    %v140 = vld [vmem:[%s0 + $0x8] sm:$0xff]
    %v141 = vld [vmem:[%s0 + $0x10] sm:$0xff]
    %v142 = vld [vmem:[#allocation2] sm:$0xff]
    %v143 = vld [vmem:[#allocation2 + $0x8] sm:$0xff]
    %v144 = vld [vmem:[#allocation2 + $0x10] sm:$0xff]
    %v145 = vld [vmem:[#allocation2 + $0x18] sm:$0xff]
    %v146 = vld [vmem:[#allocation2 + $0x20] sm:$0xff]
    %v147 = vld [vmem:[#allocation2 + $0x28] sm:$0xff]
    %v148 = vld [vmem:[#allocation2 + $0x30] sm:$0xff]
    %v149 = vld [vmem:[#allocation2 + $0x38] sm:$0xff]
    %v150 = vld [vmem:[#allocation2 + $0x40] sm:$0xff]
    %v151 = vld [vmem:[#allocation2 + $0x48] sm:$0xff]
    %v152 = vld [vmem:[#allocation2 + $0x50] sm:$0xff]
    %v153 = vld [vmem:[#allocation2 + $0x58] sm:$0xff]
    %v154 = vld [vmem:[#allocation2 + $0x60] sm:$0xff]
    %v155 = vld [vmem:[#allocation2 + $0x68] sm:$0xff]
    %v156 = vld [vmem:[#allocation2 + $0x70] sm:$0xff]
    %v157 = vld [vmem:[#allocation2 + $0x78] sm:$0xff]
    %v158 = vld [vmem:[#allocation2 + $0x80] sm:$0xff]
    %v159 = vld [vmem:[#allocation2 + $0x88] sm:$0xff]
    %v160 = vld [vmem:[#allocation2 + $0x90] sm:$0xff]
    %v161 = vld [vmem:[#allocation2 + $0x98] sm:$0xff]
    %v162 = vld [vmem:[#allocation2 + $0xa0] sm:$0xff]
    %v163 = vld [vmem:[#allocation2 + $0xa8] sm:$0xff]
    %v164 = vld [vmem:[#allocation2 + $0xb0] sm:$0xff]
    %v165 = vld [vmem:[#allocation2 + $0xb8] sm:$0xff]
    %v166 = vld [vmem:[#allocation2 + $0xc0] sm:$0xff]
    %v167 = vld [vmem:[#allocation2 + $0xc8] sm:$0xff]
    %v168 = vld [vmem:[#allocation2 + $0xd0] sm:$0xff]
    %v169 = vld [vmem:[#allocation2 + $0xd8] sm:$0xff]
    %v170 = vld [vmem:[#allocation2 + $0xe0] sm:$0xff]
    %v171 = vld [vmem:[#allocation2 + $0xe8] sm:$0xff]
    %v172 = vld [vmem:[#allocation2 + $0xf0] sm:$0xff]
    %v173 = vld [vmem:[#allocation2 + $0xf8] sm:$0xff]
    %v174 = vld [vmem:[#allocation2 + $0x100] sm:$0xff]
    %v175 = vld [vmem:[#allocation2 + $0x108] sm:$0xff]
    %v176 = vld [vmem:[#allocation2 + $0x110] sm:$0xff]
    %v177 = vld [vmem:[#allocation2 + $0x118] sm:$0xff]
    %v178 = vld [vmem:[#allocation2 + $0x120] sm:$0xff]
    %v179 = vld [vmem:[#allocation2 + $0x128] sm:$0xff]
    %v180 = vld [vmem:[#allocation2 + $0x130] sm:$0xff]
    %v181 = vld [vmem:[#allocation2 + $0x138] sm:$0xff]
    %v182 = vld [vmem:[#allocation2 + $0x140] sm:$0xff]
    %v183 = vld [vmem:[#allocation2 + $0x148] sm:$0xff]
    %v184 = vld [vmem:[#allocation2 + $0x150] sm:$0xff]
    %v185 = vld [vmem:[#allocation2 + $0x158] sm:$0xff]
    %v186 = vld [vmem:[#allocation2 + $0x160] sm:$0xff]
    %v187 = vld [vmem:[#allocation2 + $0x168] sm:$0xff]
    %v188 = vld [vmem:[#allocation2 + $0x170] sm:$0xff]
    %v189 = vld [vmem:[#allocation2 + $0x178] sm:$0xff]
    %v190 = vld [vmem:[#allocation2 + $0x180] sm:$0xff]
    %v191 = vld [vmem:[#allocation2 + $0x188] sm:$0xff]
    %v192 = vld [vmem:[#allocation2 + $0x190] sm:$0xff]
    %v193 = vld [vmem:[#allocation2 + $0x198] sm:$0xff]
    %v194 = vld [vmem:[#allocation2 + $0x1a0] sm:$0xff]
    %v195 = vld [vmem:[#allocation2 + $0x1a8] sm:$0xff]
    %v196 = vld [vmem:[#allocation2 + $0x1b0] sm:$0xff]
    %v197 = vld [vmem:[#allocation2 + $0x1b8] sm:$0xff]
    %v198 = vld [vmem:[#allocation2 + $0x1c0] sm:$0xff]
    %v199 = vld [vmem:[#allocation2 + $0x1c8] sm:$0xff]
    %v200 = vld [vmem:[#allocation2 + $0x1d0] sm:$0xff]
    %v201 = vld [vmem:[#allocation2 + $0x1d8] sm:$0xff]
    %v202 = vld [vmem:[#allocation2 + $0x1e0] sm:$0xff]
    %v203 = vld [vmem:[#allocation2 + $0x1e8] sm:$0xff]
    %v204 = vld [vmem:[#allocation2 + $0x1f0] sm:$0xff]
    %v205 = vld [vmem:[#allocation2 + $0x1f8] sm:$0xff]
    %v206 = vld [vmem:[#allocation2 + $0x200] sm:$0xff]
    %v207 = vld [vmem:[#allocation2 + $0x208] sm:$0xff]
    %v208 = vld [vmem:[#allocation2 + $0x210] sm:$0xff]
    %v209 = vld [vmem:[#allocation2 + $0x218] sm:$0xff]
    %v210 = vld [vmem:[#allocation2 + $0x220] sm:$0xff]
    %v211 = vld [vmem:[#allocation2 + $0x228] sm:$0xff]
    %v212 = vld [vmem:[#allocation2 + $0x230] sm:$0xff]
    %v213 = vld [vmem:[#allocation2 + $0x238] sm:$0xff]
    %v214 = vld [vmem:[#allocation2 + $0x240] sm:$0xff]
    %v215 = vld [vmem:[#allocation2 + $0x248] sm:$0xff]
    %v216 = vld [vmem:[#allocation2 + $0x250] sm:$0xff]
    %v217 = vld [vmem:[#allocation2 + $0x258] sm:$0xff]
    %v218 = vld [vmem:[#allocation2 + $0x260] sm:$0xff]
    %v219 = vld [vmem:[#allocation2 + $0x268] sm:$0xff]
    %v220 = vld [vmem:[#allocation2 + $0x270] sm:$0xff]
    %v221 = vld [vmem:[#allocation2 + $0x278] sm:$0xff]
    %v222 = vld [vmem:[#allocation2 + $0x280] sm:$0xff]
    %v223 = vld [vmem:[#allocation2 + $0x288] sm:$0xff]
    %v224 = vld [vmem:[#allocation2 + $0x290] sm:$0xff]
    %v225 = vld [vmem:[#allocation2 + $0x298] sm:$0xff]
    %v226 = vld [vmem:[#allocation2 + $0x2a0] sm:$0xff]
    %v227 = vld [vmem:[#allocation2 + $0x2a8] sm:$0xff]
    %v228 = vld [vmem:[#allocation2 + $0x2b0] sm:$0xff]
    %v229 = vld [vmem:[#allocation2 + $0x2b8] sm:$0xff]
    %v230 = vld [vmem:[#allocation2 + $0x2c0] sm:$0xff]
    %v231 = vld [vmem:[#allocation2 + $0x2c8] sm:$0xff]
    %v232 = vld [vmem:[#allocation2 + $0x2d0] sm:$0xff]
    %v233 = vld [vmem:[#allocation2 + $0x2d8] sm:$0xff]
    %v234 = vld [vmem:[#allocation2 + $0x2e0] sm:$0xff]
    %v235 = vld [vmem:[#allocation2 + $0x2e8] sm:$0xff]
    %v236 = vld [vmem:[#allocation2 + $0x2f0] sm:$0xff]
    %v237 = vld [vmem:[#allocation2 + $0x2f8] sm:$0xff]
    %v238 = vld [vmem:[#allocation2 + $0x300] sm:$0xff]
    %v239 = vld [vmem:[#allocation2 + $0x308] sm:$0xff]
    %v240 = vld [vmem:[#allocation2 + $0x310] sm:$0xff]
    %v241 = vld [vmem:[#allocation2 + $0x318] sm:$0xff]
    %v242 = vld [vmem:[#allocation2 + $0x320] sm:$0xff]
    %v243 = vld [vmem:[#allocation2 + $0x328] sm:$0xff]
    %v244 = vld [vmem:[#allocation2 + $0x330] sm:$0xff]
    %v245 = vld [vmem:[#allocation2 + $0x338] sm:$0xff]
    %v246 = vld [vmem:[#allocation2 + $0x340] sm:$0xff]
    %v247 = vld [vmem:[#allocation2 + $0x348] sm:$0xff]
    %v248 = vld [vmem:[#allocation2 + $0x350] sm:$0xff]
    %v249 = vld [vmem:[#allocation2 + $0x358] sm:$0xff]
    %v250 = vld [vmem:[#allocation2 + $0x360] sm:$0xff]
    %v251 = vld [vmem:[#allocation2 + $0x368] sm:$0xff]
    %v252 = vld [vmem:[#allocation2 + $0x370] sm:$0xff]
    %v253 = vld [vmem:[#allocation2 + $0x378] sm:$0xff]
    %v254 = vld [vmem:[#allocation2 + $0x380] sm:$0xff]
    %v255 = vld [vmem:[#allocation2 + $0x388] sm:$0xff]
    %v256 = vld [vmem:[#allocation2 + $0x390] sm:$0xff]
    %v257 = vld [vmem:[#allocation2 + $0x398] sm:$0xff]
    %v258 = vld [vmem:[#allocation2 + $0x3a0] sm:$0xff]
    %v259 = vld [vmem:[#allocation2 + $0x3a8] sm:$0xff]
    %v260 = vld [vmem:[#allocation2 + $0x3b0] sm:$0xff]
    %v261 = vld [vmem:[#allocation2 + $0x3b8] sm:$0xff]
    %v262 = vld [vmem:[#allocation2 + $0x3c0] sm:$0xff]
    %v263 = vld [vmem:[#allocation2 + $0x3c8] sm:$0xff]
    %v264 = vld [vmem:[#allocation2 + $0x3d0] sm:$0xff]
    %v265 = vld [vmem:[#allocation2 + $0x3d8] sm:$0xff]
    %v266 = vld [vmem:[#allocation2 + $0x3e0] sm:$0xff]
    %v267 = vld [vmem:[#allocation2 + $0x3e8] sm:$0xff]
    %v268 = vld [vmem:[#allocation2 + $0x3f0] sm:$0xff]
    %v269 = vld [vmem:[#allocation2 + $0x3f8] sm:$0xff]
    %v270 = vld [vmem:[#allocation2 + $0x400] sm:$0xff]
    %v271 = vld [vmem:[#allocation2 + $0x408] sm:$0xff]
    %v272 = vld [vmem:[#allocation2 + $0x410] sm:$0xff]
    %v273 = vld [vmem:[#allocation2 + $0x418] sm:$0xff]
    %v274 = vld [vmem:[#allocation2 + $0x420] sm:$0xff]
    %v275 = vld [vmem:[#allocation2 + $0x428] sm:$0xff]
    %v276 = vld [vmem:[#allocation2 + $0x430] sm:$0xff]
    %v277 = vld [vmem:[#allocation2 + $0x438] sm:$0xff]
    %v278 = vld [vmem:[#allocation2 + $0x440] sm:$0xff]
    %v279 = vld [vmem:[#allocation2 + $0x448] sm:$0xff]
    %v280 = vld [vmem:[#allocation2 + $0x450] sm:$0xff]
    %v281 = vld [vmem:[#allocation2 + $0x458] sm:$0xff]
    %v282 = vld [vmem:[#allocation2 + $0x460] sm:$0xff]
    %v283 = vld [vmem:[#allocation2 + $0x468] sm:$0xff]
    %v284 = vld [vmem:[#allocation2 + $0x470] sm:$0xff]
    %v285 = vld [vmem:[#allocation2 + $0x478] sm:$0xff]
    %v286 = vld [vmem:[#allocation2 + $0x480] sm:$0xff]
    %v287 = vld [vmem:[#allocation2 + $0x488] sm:$0xff]
    %v288 = vld [vmem:[#allocation2 + $0x490] sm:$0xff]
    %v289 = vld [vmem:[#allocation2 + $0x498] sm:$0xff]
    %v290 = vld [vmem:[#allocation2 + $0x4a0] sm:$0xff]
    %v291 = vld [vmem:[#allocation2 + $0x4a8] sm:$0xff]
    %v292 = vld [vmem:[#allocation2 + $0x4b0] sm:$0xff]
    %v293 = vld [vmem:[#allocation2 + $0x4b8] sm:$0xff]
    %v294 = vld [vmem:[#allocation2 + $0x4c0] sm:$0xff]
    %v295 = vld [vmem:[#allocation2 + $0x4c8] sm:$0xff]
    %v296 = vld [vmem:[#allocation2 + $0x4d0] sm:$0xff]
    %v297 = vld [vmem:[#allocation2 + $0x4d8] sm:$0xff]
    %v298 = vld [vmem:[#allocation2 + $0x4e0] sm:$0xff]
    %v299 = vld [vmem:[#allocation2 + $0x4e8] sm:$0xff]
    %v300 = vld [vmem:[#allocation2 + $0x4f0] sm:$0xff]
    %v301 = vld [vmem:[#allocation2 + $0x4f8] sm:$0xff]
    %v302 = vld [vmem:[#allocation2 + $0x500] sm:$0xff]
    %v303 = vld [vmem:[#allocation2 + $0x508] sm:$0xff]
    %v304 = vld [vmem:[#allocation2 + $0x510] sm:$0xff]
    %v305 = vld [vmem:[#allocation2 + $0x518] sm:$0xff]
    %v306 = vld [vmem:[#allocation2 + $0x520] sm:$0xff]
    %v307 = vld [vmem:[#allocation2 + $0x528] sm:$0xff]
    %v308 = vld [vmem:[#allocation2 + $0x530] sm:$0xff]
    %v309 = vld [vmem:[#allocation2 + $0x538] sm:$0xff]
    %v310 = vld [vmem:[#allocation2 + $0x540] sm:$0xff]
    %v311 = vld [vmem:[#allocation2 + $0x548] sm:$0xff]
    %v312 = vld [vmem:[#allocation2 + $0x550] sm:$0xff]
    %v313 = vld [vmem:[#allocation2 + $0x558] sm:$0xff]
    %v314 = vld [vmem:[#allocation2 + $0x560] sm:$0xff]
    %v315 = vld [vmem:[#allocation2 + $0x568] sm:$0xff]
    %v316 = vld [vmem:[#allocation2 + $0x570] sm:$0xff]
    %v317 = vld [vmem:[#allocation2 + $0x578] sm:$0xff]
    %v318 = vld [vmem:[#allocation2 + $0x580] sm:$0xff]
    %v319 = vld [vmem:[#allocation2 + $0x588] sm:$0xff]
    %v320 = vld [vmem:[#allocation2 + $0x590] sm:$0xff]
    %v321 = vld [vmem:[#allocation2 + $0x598] sm:$0xff]
    %v322 = vld [vmem:[#allocation2 + $0x5a0] sm:$0xff]
    %v323 = vld [vmem:[#allocation2 + $0x5a8] sm:$0xff]
    %v324 = vld [vmem:[#allocation2 + $0x5b0] sm:$0xff]
    %v325 = vld [vmem:[#allocation2 + $0x5b8] sm:$0xff]
    %v326 = vld [vmem:[#allocation2 + $0x5c0] sm:$0xff]
    %v327 = vld [vmem:[#allocation2 + $0x5c8] sm:$0xff]
    %v328 = vld [vmem:[#allocation2 + $0x5d0] sm:$0xff]
    %v329 = vld [vmem:[#allocation2 + $0x5d8] sm:$0xff]
    %v330 = vld [vmem:[#allocation2 + $0x5e0] sm:$0xff]
    %v331 = vld [vmem:[#allocation2 + $0x5e8] sm:$0xff]
    %v332 = vld [vmem:[#allocation2 + $0x5f0] sm:$0xff]
    %v333 = vld [vmem:[#allocation2 + $0x5f8] sm:$0xff]
    %v334 = vld [vmem:[#allocation2 + $0x600] sm:$0xff]
    %v335 = vld [vmem:[#allocation2 + $0x608] sm:$0xff]
    %v336 = vld [vmem:[#allocation2 + $0x610] sm:$0xff]
    %v337 = vld [vmem:[#allocation2 + $0x618] sm:$0xff]
    %v338 = vld [vmem:[#allocation2 + $0x620] sm:$0xff]
    %v339 = vld [vmem:[#allocation2 + $0x628] sm:$0xff]
    %v340 = vld [vmem:[#allocation2 + $0x630] sm:$0xff]
    %v341 = vld [vmem:[#allocation2 + $0x638] sm:$0xff]
    %v342 = vld [vmem:[#allocation2 + $0x640] sm:$0xff]
    %v343 = vld [vmem:[#allocation2 + $0x648] sm:$0xff]
    %v344 = vld [vmem:[#allocation2 + $0x650] sm:$0xff]
    %v345 = vld [vmem:[#allocation2 + $0x658] sm:$0xff]
    %v346 = vld [vmem:[#allocation2 + $0x660] sm:$0xff]
    %v347 = vld [vmem:[#allocation2 + $0x668] sm:$0xff]
    %v348 = vld [vmem:[#allocation2 + $0x670] sm:$0xff]
    %v349 = vld [vmem:[#allocation2 + $0x678] sm:$0xff]
    %v350 = vld [vmem:[#allocation2 + $0x680] sm:$0xff]
    %v351 = vld [vmem:[#allocation2 + $0x688] sm:$0xff]
    %v352 = vld [vmem:[#allocation2 + $0x690] sm:$0xff]
    %v353 = vld [vmem:[#allocation2 + $0x698] sm:$0xff]
    %v354 = vld [vmem:[#allocation2 + $0x6a0] sm:$0xff]
    %v355 = vld [vmem:[#allocation2 + $0x6a8] sm:$0xff]
    %v356 = vld [vmem:[#allocation2 + $0x6b0] sm:$0xff]
    %v357 = vld [vmem:[#allocation2 + $0x6b8] sm:$0xff]
    %v358 = vld [vmem:[#allocation2 + $0x6c0] sm:$0xff]
    %v359 = vld [vmem:[#allocation2 + $0x6c8] sm:$0xff]
    %v360 = vld [vmem:[#allocation2 + $0x6d0] sm:$0xff]
    %v361 = vld [vmem:[#allocation2 + $0x6d8] sm:$0xff]
    %v362 = vld [vmem:[#allocation2 + $0x6e0] sm:$0xff]
    %v363 = vld [vmem:[#allocation2 + $0x6e8] sm:$0xff]
    %v364 = vld [vmem:[#allocation2 + $0x6f0] sm:$0xff]
    %v365 = vld [vmem:[#allocation2 + $0x6f8] sm:$0xff]
    %v366 = vld [vmem:[#allocation2 + $0x700] sm:$0xff]
    %v367 = vld [vmem:[#allocation2 + $0x708] sm:$0xff]
    %v368 = vld [vmem:[#allocation2 + $0x710] sm:$0xff]
    %v369 = vld [vmem:[#allocation2 + $0x718] sm:$0xff]
    %v370 = vld [vmem:[#allocation2 + $0x720] sm:$0xff]
    %v371 = vld [vmem:[#allocation2 + $0x728] sm:$0xff]
    %v372 = vld [vmem:[#allocation2 + $0x730] sm:$0xff]
    %v373 = vld [vmem:[#allocation2 + $0x738] sm:$0xff]
    %v374 = vld [vmem:[#allocation2 + $0x740] sm:$0xff]
    %v375 = vld [vmem:[#allocation2 + $0x748] sm:$0xff]
    %v376 = vld [vmem:[#allocation2 + $0x750] sm:$0xff]
    %v377 = vld [vmem:[#allocation2 + $0x758] sm:$0xff]
    %v378 = vld [vmem:[#allocation2 + $0x760] sm:$0xff]
    %v379 = vld [vmem:[#allocation2 + $0x768] sm:$0xff]
    %v380 = vld [vmem:[#allocation2 + $0x770] sm:$0xff]
    %v381 = vld [vmem:[#allocation2 + $0x778] sm:$0xff]
    %v382 = vld [vmem:[#allocation2 + $0x780] sm:$0xff]
    %v383 = vld [vmem:[#allocation2 + $0x788] sm:$0xff]
    %v384 = vld [vmem:[#allocation2 + $0x790] sm:$0xff]
    %v385 = vld [vmem:[#allocation2 + $0x798] sm:$0xff]
    %v386 = vld [vmem:[#allocation2 + $0x7a0] sm:$0xff]
    %v387 = vld [vmem:[#allocation2 + $0x7a8] sm:$0xff]
    %v388 = vld [vmem:[#allocation2 + $0x7b0] sm:$0xff]
    %v389 = vld [vmem:[#allocation2 + $0x7b8] sm:$0xff]
    %v390 = vld [vmem:[#allocation2 + $0x7c0] sm:$0xff]
    %v391 = vld [vmem:[#allocation2 + $0x7c8] sm:$0xff]
    %v392 = vld [vmem:[#allocation2 + $0x7d0] sm:$0xff]
    %v393 = vld [vmem:[#allocation2 + $0x7d8] sm:$0xff]
    %v394 = vld [vmem:[#allocation2 + $0x7e0] sm:$0xff]
    %v395 = vld [vmem:[#allocation2 + $0x7e8] sm:$0xff]
    %v396 = vld [vmem:[#allocation2 + $0x7f0] sm:$0xff]
    %v397 = vld [vmem:[#allocation2 + $0x7f8] sm:$0xff]
    %v398 = vld [vmem:[#allocation2 + $0x800] sm:$0xff]
    %v399 = vld [vmem:[#allocation2 + $0x808] sm:$0xff]
    %v400 = vld [vmem:[#allocation2 + $0x810] sm:$0xff]
    %v401 = vld [vmem:[#allocation2 + $0x818] sm:$0xff]
    %v402 = vld [vmem:[#allocation2 + $0x820] sm:$0xff]
    %v403 = vld [vmem:[#allocation2 + $0x828] sm:$0xff]
    %v404 = vld [vmem:[#allocation2 + $0x830] sm:$0xff]
    %v405 = vld [vmem:[#allocation2 + $0x838] sm:$0xff]
    %v406 = vld [vmem:[#allocation2 + $0x840] sm:$0xff]
    %v407 = vld [vmem:[#allocation2 + $0x848] sm:$0xff]
    %v408 = vld [vmem:[#allocation2 + $0x850] sm:$0xff]
    %v409 = vld [vmem:[#allocation2 + $0x858] sm:$0xff]
    %v410 = vld [vmem:[#allocation2 + $0x860] sm:$0xff]
    %v411 = vld [vmem:[#allocation2 + $0x868] sm:$0xff]
    %v412 = vld [vmem:[#allocation2 + $0x870] sm:$0xff]
    %v413 = vld [vmem:[#allocation2 + $0x878] sm:$0xff]
    %v414 = vld [vmem:[#allocation2 + $0x880] sm:$0xff]
    %v415 = vld [vmem:[#allocation2 + $0x888] sm:$0xff]
    %v416 = vld [vmem:[#allocation2 + $0x890] sm:$0xff]
    %v417 = vld [vmem:[#allocation2 + $0x898] sm:$0xff]
    %v418 = vld [vmem:[#allocation2 + $0x8a0] sm:$0xff]
    %v419 = vld [vmem:[#allocation2 + $0x8a8] sm:$0xff]
    %v420 = vld [vmem:[#allocation2 + $0x8b0] sm:$0xff]
    %v421 = vld [vmem:[#allocation2 + $0x8b8] sm:$0xff]
    %v422 = vld [vmem:[#allocation2 + $0x8c0] sm:$0xff]
    %v423 = vld [vmem:[#allocation2 + $0x8c8] sm:$0xff]
    %v424 = vld [vmem:[#allocation2 + $0x8d0] sm:$0xff]
    %v425 = vld [vmem:[#allocation2 + $0x8d8] sm:$0xff]
    %v426 = vld [vmem:[#allocation2 + $0x8e0] sm:$0xff]
    %v427 = vld [vmem:[#allocation2 + $0x8e8] sm:$0xff]
    %v428 = vld [vmem:[#allocation2 + $0x8f0] sm:$0xff]
    %v429 = vld [vmem:[#allocation2 + $0x8f8] sm:$0xff]
    %v430 = vld [vmem:[#allocation2 + $0x900] sm:$0xff]
    %v431 = vld [vmem:[#allocation2 + $0x908] sm:$0xff]
    %v432 = vld [vmem:[#allocation2 + $0x910] sm:$0xff]
    %v433 = vld [vmem:[#allocation2 + $0x918] sm:$0xff]
    %v434 = vld [vmem:[#allocation2 + $0x920] sm:$0xff]
    %v435 = vld [vmem:[#allocation2 + $0x928] sm:$0xff]
    %v436 = vld [vmem:[#allocation2 + $0x930] sm:$0xff]
    %v437 = vld [vmem:[#allocation2 + $0x938] sm:$0xff]
    %v438 = vld [vmem:[#allocation2 + $0x940] sm:$0xff]
    %v439 = vld [vmem:[#allocation2 + $0x948] sm:$0xff]
    %v440 = vld [vmem:[#allocation2 + $0x950] sm:$0xff]
    %v441 = vld [vmem:[#allocation2 + $0x958] sm:$0xff]
    %v442 = vld [vmem:[#allocation2 + $0x960] sm:$0xff]
    %v443 = vld [vmem:[#allocation2 + $0x968] sm:$0xff]
    %v444 = vld [vmem:[#allocation2 + $0x970] sm:$0xff]
    %v445 = vld [vmem:[#allocation2 + $0x978] sm:$0xff]
    %v446 = vld [vmem:[#allocation2 + $0x980] sm:$0xff]
    %v447 = vld [vmem:[#allocation2 + $0x988] sm:$0xff]
    %v448 = vld [vmem:[#allocation2 + $0x990] sm:$0xff]
    %v449 = vld [vmem:[#allocation2 + $0x998] sm:$0xff]
    %v450 = vld [vmem:[#allocation2 + $0x9a0] sm:$0xff]
    %v451 = vld [vmem:[#allocation2 + $0x9a8] sm:$0xff]
    %v452 = vld [vmem:[#allocation2 + $0x9b0] sm:$0xff]
    %v453 = vld [vmem:[#allocation2 + $0x9b8] sm:$0xff]
    %v454 = vld [vmem:[#allocation2 + $0x9c0] sm:$0xff]
    %v455 = vld [vmem:[#allocation2 + $0x9c8] sm:$0xff]
    %v456 = vld [vmem:[#allocation2 + $0x9d0] sm:$0xff]
    %v457 = vld [vmem:[#allocation2 + $0x9d8] sm:$0xff]
    %v458 = vld [vmem:[#allocation2 + $0x9e0] sm:$0xff]
    %v459 = vld [vmem:[#allocation2 + $0x9e8] sm:$0xff]
    %v460 = vld [vmem:[#allocation2 + $0x9f0] sm:$0xff]
    %v461 = vld [vmem:[#allocation2 + $0x9f8] sm:$0xff]
    %v462 = vld [vmem:[#allocation2 + $0xa00] sm:$0xff]
    %v463 = vld [vmem:[#allocation2 + $0xa08] sm:$0xff]
    %v464 = vld [vmem:[#allocation2 + $0xa10] sm:$0xff]
    %v465 = vld [vmem:[#allocation2 + $0xa18] sm:$0xff]
    %v466 = vld [vmem:[#allocation2 + $0xa20] sm:$0xff]
    %v467 = vld [vmem:[#allocation2 + $0xa28] sm:$0xff]
    %v468 = vld [vmem:[#allocation2 + $0xa30] sm:$0xff]
    %v469 = vld [vmem:[#allocation2 + $0xa38] sm:$0xff]
    %v470 = vld [vmem:[#allocation2 + $0xa40] sm:$0xff]
    %v471 = vld [vmem:[#allocation2 + $0xa48] sm:$0xff]
    %v472 = vld [vmem:[#allocation2 + $0xa50] sm:$0xff]
    %v473 = vld [vmem:[#allocation2 + $0xa58] sm:$0xff]
    %v474 = vld [vmem:[#allocation2 + $0xa60] sm:$0xff]
    %v475 = vld [vmem:[#allocation2 + $0xa68] sm:$0xff]
    %v476 = vld [vmem:[#allocation2 + $0xa70] sm:$0xff]
    %v477 = vld [vmem:[#allocation2 + $0xa78] sm:$0xff]
    %v478 = vld [vmem:[#allocation2 + $0xa80] sm:$0xff]
    %v479 = vld [vmem:[#allocation2 + $0xa88] sm:$0xff]
    %v480 = vld [vmem:[#allocation2 + $0xa90] sm:$0xff]
    %v481 = vld [vmem:[#allocation2 + $0xa98] sm:$0xff]
    %v482 = vld [vmem:[#allocation2 + $0xaa0] sm:$0xff]
    %v483 = vld [vmem:[#allocation2 + $0xaa8] sm:$0xff]
    %v484 = vld [vmem:[#allocation2 + $0xab0] sm:$0xff]
    %v485 = vld [vmem:[#allocation2 + $0xab8] sm:$0xff]
    %v486 = vld [vmem:[#allocation2 + $0xac0] sm:$0xff]
    %v487 = vld [vmem:[#allocation2 + $0xac8] sm:$0xff]
    %v488 = vld [vmem:[#allocation2 + $0xad0] sm:$0xff]
    %v489 = vld [vmem:[#allocation2 + $0xad8] sm:$0xff]
    %v490 = vld [vmem:[#allocation2 + $0xae0] sm:$0xff]
    %v491 = vld [vmem:[#allocation2 + $0xae8] sm:$0xff]
    %v492 = vld [vmem:[#allocation2 + $0xaf0] sm:$0xff]
    %v493 = vld [vmem:[#allocation2 + $0xaf8] sm:$0xff]
    %v494 = vld [vmem:[#allocation2 + $0xb00] sm:$0xff]
    %v495 = vld [vmem:[#allocation2 + $0xb08] sm:$0xff]
    %v496 = vld [vmem:[#allocation2 + $0xb10] sm:$0xff]
    %v497 = vld [vmem:[#allocation2 + $0xb18] sm:$0xff]
    %v498 = vld [vmem:[#allocation2 + $0xb20] sm:$0xff]
    %v499 = vld [vmem:[#allocation2 + $0xb28] sm:$0xff]
    %v500 = vld [vmem:[#allocation2 + $0xb30] sm:$0xff]
    %v501 = vld [vmem:[#allocation2 + $0xb38] sm:$0xff]
    %v502 = vld [vmem:[#allocation2 + $0xb40] sm:$0xff]
    %v503 = vld [vmem:[#allocation2 + $0xb48] sm:$0xff]
    %v504 = vld [vmem:[#allocation2 + $0xb50] sm:$0xff]
    %v505 = vld [vmem:[#allocation2 + $0xb58] sm:$0xff]
    %v506 = vld [vmem:[#allocation2 + $0xb60] sm:$0xff]
    %v507 = vld [vmem:[#allocation2 + $0xb68] sm:$0xff]
    %v508 = vld [vmem:[#allocation2 + $0xb70] sm:$0xff]
    %v509 = vld [vmem:[#allocation2 + $0xb78] sm:$0xff]
    %v510 = vld [vmem:[#allocation2 + $0xb80] sm:$0xff]
    %v511 = vld [vmem:[#allocation2 + $0xb88] sm:$0xff]
    %v512 = vld [vmem:[#allocation2 + $0xb90] sm:$0xff]
    %v513 = vld [vmem:[#allocation2 + $0xb98] sm:$0xff]
    %v514 = vld [vmem:[#allocation2 + $0xba0] sm:$0xff]
    %v515 = vld [vmem:[#allocation2 + $0xba8] sm:$0xff]
    %v516 = vld [vmem:[#allocation2 + $0xbb0] sm:$0xff]
    %v517 = vld [vmem:[#allocation2 + $0xbb8] sm:$0xff]
    %v518 = vld [vmem:[#allocation2 + $0xbc0] sm:$0xff]
    %v519 = vld [vmem:[#allocation2 + $0xbc8] sm:$0xff]
    %v520 = vld [vmem:[#allocation2 + $0xbd0] sm:$0xff]
    %v521 = vld [vmem:[#allocation2 + $0xbd8] sm:$0xff]
    %v522 = vld [vmem:[#allocation2 + $0xbe0] sm:$0xff]
    %v523 = vld [vmem:[#allocation2 + $0xbe8] sm:$0xff]
    %v524 = vld [vmem:[#allocation2 + $0xbf0] sm:$0xff]
    %v525 = vld [vmem:[#allocation2 + $0xbf8] sm:$0xff]
    %v526 = vld [vmem:[#allocation2 + $0xc00] sm:$0xff]
    %v527 = vld [vmem:[#allocation2 + $0xc08] sm:$0xff]
    %v528 = vld [vmem:[#allocation2 + $0xc10] sm:$0xff]
    %v529 = vld [vmem:[#allocation2 + $0xc18] sm:$0xff]
    %v530 = vld [vmem:[#allocation2 + $0xc20] sm:$0xff]
    %v531 = vld [vmem:[#allocation2 + $0xc28] sm:$0xff]
    %v532 = vld [vmem:[#allocation2 + $0xc30] sm:$0xff]
    %v533 = vld [vmem:[#allocation2 + $0xc38] sm:$0xff]
    %v534 = vld [vmem:[#allocation2 + $0xc40] sm:$0xff]
    %v535 = vld [vmem:[#allocation2 + $0xc48] sm:$0xff]
    %v536 = vld [vmem:[#allocation2 + $0xc50] sm:$0xff]
    %v537 = vld [vmem:[#allocation2 + $0xc58] sm:$0xff]
    %v538 = vld [vmem:[#allocation2 + $0xc60] sm:$0xff]
    %v539 = vld [vmem:[#allocation2 + $0xc68] sm:$0xff]
    %v540 = vld [vmem:[#allocation2 + $0xc70] sm:$0xff]
    %v541 = vld [vmem:[#allocation2 + $0xc78] sm:$0xff]
    %v542 = vld [vmem:[#allocation2 + $0xc80] sm:$0xff]
    %v543 = vld [vmem:[#allocation2 + $0xc88] sm:$0xff]
    %v544 = vld [vmem:[#allocation2 + $0xc90] sm:$0xff]
    %v545 = vld [vmem:[#allocation2 + $0xc98] sm:$0xff]
    %v546 = vld [vmem:[#allocation2 + $0xca0] sm:$0xff]
    %v547 = vld [vmem:[#allocation2 + $0xca8] sm:$0xff]
    %v548 = vld [vmem:[#allocation2 + $0xcb0] sm:$0xff]
    %v549 = vld [vmem:[#allocation2 + $0xcb8] sm:$0xff]
    %v550 = vld [vmem:[#allocation2 + $0xcc0] sm:$0xff]
    %v551 = vld [vmem:[#allocation2 + $0xcc8] sm:$0xff]
    %v552 = vld [vmem:[#allocation2 + $0xcd0] sm:$0xff]
    %v553 = vld [vmem:[#allocation2 + $0xcd8] sm:$0xff]
    %v554 = vld [vmem:[#allocation2 + $0xce0] sm:$0xff]
    %v555 = vld [vmem:[#allocation2 + $0xce8] sm:$0xff]
    %v556 = vld [vmem:[#allocation2 + $0xcf0] sm:$0xff]
    %v557 = vld [vmem:[#allocation2 + $0xcf8] sm:$0xff]
    %v558 = vld [vmem:[#allocation2 + $0xd00] sm:$0xff]
    %v559 = vld [vmem:[#allocation2 + $0xd08] sm:$0xff]
    %v560 = vld [vmem:[#allocation2 + $0xd10] sm:$0xff]
    %v561 = vld [vmem:[#allocation2 + $0xd18] sm:$0xff]
    %v562 = vld [vmem:[#allocation2 + $0xd20] sm:$0xff]
    %v563 = vld [vmem:[#allocation2 + $0xd28] sm:$0xff]
    %v564 = vld [vmem:[#allocation2 + $0xd30] sm:$0xff]
    %v565 = vld [vmem:[#allocation2 + $0xd38] sm:$0xff]
    %v566 = vld [vmem:[#allocation2 + $0xd40] sm:$0xff]
    %v567 = vld [vmem:[#allocation2 + $0xd48] sm:$0xff]
    %v568 = vld [vmem:[#allocation2 + $0xd50] sm:$0xff]
    %v569 = vld [vmem:[#allocation2 + $0xd58] sm:$0xff]
    %v570 = vld [vmem:[#allocation2 + $0xd60] sm:$0xff]
    %v571 = vld [vmem:[#allocation2 + $0xd68] sm:$0xff]
    %v572 = vld [vmem:[#allocation2 + $0xd70] sm:$0xff]
    %v573 = vld [vmem:[#allocation2 + $0xd78] sm:$0xff]
    %v574 = vld [vmem:[#allocation2 + $0xd80] sm:$0xff]
    %v575 = vld [vmem:[#allocation2 + $0xd88] sm:$0xff]
    %v576 = vld [vmem:[#allocation2 + $0xd90] sm:$0xff]
    %v577 = vld [vmem:[#allocation2 + $0xd98] sm:$0xff]
    %v578 = vld [vmem:[#allocation2 + $0xda0] sm:$0xff]
    %v579 = vld [vmem:[#allocation2 + $0xda8] sm:$0xff]
    %v580 = vld [vmem:[#allocation2 + $0xdb0] sm:$0xff]
    %v581 = vld [vmem:[#allocation2 + $0xdb8] sm:$0xff]
    %v582 = vld [vmem:[#allocation2 + $0xdc0] sm:$0xff]
    %v583 = vld [vmem:[#allocation2 + $0xdc8] sm:$0xff]
    %v584 = vld [vmem:[#allocation2 + $0xdd0] sm:$0xff]
    %v585 = vld [vmem:[#allocation2 + $0xdd8] sm:$0xff]
    %v586 = vld [vmem:[#allocation2 + $0xde0] sm:$0xff]
    %v587 = vld [vmem:[#allocation2 + $0xde8] sm:$0xff]
    %v588 = vld [vmem:[#allocation2 + $0xdf0] sm:$0xff]
    %v589 = vld [vmem:[#allocation2 + $0xdf8] sm:$0xff]
    %v590 = vld [vmem:[#allocation2 + $0xe00] sm:$0xff]
    %v591 = vld [vmem:[#allocation2 + $0xe08] sm:$0xff]
    %v592 = vld [vmem:[#allocation2 + $0xe10] sm:$0xff]
    %v593 = vld [vmem:[#allocation2 + $0xe18] sm:$0xff]
    %v594 = vld [vmem:[#allocation2 + $0xe20] sm:$0xff]
    %v595 = vld [vmem:[#allocation2 + $0xe28] sm:$0xff]
    %v596 = vld [vmem:[#allocation2 + $0xe30] sm:$0xff]
    %v597 = vld [vmem:[#allocation2 + $0xe38] sm:$0xff]
    %v598 = vld [vmem:[#allocation2 + $0xe40] sm:$0xff]
    %v599 = vld [vmem:[#allocation2 + $0xe48] sm:$0xff]
    %v600 = vld [vmem:[#allocation2 + $0xe50] sm:$0xff]
    %v601 = vld [vmem:[#allocation2 + $0xe58] sm:$0xff]
    %v602 = vld [vmem:[#allocation2 + $0xe60] sm:$0xff]
    %v603 = vld [vmem:[#allocation2 + $0xe68] sm:$0xff]
    %v604 = vld [vmem:[#allocation2 + $0xe70] sm:$0xff]
    %v605 = vld [vmem:[#allocation2 + $0xe78] sm:$0xff]
    %v606 = vld [vmem:[#allocation2 + $0xe80] sm:$0xff]
    %v607 = vld [vmem:[#allocation2 + $0xe88] sm:$0xff]
    %v608 = vld [vmem:[#allocation2 + $0xe90] sm:$0xff]
    %v609 = vld [vmem:[#allocation2 + $0xe98] sm:$0xff]
    %v610 = vld [vmem:[#allocation2 + $0xea0] sm:$0xff]
    %v611 = vld [vmem:[#allocation2 + $0xea8] sm:$0xff]
    %v612 = vld [vmem:[#allocation2 + $0xeb0] sm:$0xff]
    %v613 = vld [vmem:[#allocation2 + $0xeb8] sm:$0xff]
    %v614 = vld [vmem:[#allocation2 + $0xec0] sm:$0xff]
    %v615 = vld [vmem:[#allocation2 + $0xec8] sm:$0xff]
    %v616 = vld [vmem:[#allocation2 + $0xed0] sm:$0xff]
    %v617 = vld [vmem:[#allocation2 + $0xed8] sm:$0xff]
    %v618 = vld [vmem:[#allocation2 + $0xee0] sm:$0xff]
    %v619 = vld [vmem:[#allocation2 + $0xee8] sm:$0xff]
    %v620 = vld [vmem:[#allocation2 + $0xef0] sm:$0xff]
    %v621 = vld [vmem:[#allocation2 + $0xef8] sm:$0xff]
    %v622 = vld [vmem:[#allocation2 + $0xf00] sm:$0xff]
    %v623 = vld [vmem:[#allocation2 + $0xf08] sm:$0xff]
    %v624 = vld [vmem:[#allocation2 + $0xf10] sm:$0xff]
    %v625 = vld [vmem:[#allocation2 + $0xf18] sm:$0xff]
    %v626 = vld [vmem:[#allocation2 + $0xf20] sm:$0xff]
    %v627 = vld [vmem:[#allocation2 + $0xf28] sm:$0xff]
    %v628 = vld [vmem:[#allocation2 + $0xf30] sm:$0xff]
    %v629 = vld [vmem:[#allocation2 + $0xf38] sm:$0xff]
    %v630 = vld [vmem:[#allocation2 + $0xf40] sm:$0xff]
    %v631 = vld [vmem:[#allocation2 + $0xf48] sm:$0xff]
    %v632 = vld [vmem:[#allocation2 + $0xf50] sm:$0xff]
    %v633 = vld [vmem:[#allocation2 + $0xf58] sm:$0xff]
    %v634 = vld [vmem:[#allocation2 + $0xf60] sm:$0xff]
    %v635 = vld [vmem:[#allocation2 + $0xf68] sm:$0xff]
    %v636 = vld [vmem:[#allocation2 + $0xf70] sm:$0xff]
    %v637 = vld [vmem:[#allocation2 + $0xf78] sm:$0xff]
    %v638 = vld [vmem:[#allocation2 + $0xf80] sm:$0xff]
    %v639 = vld [vmem:[#allocation2 + $0xf88] sm:$0xff]
    %v640 = vld [vmem:[#allocation2 + $0xf90] sm:$0xff]
    %v641 = vld [vmem:[#allocation2 + $0xf98] sm:$0xff]
    %v642 = vld [vmem:[#allocation2 + $0xfa0] sm:$0xff]
    %v643 = vld [vmem:[#allocation2 + $0xfa8] sm:$0xff]
    %v644 = vld [vmem:[#allocation2 + $0xfb0] sm:$0xff]
    %v645 = vld [vmem:[#allocation2 + $0xfb8] sm:$0xff]
    %v646 = vld [vmem:[#allocation2 + $0xfc0] sm:$0xff]
    %v647 = vld [vmem:[#allocation2 + $0xfc8] sm:$0xff]
    %v648 = vld [vmem:[#allocation2 + $0xfd0] sm:$0xff]
    %v649 = vld [vmem:[#allocation2 + $0xfd8] sm:$0xff]
    %v650 = vld [vmem:[#allocation2 + $0xfe0] sm:$0xff]
    %v651 = vld [vmem:[#allocation2 + $0xfe8] sm:$0xff]
    %v652 = vld [vmem:[#allocation2 + $0xff0] sm:$0xff]
    %v653 = vld [vmem:[#allocation2 + $0xff8] sm:$0xff]
    %v654 = vld [vmem:[#allocation2 + $0x1000] sm:$0xff]
    %v655 = vld [vmem:[#allocation2 + $0x1008] sm:$0xff]
    %v656 = vld [vmem:[#allocation2 + $0x1010] sm:$0xff]
    %v657 = vld [vmem:[#allocation2 + $0x1018] sm:$0xff]
    %v658 = vld [vmem:[#allocation2 + $0x1020] sm:$0xff]
    %v659 = vld [vmem:[#allocation2 + $0x1028] sm:$0xff]
    %v660 = vld [vmem:[#allocation2 + $0x1030] sm:$0xff]
    %v661 = vld [vmem:[#allocation2 + $0x1038] sm:$0xff]
    %v662 = vld [vmem:[#allocation2 + $0x1040] sm:$0xff]
    %v663 = vld [vmem:[#allocation2 + $0x1048] sm:$0xff]
    %v664 = vld [vmem:[#allocation2 + $0x1050] sm:$0xff]
    %v665 = vld [vmem:[#allocation2 + $0x1058] sm:$0xff]
    %v666 = vld [vmem:[#allocation2 + $0x1060] sm:$0xff]
    %v667 = vld [vmem:[#allocation2 + $0x1068] sm:$0xff]
    %v668 = vld [vmem:[#allocation2 + $0x1070] sm:$0xff]
    %v669 = vld [vmem:[#allocation2 + $0x1078] sm:$0xff]
    %v670 = vld [vmem:[#allocation2 + $0x1080] sm:$0xff]
    %v671 = vld [vmem:[#allocation2 + $0x1088] sm:$0xff]
    %v672 = vld [vmem:[#allocation2 + $0x1090] sm:$0xff]
    %v673 = vld [vmem:[#allocation2 + $0x1098] sm:$0xff]
    %v674 = vld [vmem:[#allocation2 + $0x10a0] sm:$0xff]
    %v675 = vld [vmem:[#allocation2 + $0x10a8] sm:$0xff]
    %v676 = vld [vmem:[#allocation2 + $0x10b0] sm:$0xff]
    %v677 = vld [vmem:[#allocation2 + $0x10b8] sm:$0xff]
    %v678 = vld [vmem:[#allocation2 + $0x10c0] sm:$0xff]
    %v679 = vld [vmem:[#allocation2 + $0x10c8] sm:$0xff]
    %v680 = vld [vmem:[#allocation2 + $0x10d0] sm:$0xff]
    %v681 = vld [vmem:[#allocation2 + $0x10d8] sm:$0xff]
    %v682 = vld [vmem:[#allocation2 + $0x10e0] sm:$0xff]
    %v683 = vld [vmem:[#allocation2 + $0x10e8] sm:$0xff]
    %v684 = vld [vmem:[#allocation2 + $0x10f0] sm:$0xff]
    %v685 = vld [vmem:[#allocation2 + $0x10f8] sm:$0xff]
    %v686 = vld [vmem:[#allocation2 + $0x1100] sm:$0xff]
    %v687 = vld [vmem:[#allocation2 + $0x1108] sm:$0xff]
    %v688 = vld [vmem:[#allocation2 + $0x1110] sm:$0xff]
    %v689 = vld [vmem:[#allocation2 + $0x1118] sm:$0xff]
    %v690 = vld [vmem:[#allocation2 + $0x1120] sm:$0xff]
    %v691 = vld [vmem:[#allocation2 + $0x1128] sm:$0xff]
    %v692 = vld [vmem:[#allocation2 + $0x1130] sm:$0xff]
    %v693 = vld [vmem:[#allocation2 + $0x1138] sm:$0xff]
    %v694 = vld [vmem:[#allocation2 + $0x1140] sm:$0xff]
    %v695 = vld [vmem:[#allocation2 + $0x1148] sm:$0xff]
    %v696 = vld [vmem:[#allocation2 + $0x1150] sm:$0xff]
    %v697 = vld [vmem:[#allocation2 + $0x1158] sm:$0xff]
    %v698 = vld [vmem:[#allocation2 + $0x1160] sm:$0xff]
    %v699 = vld [vmem:[#allocation2 + $0x1168] sm:$0xff]
    %v700 = vld [vmem:[#allocation2 + $0x1170] sm:$0xff]
    %v701 = vld [vmem:[#allocation2 + $0x1178] sm:$0xff]
    %v702 = vld [vmem:[#allocation2 + $0x1180] sm:$0xff]
    %v703 = vld [vmem:[#allocation2 + $0x1188] sm:$0xff]
    %v704 = vld [vmem:[#allocation2 + $0x1190] sm:$0xff]
    %v705 = vld [vmem:[#allocation2 + $0x1198] sm:$0xff]
    %v706 = vld [vmem:[#allocation2 + $0x11a0] sm:$0xff]
    %v707 = vld [vmem:[#allocation2 + $0x11a8] sm:$0xff]
    %v708 = vld [vmem:[#allocation2 + $0x11b0] sm:$0xff]
    %v709 = vld [vmem:[#allocation2 + $0x11b8] sm:$0xff]
    %v710 = vld [vmem:[#allocation2 + $0x11c0] sm:$0xff]
    %v711 = vld [vmem:[#allocation2 + $0x11c8] sm:$0xff]
    %v712 = vld [vmem:[#allocation2 + $0x11d0] sm:$0xff]
    %v713 = vld [vmem:[#allocation2 + $0x11d8] sm:$0xff]
    %v714 = vld [vmem:[#allocation2 + $0x11e0] sm:$0xff]
    %v715 = vld [vmem:[#allocation2 + $0x11e8] sm:$0xff]
    %v716 = vld [vmem:[#allocation2 + $0x11f0] sm:$0xff]
    %v717 = vld [vmem:[#allocation2 + $0x11f8] sm:$0xff]
    %v721 = vunpack.c.l.b16 %v139
    %v722 = vunpack.c.h.b16 %v139
    %v723 = vunpack.c.l.b16 %v140
    %v724 = vunpack.c.h.b16 %v140
    %v725 = vunpack.c.l.b16 %v141
    %v726 = vunpack.c.h.b16 %v141
    %v727 = vpack.c.b16 %v721, %v721
    %v728 = vpack.c.b16 %v722, %v722
    %v729 = vpack.c.b16 %v723, %v723
    %v730 = vpack.c.b16 %v724, %v724
    %v731 = vpack.c.b16 %v725, %v725
    %v732 = vpack.c.b16 %v726, %v726
    %v1315 = vunpack.c.l.b16 %v142
    %v1316 = vunpack.c.h.b16 %v142
    %v1317 = vunpack.c.l.b16 %v143
    %v1318 = vunpack.c.h.b16 %v143
    %v1319 = vunpack.c.l.b16 %v144
    %v1320 = vunpack.c.h.b16 %v144
    %v1321 = vunpack.c.l.b16 %v145
    %v1322 = vunpack.c.h.b16 %v145
    %v1323 = vunpack.c.l.b16 %v146
    %v1324 = vunpack.c.h.b16 %v146
    %v1325 = vunpack.c.l.b16 %v147
    %v1326 = vunpack.c.h.b16 %v147
    %v1327 = vunpack.c.l.b16 %v148
    %v1328 = vunpack.c.h.b16 %v148
    %v1329 = vunpack.c.l.b16 %v149
    %v1330 = vunpack.c.h.b16 %v149
    %v1331 = vunpack.c.l.b16 %v150
    %v1332 = vunpack.c.h.b16 %v150
    %v1333 = vunpack.c.l.b16 %v151
    %v1334 = vunpack.c.h.b16 %v151
    %v1335 = vunpack.c.l.b16 %v152
    %v1336 = vunpack.c.h.b16 %v152
    %v1337 = vunpack.c.l.b16 %v153
    %v1338 = vunpack.c.h.b16 %v153
    %v1339 = vunpack.c.l.b16 %v154
    %v1340 = vunpack.c.h.b16 %v154
    %v1341 = vunpack.c.l.b16 %v155
    %v1342 = vunpack.c.h.b16 %v155
    %v1343 = vunpack.c.l.b16 %v156
    %v1344 = vunpack.c.h.b16 %v156
    %v1345 = vunpack.c.l.b16 %v157
    %v1346 = vunpack.c.h.b16 %v157
    %v1347 = vunpack.c.l.b16 %v158
    %v1348 = vunpack.c.h.b16 %v158
    %v1349 = vunpack.c.l.b16 %v159
    %v1350 = vunpack.c.h.b16 %v159
    %v1351 = vunpack.c.l.b16 %v160
    %v1352 = vunpack.c.h.b16 %v160
    %v1353 = vunpack.c.l.b16 %v161
    %v1354 = vunpack.c.h.b16 %v161
    %v1355 = vunpack.c.l.b16 %v162
    %v1356 = vunpack.c.h.b16 %v162
    %v1357 = vunpack.c.l.b16 %v163
    %v1358 = vunpack.c.h.b16 %v163
    %v1359 = vunpack.c.l.b16 %v164
    %v1360 = vunpack.c.h.b16 %v164
    %v1361 = vunpack.c.l.b16 %v165
    %v1362 = vunpack.c.h.b16 %v165
    %v1363 = vunpack.c.l.b16 %v166
    %v1364 = vunpack.c.h.b16 %v166
    %v1365 = vunpack.c.l.b16 %v167
    %v1366 = vunpack.c.h.b16 %v167
    %v1367 = vunpack.c.l.b16 %v168
    %v1368 = vunpack.c.h.b16 %v168
    %v1369 = vunpack.c.l.b16 %v169
    %v1370 = vunpack.c.h.b16 %v169
    %v1371 = vunpack.c.l.b16 %v170
    %v1372 = vunpack.c.h.b16 %v170
    %v1373 = vunpack.c.l.b16 %v171
    %v1374 = vunpack.c.h.b16 %v171
    %v1375 = vunpack.c.l.b16 %v172
    %v1376 = vunpack.c.h.b16 %v172
    %v1377 = vunpack.c.l.b16 %v173
    %v1378 = vunpack.c.h.b16 %v173
    %v1379 = vunpack.c.l.b16 %v174
    %v1380 = vunpack.c.h.b16 %v174
    %v1381 = vunpack.c.l.b16 %v175
    %v1382 = vunpack.c.h.b16 %v175
    %v1383 = vunpack.c.l.b16 %v176
    %v1384 = vunpack.c.h.b16 %v176
    %v1385 = vunpack.c.l.b16 %v177
    %v1386 = vunpack.c.h.b16 %v177
    %v1387 = vunpack.c.l.b16 %v178
    %v1388 = vunpack.c.h.b16 %v178
    %v1389 = vunpack.c.l.b16 %v179
    %v1390 = vunpack.c.h.b16 %v179
    %v1391 = vunpack.c.l.b16 %v180
    %v1392 = vunpack.c.h.b16 %v180
    %v1393 = vunpack.c.l.b16 %v181
    %v1394 = vunpack.c.h.b16 %v181
    %v1395 = vunpack.c.l.b16 %v182
    %v1396 = vunpack.c.h.b16 %v182
    %v1397 = vunpack.c.l.b16 %v183
    %v1398 = vunpack.c.h.b16 %v183
    %v1399 = vunpack.c.l.b16 %v184
    %v1400 = vunpack.c.h.b16 %v184
    %v1401 = vunpack.c.l.b16 %v185
    %v1402 = vunpack.c.h.b16 %v185
    %v1403 = vunpack.c.l.b16 %v186
    %v1404 = vunpack.c.h.b16 %v186
    %v1405 = vunpack.c.l.b16 %v187
    %v1406 = vunpack.c.h.b16 %v187
    %v1407 = vunpack.c.l.b16 %v188
    %v1408 = vunpack.c.h.b16 %v188
    %v1409 = vunpack.c.l.b16 %v189
    %v1410 = vunpack.c.h.b16 %v189
    %v1411 = vunpack.c.l.b16 %v190
    %v1412 = vunpack.c.h.b16 %v190
    %v1413 = vunpack.c.l.b16 %v191
    %v1414 = vunpack.c.h.b16 %v191
    %v1415 = vunpack.c.l.b16 %v192
    %v1416 = vunpack.c.h.b16 %v192
    %v1417 = vunpack.c.l.b16 %v193
    %v1418 = vunpack.c.h.b16 %v193
    %v1419 = vunpack.c.l.b16 %v194
    %v1420 = vunpack.c.h.b16 %v194
    %v1421 = vunpack.c.l.b16 %v195
    %v1422 = vunpack.c.h.b16 %v195
    %v1423 = vunpack.c.l.b16 %v196
    %v1424 = vunpack.c.h.b16 %v196
    %v1425 = vunpack.c.l.b16 %v197
    %v1426 = vunpack.c.h.b16 %v197
    %v1427 = vunpack.c.l.b16 %v198
    %v1428 = vunpack.c.h.b16 %v198
    %v1429 = vunpack.c.l.b16 %v199
    %v1430 = vunpack.c.h.b16 %v199
    %v1431 = vunpack.c.l.b16 %v200
    %v1432 = vunpack.c.h.b16 %v200
    %v1433 = vunpack.c.l.b16 %v201
    %v1434 = vunpack.c.h.b16 %v201
    %v1435 = vunpack.c.l.b16 %v202
    %v1436 = vunpack.c.h.b16 %v202
    %v1437 = vunpack.c.l.b16 %v203
    %v1438 = vunpack.c.h.b16 %v203
    %v1439 = vunpack.c.l.b16 %v204
    %v1440 = vunpack.c.h.b16 %v204
    %v1441 = vunpack.c.l.b16 %v205
    %v1442 = vunpack.c.h.b16 %v205
    %v1443 = vunpack.c.l.b16 %v206
    %v1444 = vunpack.c.h.b16 %v206
    %v1445 = vunpack.c.l.b16 %v207
    %v1446 = vunpack.c.h.b16 %v207
    %v1447 = vunpack.c.l.b16 %v208
    %v1448 = vunpack.c.h.b16 %v208
    %v1449 = vunpack.c.l.b16 %v209
    %v1450 = vunpack.c.h.b16 %v209
    %v1451 = vunpack.c.l.b16 %v210
    %v1452 = vunpack.c.h.b16 %v210
    %v1453 = vunpack.c.l.b16 %v211
    %v1454 = vunpack.c.h.b16 %v211
    %v1455 = vunpack.c.l.b16 %v212
    %v1456 = vunpack.c.h.b16 %v212
    %v1457 = vunpack.c.l.b16 %v213
    %v1458 = vunpack.c.h.b16 %v213
    %v1459 = vunpack.c.l.b16 %v214
    %v1460 = vunpack.c.h.b16 %v214
    %v1461 = vunpack.c.l.b16 %v215
    %v1462 = vunpack.c.h.b16 %v215
    %v1463 = vunpack.c.l.b16 %v216
    %v1464 = vunpack.c.h.b16 %v216
    %v1465 = vunpack.c.l.b16 %v217
    %v1466 = vunpack.c.h.b16 %v217
    %v1467 = vunpack.c.l.b16 %v218
    %v1468 = vunpack.c.h.b16 %v218
    %v1469 = vunpack.c.l.b16 %v219
    %v1470 = vunpack.c.h.b16 %v219
    %v1471 = vunpack.c.l.b16 %v220
    %v1472 = vunpack.c.h.b16 %v220
    %v1473 = vunpack.c.l.b16 %v221
    %v1474 = vunpack.c.h.b16 %v221
    %v1475 = vunpack.c.l.b16 %v222
    %v1476 = vunpack.c.h.b16 %v222
    %v1477 = vunpack.c.l.b16 %v223
    %v1478 = vunpack.c.h.b16 %v223
    %v1479 = vunpack.c.l.b16 %v224
    %v1480 = vunpack.c.h.b16 %v224
    %v1481 = vunpack.c.l.b16 %v225
    %v1482 = vunpack.c.h.b16 %v225
    %v1483 = vunpack.c.l.b16 %v226
    %v1484 = vunpack.c.h.b16 %v226
    %v1485 = vunpack.c.l.b16 %v227
    %v1486 = vunpack.c.h.b16 %v227
    %v1487 = vunpack.c.l.b16 %v228
    %v1488 = vunpack.c.h.b16 %v228
    %v1489 = vunpack.c.l.b16 %v229
    %v1490 = vunpack.c.h.b16 %v229
    %v1491 = vunpack.c.l.b16 %v230
    %v1492 = vunpack.c.h.b16 %v230
    %v1493 = vunpack.c.l.b16 %v231
    %v1494 = vunpack.c.h.b16 %v231
    %v1495 = vunpack.c.l.b16 %v232
    %v1496 = vunpack.c.h.b16 %v232
    %v1497 = vunpack.c.l.b16 %v233
    %v1498 = vunpack.c.h.b16 %v233
    %v1499 = vunpack.c.l.b16 %v234
    %v1500 = vunpack.c.h.b16 %v234
    %v1501 = vunpack.c.l.b16 %v235
    %v1502 = vunpack.c.h.b16 %v235
    %v1503 = vunpack.c.l.b16 %v236
    %v1504 = vunpack.c.h.b16 %v236
    %v1505 = vunpack.c.l.b16 %v237
    %v1506 = vunpack.c.h.b16 %v237
    %v1507 = vunpack.c.l.b16 %v238
    %v1508 = vunpack.c.h.b16 %v238
    %v1509 = vunpack.c.l.b16 %v239
    %v1510 = vunpack.c.h.b16 %v239
    %v1511 = vunpack.c.l.b16 %v240
    %v1512 = vunpack.c.h.b16 %v240
    %v1513 = vunpack.c.l.b16 %v241
    %v1514 = vunpack.c.h.b16 %v241
    %v1515 = vunpack.c.l.b16 %v242
    %v1516 = vunpack.c.h.b16 %v242
    %v1517 = vunpack.c.l.b16 %v243
    %v1518 = vunpack.c.h.b16 %v243
    %v1519 = vunpack.c.l.b16 %v244
    %v1520 = vunpack.c.h.b16 %v244
    %v1521 = vunpack.c.l.b16 %v245
    %v1522 = vunpack.c.h.b16 %v245
    %v1523 = vunpack.c.l.b16 %v246
    %v1524 = vunpack.c.h.b16 %v246
    %v1525 = vunpack.c.l.b16 %v247
    %v1526 = vunpack.c.h.b16 %v247
    %v1527 = vunpack.c.l.b16 %v248
    %v1528 = vunpack.c.h.b16 %v248
    %v1529 = vunpack.c.l.b16 %v249
    %v1530 = vunpack.c.h.b16 %v249
    %v1531 = vunpack.c.l.b16 %v250
    %v1532 = vunpack.c.h.b16 %v250
    %v1533 = vunpack.c.l.b16 %v251
    %v1534 = vunpack.c.h.b16 %v251
    %v1535 = vunpack.c.l.b16 %v252
    %v1536 = vunpack.c.h.b16 %v252
    %v1537 = vunpack.c.l.b16 %v253
    %v1538 = vunpack.c.h.b16 %v253
    %v1539 = vunpack.c.l.b16 %v254
    %v1540 = vunpack.c.h.b16 %v254
    %v1541 = vunpack.c.l.b16 %v255
    %v1542 = vunpack.c.h.b16 %v255
    %v1543 = vunpack.c.l.b16 %v256
    %v1544 = vunpack.c.h.b16 %v256
    %v1545 = vunpack.c.l.b16 %v257
    %v1546 = vunpack.c.h.b16 %v257
    %v1547 = vunpack.c.l.b16 %v258
    %v1548 = vunpack.c.h.b16 %v258
    %v1549 = vunpack.c.l.b16 %v259
    %v1550 = vunpack.c.h.b16 %v259
    %v1551 = vunpack.c.l.b16 %v260
    %v1552 = vunpack.c.h.b16 %v260
    %v1553 = vunpack.c.l.b16 %v261
    %v1554 = vunpack.c.h.b16 %v261
    %v1555 = vunpack.c.l.b16 %v262
    %v1556 = vunpack.c.h.b16 %v262
    %v1557 = vunpack.c.l.b16 %v263
    %v1558 = vunpack.c.h.b16 %v263
    %v1559 = vunpack.c.l.b16 %v264
    %v1560 = vunpack.c.h.b16 %v264
    %v1561 = vunpack.c.l.b16 %v265
    %v1562 = vunpack.c.h.b16 %v265
    %v1563 = vunpack.c.l.b16 %v266
    %v1564 = vunpack.c.h.b16 %v266
    %v1565 = vunpack.c.l.b16 %v267
    %v1566 = vunpack.c.h.b16 %v267
    %v1567 = vunpack.c.l.b16 %v268
    %v1568 = vunpack.c.h.b16 %v268
    %v1569 = vunpack.c.l.b16 %v269
    %v1570 = vunpack.c.h.b16 %v269
    %v1571 = vunpack.c.l.b16 %v270
    %v1572 = vunpack.c.h.b16 %v270
    %v1573 = vunpack.c.l.b16 %v271
    %v1574 = vunpack.c.h.b16 %v271
    %v1575 = vunpack.c.l.b16 %v272
    %v1576 = vunpack.c.h.b16 %v272
    %v1577 = vunpack.c.l.b16 %v273
    %v1578 = vunpack.c.h.b16 %v273
    %v1579 = vunpack.c.l.b16 %v274
    %v1580 = vunpack.c.h.b16 %v274
    %v1581 = vunpack.c.l.b16 %v275
    %v1582 = vunpack.c.h.b16 %v275
    %v1583 = vunpack.c.l.b16 %v276
    %v1584 = vunpack.c.h.b16 %v276
    %v1585 = vunpack.c.l.b16 %v277
    %v1586 = vunpack.c.h.b16 %v277
    %v1587 = vunpack.c.l.b16 %v278
    %v1588 = vunpack.c.h.b16 %v278
    %v1589 = vunpack.c.l.b16 %v279
    %v1590 = vunpack.c.h.b16 %v279
    %v1591 = vunpack.c.l.b16 %v280
    %v1592 = vunpack.c.h.b16 %v280
    %v1593 = vunpack.c.l.b16 %v281
    %v1594 = vunpack.c.h.b16 %v281
    %v1595 = vunpack.c.l.b16 %v282
    %v1596 = vunpack.c.h.b16 %v282
    %v1597 = vunpack.c.l.b16 %v283
    %v1598 = vunpack.c.h.b16 %v283
    %v1599 = vunpack.c.l.b16 %v284
    %v1600 = vunpack.c.h.b16 %v284
    %v1601 = vunpack.c.l.b16 %v285
    %v1602 = vunpack.c.h.b16 %v285
    %v1603 = vunpack.c.l.b16 %v286
    %v1604 = vunpack.c.h.b16 %v286
    %v1605 = vunpack.c.l.b16 %v287
    %v1606 = vunpack.c.h.b16 %v287
    %v1607 = vunpack.c.l.b16 %v288
    %v1608 = vunpack.c.h.b16 %v288
    %v1609 = vunpack.c.l.b16 %v289
    %v1610 = vunpack.c.h.b16 %v289
    %v1611 = vunpack.c.l.b16 %v290
    %v1612 = vunpack.c.h.b16 %v290
    %v1613 = vunpack.c.l.b16 %v291
    %v1614 = vunpack.c.h.b16 %v291
    %v1615 = vunpack.c.l.b16 %v292
    %v1616 = vunpack.c.h.b16 %v292
    %v1617 = vunpack.c.l.b16 %v293
    %v1618 = vunpack.c.h.b16 %v293
    %v1619 = vunpack.c.l.b16 %v294
    %v1620 = vunpack.c.h.b16 %v294
    %v1621 = vunpack.c.l.b16 %v295
    %v1622 = vunpack.c.h.b16 %v295
    %v1623 = vunpack.c.l.b16 %v296
    %v1624 = vunpack.c.h.b16 %v296
    %v1625 = vunpack.c.l.b16 %v297
    %v1626 = vunpack.c.h.b16 %v297
    %v1627 = vunpack.c.l.b16 %v298
    %v1628 = vunpack.c.h.b16 %v298
    %v1629 = vunpack.c.l.b16 %v299
    %v1630 = vunpack.c.h.b16 %v299
    %v1631 = vunpack.c.l.b16 %v300
    %v1632 = vunpack.c.h.b16 %v300
    %v1633 = vunpack.c.l.b16 %v301
    %v1634 = vunpack.c.h.b16 %v301
    %v1635 = vunpack.c.l.b16 %v302
    %v1636 = vunpack.c.h.b16 %v302
    %v1637 = vunpack.c.l.b16 %v303
    %v1638 = vunpack.c.h.b16 %v303
    %v1639 = vunpack.c.l.b16 %v304
    %v1640 = vunpack.c.h.b16 %v304
    %v1641 = vunpack.c.l.b16 %v305
    %v1642 = vunpack.c.h.b16 %v305
    %v1643 = vunpack.c.l.b16 %v306
    %v1644 = vunpack.c.h.b16 %v306
    %v1645 = vunpack.c.l.b16 %v307
    %v1646 = vunpack.c.h.b16 %v307
    %v1647 = vunpack.c.l.b16 %v308
    %v1648 = vunpack.c.h.b16 %v308
    %v1649 = vunpack.c.l.b16 %v309
    %v1650 = vunpack.c.h.b16 %v309
    %v1651 = vunpack.c.l.b16 %v310
    %v1652 = vunpack.c.h.b16 %v310
    %v1653 = vunpack.c.l.b16 %v311
    %v1654 = vunpack.c.h.b16 %v311
    %v1655 = vunpack.c.l.b16 %v312
    %v1656 = vunpack.c.h.b16 %v312
    %v1657 = vunpack.c.l.b16 %v313
    %v1658 = vunpack.c.h.b16 %v313
    %v1659 = vunpack.c.l.b16 %v314
    %v1660 = vunpack.c.h.b16 %v314
    %v1661 = vunpack.c.l.b16 %v315
    %v1662 = vunpack.c.h.b16 %v315
    %v1663 = vunpack.c.l.b16 %v316
    %v1664 = vunpack.c.h.b16 %v316
    %v1665 = vunpack.c.l.b16 %v317
    %v1666 = vunpack.c.h.b16 %v317
    %v1667 = vunpack.c.l.b16 %v318
    %v1668 = vunpack.c.h.b16 %v318
    %v1669 = vunpack.c.l.b16 %v319
    %v1670 = vunpack.c.h.b16 %v319
    %v1671 = vunpack.c.l.b16 %v320
    %v1672 = vunpack.c.h.b16 %v320
    %v1673 = vunpack.c.l.b16 %v321
    %v1674 = vunpack.c.h.b16 %v321
    %v1675 = vunpack.c.l.b16 %v322
    %v1676 = vunpack.c.h.b16 %v322
    %v1677 = vunpack.c.l.b16 %v323
    %v1678 = vunpack.c.h.b16 %v323
    %v1679 = vunpack.c.l.b16 %v324
    %v1680 = vunpack.c.h.b16 %v324
    %v1681 = vunpack.c.l.b16 %v325
    %v1682 = vunpack.c.h.b16 %v325
    %v1683 = vunpack.c.l.b16 %v326
    %v1684 = vunpack.c.h.b16 %v326
    %v1685 = vunpack.c.l.b16 %v327
    %v1686 = vunpack.c.h.b16 %v327
    %v1687 = vunpack.c.l.b16 %v328
    %v1688 = vunpack.c.h.b16 %v328
    %v1689 = vunpack.c.l.b16 %v329
    %v1690 = vunpack.c.h.b16 %v329
    %v1691 = vunpack.c.l.b16 %v330
    %v1692 = vunpack.c.h.b16 %v330
    %v1693 = vunpack.c.l.b16 %v331
    %v1694 = vunpack.c.h.b16 %v331
    %v1695 = vunpack.c.l.b16 %v332
    %v1696 = vunpack.c.h.b16 %v332
    %v1697 = vunpack.c.l.b16 %v333
    %v1698 = vunpack.c.h.b16 %v333
    %v1699 = vunpack.c.l.b16 %v334
    %v1700 = vunpack.c.h.b16 %v334
    %v1701 = vunpack.c.l.b16 %v335
    %v1702 = vunpack.c.h.b16 %v335
    %v1703 = vunpack.c.l.b16 %v336
    %v1704 = vunpack.c.h.b16 %v336
    %v1705 = vunpack.c.l.b16 %v337
    %v1706 = vunpack.c.h.b16 %v337
    %v1707 = vunpack.c.l.b16 %v338
    %v1708 = vunpack.c.h.b16 %v338
    %v1709 = vunpack.c.l.b16 %v339
    %v1710 = vunpack.c.h.b16 %v339
    %v1711 = vunpack.c.l.b16 %v340
    %v1712 = vunpack.c.h.b16 %v340
    %v1713 = vunpack.c.l.b16 %v341
    %v1714 = vunpack.c.h.b16 %v341
    %v1715 = vunpack.c.l.b16 %v342
    %v1716 = vunpack.c.h.b16 %v342
    %v1717 = vunpack.c.l.b16 %v343
    %v1718 = vunpack.c.h.b16 %v343
    %v1719 = vunpack.c.l.b16 %v344
    %v1720 = vunpack.c.h.b16 %v344
    %v1721 = vunpack.c.l.b16 %v345
    %v1722 = vunpack.c.h.b16 %v345
    %v1723 = vunpack.c.l.b16 %v346
    %v1724 = vunpack.c.h.b16 %v346
    %v1725 = vunpack.c.l.b16 %v347
    %v1726 = vunpack.c.h.b16 %v347
    %v1727 = vunpack.c.l.b16 %v348
    %v1728 = vunpack.c.h.b16 %v348
    %v1729 = vunpack.c.l.b16 %v349
    %v1730 = vunpack.c.h.b16 %v349
    %v1731 = vunpack.c.l.b16 %v350
    %v1732 = vunpack.c.h.b16 %v350
    %v1733 = vunpack.c.l.b16 %v351
    %v1734 = vunpack.c.h.b16 %v351
    %v1735 = vunpack.c.l.b16 %v352
    %v1736 = vunpack.c.h.b16 %v352
    %v1737 = vunpack.c.l.b16 %v353
    %v1738 = vunpack.c.h.b16 %v353
    %v1739 = vunpack.c.l.b16 %v354
    %v1740 = vunpack.c.h.b16 %v354
    %v1741 = vunpack.c.l.b16 %v355
    %v1742 = vunpack.c.h.b16 %v355
    %v1743 = vunpack.c.l.b16 %v356
    %v1744 = vunpack.c.h.b16 %v356
    %v1745 = vunpack.c.l.b16 %v357
    %v1746 = vunpack.c.h.b16 %v357
    %v1747 = vunpack.c.l.b16 %v358
    %v1748 = vunpack.c.h.b16 %v358
    %v1749 = vunpack.c.l.b16 %v359
    %v1750 = vunpack.c.h.b16 %v359
    %v1751 = vunpack.c.l.b16 %v360
    %v1752 = vunpack.c.h.b16 %v360
    %v1753 = vunpack.c.l.b16 %v361
    %v1754 = vunpack.c.h.b16 %v361
    %v1755 = vunpack.c.l.b16 %v362
    %v1756 = vunpack.c.h.b16 %v362
    %v1757 = vunpack.c.l.b16 %v363
    %v1758 = vunpack.c.h.b16 %v363
    %v1759 = vunpack.c.l.b16 %v364
    %v1760 = vunpack.c.h.b16 %v364
    %v1761 = vunpack.c.l.b16 %v365
    %v1762 = vunpack.c.h.b16 %v365
    %v1763 = vunpack.c.l.b16 %v366
    %v1764 = vunpack.c.h.b16 %v366
    %v1765 = vunpack.c.l.b16 %v367
    %v1766 = vunpack.c.h.b16 %v367
    %v1767 = vunpack.c.l.b16 %v368
    %v1768 = vunpack.c.h.b16 %v368
    %v1769 = vunpack.c.l.b16 %v369
    %v1770 = vunpack.c.h.b16 %v369
    %v1771 = vunpack.c.l.b16 %v370
    %v1772 = vunpack.c.h.b16 %v370
    %v1773 = vunpack.c.l.b16 %v371
    %v1774 = vunpack.c.h.b16 %v371
    %v1775 = vunpack.c.l.b16 %v372
    %v1776 = vunpack.c.h.b16 %v372
    %v1777 = vunpack.c.l.b16 %v373
    %v1778 = vunpack.c.h.b16 %v373
    %v1779 = vunpack.c.l.b16 %v374
    %v1780 = vunpack.c.h.b16 %v374
    %v1781 = vunpack.c.l.b16 %v375
    %v1782 = vunpack.c.h.b16 %v375
    %v1783 = vunpack.c.l.b16 %v376
    %v1784 = vunpack.c.h.b16 %v376
    %v1785 = vunpack.c.l.b16 %v377
    %v1786 = vunpack.c.h.b16 %v377
    %v1787 = vunpack.c.l.b16 %v378
    %v1788 = vunpack.c.h.b16 %v378
    %v1789 = vunpack.c.l.b16 %v379
    %v1790 = vunpack.c.h.b16 %v379
    %v1791 = vunpack.c.l.b16 %v380
    %v1792 = vunpack.c.h.b16 %v380
    %v1793 = vunpack.c.l.b16 %v381
    %v1794 = vunpack.c.h.b16 %v381
    %v1795 = vunpack.c.l.b16 %v382
    %v1796 = vunpack.c.h.b16 %v382
    %v1797 = vunpack.c.l.b16 %v383
    %v1798 = vunpack.c.h.b16 %v383
    %v1799 = vunpack.c.l.b16 %v384
    %v1800 = vunpack.c.h.b16 %v384
    %v1801 = vunpack.c.l.b16 %v385
    %v1802 = vunpack.c.h.b16 %v385
    %v1803 = vunpack.c.l.b16 %v386
    %v1804 = vunpack.c.h.b16 %v386
    %v1805 = vunpack.c.l.b16 %v387
    %v1806 = vunpack.c.h.b16 %v387
    %v1807 = vunpack.c.l.b16 %v388
    %v1808 = vunpack.c.h.b16 %v388
    %v1809 = vunpack.c.l.b16 %v389
    %v1810 = vunpack.c.h.b16 %v389
    %v1811 = vunpack.c.l.b16 %v390
    %v1812 = vunpack.c.h.b16 %v390
    %v1813 = vunpack.c.l.b16 %v391
    %v1814 = vunpack.c.h.b16 %v391
    %v1815 = vunpack.c.l.b16 %v392
    %v1816 = vunpack.c.h.b16 %v392
    %v1817 = vunpack.c.l.b16 %v393
    %v1818 = vunpack.c.h.b16 %v393
    %v1819 = vunpack.c.l.b16 %v394
    %v1820 = vunpack.c.h.b16 %v394
    %v1821 = vunpack.c.l.b16 %v395
    %v1822 = vunpack.c.h.b16 %v395
    %v1823 = vunpack.c.l.b16 %v396
    %v1824 = vunpack.c.h.b16 %v396
    %v1825 = vunpack.c.l.b16 %v397
    %v1826 = vunpack.c.h.b16 %v397
    %v1827 = vunpack.c.l.b16 %v398
    %v1828 = vunpack.c.h.b16 %v398
    %v1829 = vunpack.c.l.b16 %v399
    %v1830 = vunpack.c.h.b16 %v399
    %v1831 = vunpack.c.l.b16 %v400
    %v1832 = vunpack.c.h.b16 %v400
    %v1833 = vunpack.c.l.b16 %v401
    %v1834 = vunpack.c.h.b16 %v401
    %v1835 = vunpack.c.l.b16 %v402
    %v1836 = vunpack.c.h.b16 %v402
    %v1837 = vunpack.c.l.b16 %v403
    %v1838 = vunpack.c.h.b16 %v403
    %v1839 = vunpack.c.l.b16 %v404
    %v1840 = vunpack.c.h.b16 %v404
    %v1841 = vunpack.c.l.b16 %v405
    %v1842 = vunpack.c.h.b16 %v405
    %v1843 = vunpack.c.l.b16 %v406
    %v1844 = vunpack.c.h.b16 %v406
    %v1845 = vunpack.c.l.b16 %v407
    %v1846 = vunpack.c.h.b16 %v407
    %v1847 = vunpack.c.l.b16 %v408
    %v1848 = vunpack.c.h.b16 %v408
    %v1849 = vunpack.c.l.b16 %v409
    %v1850 = vunpack.c.h.b16 %v409
    %v1851 = vunpack.c.l.b16 %v410
    %v1852 = vunpack.c.h.b16 %v410
    %v1853 = vunpack.c.l.b16 %v411
    %v1854 = vunpack.c.h.b16 %v411
    %v1855 = vunpack.c.l.b16 %v412
    %v1856 = vunpack.c.h.b16 %v412
    %v1857 = vunpack.c.l.b16 %v413
    %v1858 = vunpack.c.h.b16 %v413
    %v1859 = vunpack.c.l.b16 %v414
    %v1860 = vunpack.c.h.b16 %v414
    %v1861 = vunpack.c.l.b16 %v415
    %v1862 = vunpack.c.h.b16 %v415
    %v1863 = vunpack.c.l.b16 %v416
    %v1864 = vunpack.c.h.b16 %v416
    %v1865 = vunpack.c.l.b16 %v417
    %v1866 = vunpack.c.h.b16 %v417
    %v1867 = vunpack.c.l.b16 %v418
    %v1868 = vunpack.c.h.b16 %v418
    %v1869 = vunpack.c.l.b16 %v419
    %v1870 = vunpack.c.h.b16 %v419
    %v1871 = vunpack.c.l.b16 %v420
    %v1872 = vunpack.c.h.b16 %v420
    %v1873 = vunpack.c.l.b16 %v421
    %v1874 = vunpack.c.h.b16 %v421
    %v1875 = vunpack.c.l.b16 %v422
    %v1876 = vunpack.c.h.b16 %v422
    %v1877 = vunpack.c.l.b16 %v423
    %v1878 = vunpack.c.h.b16 %v423
    %v1879 = vunpack.c.l.b16 %v424
    %v1880 = vunpack.c.h.b16 %v424
    %v1881 = vunpack.c.l.b16 %v425
    %v1882 = vunpack.c.h.b16 %v425
    %v1883 = vunpack.c.l.b16 %v426
    %v1884 = vunpack.c.h.b16 %v426
    %v1885 = vunpack.c.l.b16 %v427
    %v1886 = vunpack.c.h.b16 %v427
    %v1887 = vunpack.c.l.b16 %v428
    %v1888 = vunpack.c.h.b16 %v428
    %v1889 = vunpack.c.l.b16 %v429
    %v1890 = vunpack.c.h.b16 %v429
    %v1891 = vunpack.c.l.b16 %v430
    %v1892 = vunpack.c.h.b16 %v430
    %v1893 = vunpack.c.l.b16 %v431
    %v1894 = vunpack.c.h.b16 %v431
    %v1895 = vunpack.c.l.b16 %v432
    %v1896 = vunpack.c.h.b16 %v432
    %v1897 = vunpack.c.l.b16 %v433
    %v1898 = vunpack.c.h.b16 %v433
    %v1899 = vunpack.c.l.b16 %v434
    %v1900 = vunpack.c.h.b16 %v434
    %v1901 = vunpack.c.l.b16 %v435
    %v1902 = vunpack.c.h.b16 %v435
    %v1903 = vunpack.c.l.b16 %v436
    %v1904 = vunpack.c.h.b16 %v436
    %v1905 = vunpack.c.l.b16 %v437
    %v1906 = vunpack.c.h.b16 %v437
    %v1907 = vunpack.c.l.b16 %v438
    %v1908 = vunpack.c.h.b16 %v438
    %v1909 = vunpack.c.l.b16 %v439
    %v1910 = vunpack.c.h.b16 %v439
    %v1911 = vunpack.c.l.b16 %v440
    %v1912 = vunpack.c.h.b16 %v440
    %v1913 = vunpack.c.l.b16 %v441
    %v1914 = vunpack.c.h.b16 %v441
    %v1915 = vunpack.c.l.b16 %v442
    %v1916 = vunpack.c.h.b16 %v442
    %v1917 = vunpack.c.l.b16 %v443
    %v1918 = vunpack.c.h.b16 %v443
    %v1919 = vunpack.c.l.b16 %v444
    %v1920 = vunpack.c.h.b16 %v444
    %v1921 = vunpack.c.l.b16 %v445
    %v1922 = vunpack.c.h.b16 %v445
    %v1923 = vunpack.c.l.b16 %v446
    %v1924 = vunpack.c.h.b16 %v446
    %v1925 = vunpack.c.l.b16 %v447
    %v1926 = vunpack.c.h.b16 %v447
    %v1927 = vunpack.c.l.b16 %v448
    %v1928 = vunpack.c.h.b16 %v448
    %v1929 = vunpack.c.l.b16 %v449
    %v1930 = vunpack.c.h.b16 %v449
    %v1931 = vunpack.c.l.b16 %v450
    %v1932 = vunpack.c.h.b16 %v450
    %v1933 = vunpack.c.l.b16 %v451
    %v1934 = vunpack.c.h.b16 %v451
    %v1935 = vunpack.c.l.b16 %v452
    %v1936 = vunpack.c.h.b16 %v452
    %v1937 = vunpack.c.l.b16 %v453
    %v1938 = vunpack.c.h.b16 %v453
    %v1939 = vunpack.c.l.b16 %v454
    %v1940 = vunpack.c.h.b16 %v454
    %v1941 = vunpack.c.l.b16 %v455
    %v1942 = vunpack.c.h.b16 %v455
    %v1943 = vunpack.c.l.b16 %v456
    %v1944 = vunpack.c.h.b16 %v456
    %v1945 = vunpack.c.l.b16 %v457
    %v1946 = vunpack.c.h.b16 %v457
    %v1947 = vunpack.c.l.b16 %v458
    %v1948 = vunpack.c.h.b16 %v458
    %v1949 = vunpack.c.l.b16 %v459
    %v1950 = vunpack.c.h.b16 %v459
    %v1951 = vunpack.c.l.b16 %v460
    %v1952 = vunpack.c.h.b16 %v460
    %v1953 = vunpack.c.l.b16 %v461
    %v1954 = vunpack.c.h.b16 %v461
    %v1955 = vunpack.c.l.b16 %v462
    %v1956 = vunpack.c.h.b16 %v462
    %v1957 = vunpack.c.l.b16 %v463
    %v1958 = vunpack.c.h.b16 %v463
    %v1959 = vunpack.c.l.b16 %v464
    %v1960 = vunpack.c.h.b16 %v464
    %v1961 = vunpack.c.l.b16 %v465
    %v1962 = vunpack.c.h.b16 %v465
    %v1963 = vunpack.c.l.b16 %v466
    %v1964 = vunpack.c.h.b16 %v466
    %v1965 = vunpack.c.l.b16 %v467
    %v1966 = vunpack.c.h.b16 %v467
    %v1967 = vunpack.c.l.b16 %v468
    %v1968 = vunpack.c.h.b16 %v468
    %v1969 = vunpack.c.l.b16 %v469
    %v1970 = vunpack.c.h.b16 %v469
    %v1971 = vunpack.c.l.b16 %v470
    %v1972 = vunpack.c.h.b16 %v470
    %v1973 = vunpack.c.l.b16 %v471
    %v1974 = vunpack.c.h.b16 %v471
    %v1975 = vunpack.c.l.b16 %v472
    %v1976 = vunpack.c.h.b16 %v472
    %v1977 = vunpack.c.l.b16 %v473
    %v1978 = vunpack.c.h.b16 %v473
    %v1979 = vunpack.c.l.b16 %v474
    %v1980 = vunpack.c.h.b16 %v474
    %v1981 = vunpack.c.l.b16 %v475
    %v1982 = vunpack.c.h.b16 %v475
    %v1983 = vunpack.c.l.b16 %v476
    %v1984 = vunpack.c.h.b16 %v476
    %v1985 = vunpack.c.l.b16 %v477
    %v1986 = vunpack.c.h.b16 %v477
    %v1987 = vunpack.c.l.b16 %v478
    %v1988 = vunpack.c.h.b16 %v478
    %v1989 = vunpack.c.l.b16 %v479
    %v1990 = vunpack.c.h.b16 %v479
    %v1991 = vunpack.c.l.b16 %v480
    %v1992 = vunpack.c.h.b16 %v480
    %v1993 = vunpack.c.l.b16 %v481
    %v1994 = vunpack.c.h.b16 %v481
    %v1995 = vunpack.c.l.b16 %v482
    %v1996 = vunpack.c.h.b16 %v482
    %v1997 = vunpack.c.l.b16 %v483
    %v1998 = vunpack.c.h.b16 %v483
    %v1999 = vunpack.c.l.b16 %v484
    %v2000 = vunpack.c.h.b16 %v484
    %v2001 = vunpack.c.l.b16 %v485
    %v2002 = vunpack.c.h.b16 %v485
    %v2003 = vunpack.c.l.b16 %v486
    %v2004 = vunpack.c.h.b16 %v486
    %v2005 = vunpack.c.l.b16 %v487
    %v2006 = vunpack.c.h.b16 %v487
    %v2007 = vunpack.c.l.b16 %v488
    %v2008 = vunpack.c.h.b16 %v488
    %v2009 = vunpack.c.l.b16 %v489
    %v2010 = vunpack.c.h.b16 %v489
    %v2011 = vunpack.c.l.b16 %v490
    %v2012 = vunpack.c.h.b16 %v490
    %v2013 = vunpack.c.l.b16 %v491
    %v2014 = vunpack.c.h.b16 %v491
    %v2015 = vunpack.c.l.b16 %v492
    %v2016 = vunpack.c.h.b16 %v492
    %v2017 = vunpack.c.l.b16 %v493
    %v2018 = vunpack.c.h.b16 %v493
    %v2019 = vunpack.c.l.b16 %v494
    %v2020 = vunpack.c.h.b16 %v494
    %v2021 = vunpack.c.l.b16 %v495
    %v2022 = vunpack.c.h.b16 %v495
    %v2023 = vunpack.c.l.b16 %v496
    %v2024 = vunpack.c.h.b16 %v496
    %v2025 = vunpack.c.l.b16 %v497
    %v2026 = vunpack.c.h.b16 %v497
    %v2027 = vunpack.c.l.b16 %v498
    %v2028 = vunpack.c.h.b16 %v498
    %v2029 = vunpack.c.l.b16 %v499
    %v2030 = vunpack.c.h.b16 %v499
    %v2031 = vunpack.c.l.b16 %v500
    %v2032 = vunpack.c.h.b16 %v500
    %v2033 = vunpack.c.l.b16 %v501
    %v2034 = vunpack.c.h.b16 %v501
    %v2035 = vunpack.c.l.b16 %v502
    %v2036 = vunpack.c.h.b16 %v502
    %v2037 = vunpack.c.l.b16 %v503
    %v2038 = vunpack.c.h.b16 %v503
    %v2039 = vunpack.c.l.b16 %v504
    %v2040 = vunpack.c.h.b16 %v504
    %v2041 = vunpack.c.l.b16 %v505
    %v2042 = vunpack.c.h.b16 %v505
    %v2043 = vunpack.c.l.b16 %v506
    %v2044 = vunpack.c.h.b16 %v506
    %v2045 = vunpack.c.l.b16 %v507
    %v2046 = vunpack.c.h.b16 %v507
    %v2047 = vunpack.c.l.b16 %v508
    %v2048 = vunpack.c.h.b16 %v508
    %v2049 = vunpack.c.l.b16 %v509
    %v2050 = vunpack.c.h.b16 %v509
    %v2051 = vunpack.c.l.b16 %v510
    %v2052 = vunpack.c.h.b16 %v510
    %v2053 = vunpack.c.l.b16 %v511
    %v2054 = vunpack.c.h.b16 %v511
    %v2055 = vunpack.c.l.b16 %v512
    %v2056 = vunpack.c.h.b16 %v512
    %v2057 = vunpack.c.l.b16 %v513
    %v2058 = vunpack.c.h.b16 %v513
    %v2059 = vunpack.c.l.b16 %v514
    %v2060 = vunpack.c.h.b16 %v514
    %v2061 = vunpack.c.l.b16 %v515
    %v2062 = vunpack.c.h.b16 %v515
    %v2063 = vunpack.c.l.b16 %v516
    %v2064 = vunpack.c.h.b16 %v516
    %v2065 = vunpack.c.l.b16 %v517
    %v2066 = vunpack.c.h.b16 %v517
    %v2067 = vunpack.c.l.b16 %v518
    %v2068 = vunpack.c.h.b16 %v518
    %v2069 = vunpack.c.l.b16 %v519
    %v2070 = vunpack.c.h.b16 %v519
    %v2071 = vunpack.c.l.b16 %v520
    %v2072 = vunpack.c.h.b16 %v520
    %v2073 = vunpack.c.l.b16 %v521
    %v2074 = vunpack.c.h.b16 %v521
    %v2075 = vunpack.c.l.b16 %v522
    %v2076 = vunpack.c.h.b16 %v522
    %v2077 = vunpack.c.l.b16 %v523
    %v2078 = vunpack.c.h.b16 %v523
    %v2079 = vunpack.c.l.b16 %v524
    %v2080 = vunpack.c.h.b16 %v524
    %v2081 = vunpack.c.l.b16 %v525
    %v2082 = vunpack.c.h.b16 %v525
    %v2083 = vunpack.c.l.b16 %v526
    %v2084 = vunpack.c.h.b16 %v526
    %v2085 = vunpack.c.l.b16 %v527
    %v2086 = vunpack.c.h.b16 %v527
    %v2087 = vunpack.c.l.b16 %v528
    %v2088 = vunpack.c.h.b16 %v528
    %v2089 = vunpack.c.l.b16 %v529
    %v2090 = vunpack.c.h.b16 %v529
    %v2091 = vunpack.c.l.b16 %v530
    %v2092 = vunpack.c.h.b16 %v530
    %v2093 = vunpack.c.l.b16 %v531
    %v2094 = vunpack.c.h.b16 %v531
    %v2095 = vunpack.c.l.b16 %v532
    %v2096 = vunpack.c.h.b16 %v532
    %v2097 = vunpack.c.l.b16 %v533
    %v2098 = vunpack.c.h.b16 %v533
    %v2099 = vunpack.c.l.b16 %v534
    %v2100 = vunpack.c.h.b16 %v534
    %v2101 = vunpack.c.l.b16 %v535
    %v2102 = vunpack.c.h.b16 %v535
    %v2103 = vunpack.c.l.b16 %v536
    %v2104 = vunpack.c.h.b16 %v536
    %v2105 = vunpack.c.l.b16 %v537
    %v2106 = vunpack.c.h.b16 %v537
    %v2107 = vunpack.c.l.b16 %v538
    %v2108 = vunpack.c.h.b16 %v538
    %v2109 = vunpack.c.l.b16 %v539
    %v2110 = vunpack.c.h.b16 %v539
    %v2111 = vunpack.c.l.b16 %v540
    %v2112 = vunpack.c.h.b16 %v540
    %v2113 = vunpack.c.l.b16 %v541
    %v2114 = vunpack.c.h.b16 %v541
    %v2115 = vunpack.c.l.b16 %v542
    %v2116 = vunpack.c.h.b16 %v542
    %v2117 = vunpack.c.l.b16 %v543
    %v2118 = vunpack.c.h.b16 %v543
    %v2119 = vunpack.c.l.b16 %v544
    %v2120 = vunpack.c.h.b16 %v544
    %v2121 = vunpack.c.l.b16 %v545
    %v2122 = vunpack.c.h.b16 %v545
    %v2123 = vunpack.c.l.b16 %v546
    %v2124 = vunpack.c.h.b16 %v546
    %v2125 = vunpack.c.l.b16 %v547
    %v2126 = vunpack.c.h.b16 %v547
    %v2127 = vunpack.c.l.b16 %v548
    %v2128 = vunpack.c.h.b16 %v548
    %v2129 = vunpack.c.l.b16 %v549
    %v2130 = vunpack.c.h.b16 %v549
    %v2131 = vunpack.c.l.b16 %v550
    %v2132 = vunpack.c.h.b16 %v550
    %v2133 = vunpack.c.l.b16 %v551
    %v2134 = vunpack.c.h.b16 %v551
    %v2135 = vunpack.c.l.b16 %v552
    %v2136 = vunpack.c.h.b16 %v552
    %v2137 = vunpack.c.l.b16 %v553
    %v2138 = vunpack.c.h.b16 %v553
    %v2139 = vunpack.c.l.b16 %v554
    %v2140 = vunpack.c.h.b16 %v554
    %v2141 = vunpack.c.l.b16 %v555
    %v2142 = vunpack.c.h.b16 %v555
    %v2143 = vunpack.c.l.b16 %v556
    %v2144 = vunpack.c.h.b16 %v556
    %v2145 = vunpack.c.l.b16 %v557
    %v2146 = vunpack.c.h.b16 %v557
    %v2147 = vunpack.c.l.b16 %v558
    %v2148 = vunpack.c.h.b16 %v558
    %v2149 = vunpack.c.l.b16 %v559
    %v2150 = vunpack.c.h.b16 %v559
    %v2151 = vunpack.c.l.b16 %v560
    %v2152 = vunpack.c.h.b16 %v560
    %v2153 = vunpack.c.l.b16 %v561
    %v2154 = vunpack.c.h.b16 %v561
    %v2155 = vunpack.c.l.b16 %v562
    %v2156 = vunpack.c.h.b16 %v562
    %v2157 = vunpack.c.l.b16 %v563
    %v2158 = vunpack.c.h.b16 %v563
    %v2159 = vunpack.c.l.b16 %v564
    %v2160 = vunpack.c.h.b16 %v564
    %v2161 = vunpack.c.l.b16 %v565
    %v2162 = vunpack.c.h.b16 %v565
    %v2163 = vunpack.c.l.b16 %v566
    %v2164 = vunpack.c.h.b16 %v566
    %v2165 = vunpack.c.l.b16 %v567
    %v2166 = vunpack.c.h.b16 %v567
    %v2167 = vunpack.c.l.b16 %v568
    %v2168 = vunpack.c.h.b16 %v568
    %v2169 = vunpack.c.l.b16 %v569
    %v2170 = vunpack.c.h.b16 %v569
    %v2171 = vunpack.c.l.b16 %v570
    %v2172 = vunpack.c.h.b16 %v570
    %v2173 = vunpack.c.l.b16 %v571
    %v2174 = vunpack.c.h.b16 %v571
    %v2175 = vunpack.c.l.b16 %v572
    %v2176 = vunpack.c.h.b16 %v572
    %v2177 = vunpack.c.l.b16 %v573
    %v2178 = vunpack.c.h.b16 %v573
    %v2179 = vunpack.c.l.b16 %v574
    %v2180 = vunpack.c.h.b16 %v574
    %v2181 = vunpack.c.l.b16 %v575
    %v2182 = vunpack.c.h.b16 %v575
    %v2183 = vunpack.c.l.b16 %v576
    %v2184 = vunpack.c.h.b16 %v576
    %v2185 = vunpack.c.l.b16 %v577
    %v2186 = vunpack.c.h.b16 %v577
    %v2187 = vunpack.c.l.b16 %v578
    %v2188 = vunpack.c.h.b16 %v578
    %v2189 = vunpack.c.l.b16 %v579
    %v2190 = vunpack.c.h.b16 %v579
    %v2191 = vunpack.c.l.b16 %v580
    %v2192 = vunpack.c.h.b16 %v580
    %v2193 = vunpack.c.l.b16 %v581
    %v2194 = vunpack.c.h.b16 %v581
    %v2195 = vunpack.c.l.b16 %v582
    %v2196 = vunpack.c.h.b16 %v582
    %v2197 = vunpack.c.l.b16 %v583
    %v2198 = vunpack.c.h.b16 %v583
    %v2199 = vunpack.c.l.b16 %v584
    %v2200 = vunpack.c.h.b16 %v584
    %v2201 = vunpack.c.l.b16 %v585
    %v2202 = vunpack.c.h.b16 %v585
    %v2203 = vunpack.c.l.b16 %v586
    %v2204 = vunpack.c.h.b16 %v586
    %v2205 = vunpack.c.l.b16 %v587
    %v2206 = vunpack.c.h.b16 %v587
    %v2207 = vunpack.c.l.b16 %v588
    %v2208 = vunpack.c.h.b16 %v588
    %v2209 = vunpack.c.l.b16 %v589
    %v2210 = vunpack.c.h.b16 %v589
    %v2211 = vunpack.c.l.b16 %v590
    %v2212 = vunpack.c.h.b16 %v590
    %v2213 = vunpack.c.l.b16 %v591
    %v2214 = vunpack.c.h.b16 %v591
    %v2215 = vunpack.c.l.b16 %v592
    %v2216 = vunpack.c.h.b16 %v592
    %v2217 = vunpack.c.l.b16 %v593
    %v2218 = vunpack.c.h.b16 %v593
    %v2219 = vunpack.c.l.b16 %v594
    %v2220 = vunpack.c.h.b16 %v594
    %v2221 = vunpack.c.l.b16 %v595
    %v2222 = vunpack.c.h.b16 %v595
    %v2223 = vunpack.c.l.b16 %v596
    %v2224 = vunpack.c.h.b16 %v596
    %v2225 = vunpack.c.l.b16 %v597
    %v2226 = vunpack.c.h.b16 %v597
    %v2227 = vunpack.c.l.b16 %v598
    %v2228 = vunpack.c.h.b16 %v598
    %v2229 = vunpack.c.l.b16 %v599
    %v2230 = vunpack.c.h.b16 %v599
    %v2231 = vunpack.c.l.b16 %v600
    %v2232 = vunpack.c.h.b16 %v600
    %v2233 = vunpack.c.l.b16 %v601
    %v2234 = vunpack.c.h.b16 %v601
    %v2235 = vunpack.c.l.b16 %v602
    %v2236 = vunpack.c.h.b16 %v602
    %v2237 = vunpack.c.l.b16 %v603
    %v2238 = vunpack.c.h.b16 %v603
    %v2239 = vunpack.c.l.b16 %v604
    %v2240 = vunpack.c.h.b16 %v604
    %v2241 = vunpack.c.l.b16 %v605
    %v2242 = vunpack.c.h.b16 %v605
    %v2243 = vunpack.c.l.b16 %v606
    %v2244 = vunpack.c.h.b16 %v606
    %v2245 = vunpack.c.l.b16 %v607
    %v2246 = vunpack.c.h.b16 %v607
    %v2247 = vunpack.c.l.b16 %v608
    %v2248 = vunpack.c.h.b16 %v608
    %v2249 = vunpack.c.l.b16 %v609
    %v2250 = vunpack.c.h.b16 %v609
    %v2251 = vunpack.c.l.b16 %v610
    %v2252 = vunpack.c.h.b16 %v610
    %v2253 = vunpack.c.l.b16 %v611
    %v2254 = vunpack.c.h.b16 %v611
    %v2255 = vunpack.c.l.b16 %v612
    %v2256 = vunpack.c.h.b16 %v612
    %v2257 = vunpack.c.l.b16 %v613
    %v2258 = vunpack.c.h.b16 %v613
    %v2259 = vunpack.c.l.b16 %v614
    %v2260 = vunpack.c.h.b16 %v614
    %v2261 = vunpack.c.l.b16 %v615
    %v2262 = vunpack.c.h.b16 %v615
    %v2263 = vunpack.c.l.b16 %v616
    %v2264 = vunpack.c.h.b16 %v616
    %v2265 = vunpack.c.l.b16 %v617
    %v2266 = vunpack.c.h.b16 %v617
    %v2267 = vunpack.c.l.b16 %v618
    %v2268 = vunpack.c.h.b16 %v618
    %v2269 = vunpack.c.l.b16 %v619
    %v2270 = vunpack.c.h.b16 %v619
    %v2271 = vunpack.c.l.b16 %v620
    %v2272 = vunpack.c.h.b16 %v620
    %v2273 = vunpack.c.l.b16 %v621
    %v2274 = vunpack.c.h.b16 %v621
    %v2275 = vunpack.c.l.b16 %v622
    %v2276 = vunpack.c.h.b16 %v622
    %v2277 = vunpack.c.l.b16 %v623
    %v2278 = vunpack.c.h.b16 %v623
    %v2279 = vunpack.c.l.b16 %v624
    %v2280 = vunpack.c.h.b16 %v624
    %v2281 = vunpack.c.l.b16 %v625
    %v2282 = vunpack.c.h.b16 %v625
    %v2283 = vunpack.c.l.b16 %v626
    %v2284 = vunpack.c.h.b16 %v626
    %v2285 = vunpack.c.l.b16 %v627
    %v2286 = vunpack.c.h.b16 %v627
    %v2287 = vunpack.c.l.b16 %v628
    %v2288 = vunpack.c.h.b16 %v628
    %v2289 = vunpack.c.l.b16 %v629
    %v2290 = vunpack.c.h.b16 %v629
    %v2291 = vunpack.c.l.b16 %v630
    %v2292 = vunpack.c.h.b16 %v630
    %v2293 = vunpack.c.l.b16 %v631
    %v2294 = vunpack.c.h.b16 %v631
    %v2295 = vunpack.c.l.b16 %v632
    %v2296 = vunpack.c.h.b16 %v632
    %v2297 = vunpack.c.l.b16 %v633
    %v2298 = vunpack.c.h.b16 %v633
    %v2299 = vunpack.c.l.b16 %v634
    %v2300 = vunpack.c.h.b16 %v634
    %v2301 = vunpack.c.l.b16 %v635
    %v2302 = vunpack.c.h.b16 %v635
    %v2303 = vunpack.c.l.b16 %v636
    %v2304 = vunpack.c.h.b16 %v636
    %v2305 = vunpack.c.l.b16 %v637
    %v2306 = vunpack.c.h.b16 %v637
    %v2307 = vunpack.c.l.b16 %v638
    %v2308 = vunpack.c.h.b16 %v638
    %v2309 = vunpack.c.l.b16 %v639
    %v2310 = vunpack.c.h.b16 %v639
    %v2311 = vunpack.c.l.b16 %v640
    %v2312 = vunpack.c.h.b16 %v640
    %v2313 = vunpack.c.l.b16 %v641
    %v2314 = vunpack.c.h.b16 %v641
    %v2315 = vunpack.c.l.b16 %v642
    %v2316 = vunpack.c.h.b16 %v642
    %v2317 = vunpack.c.l.b16 %v643
    %v2318 = vunpack.c.h.b16 %v643
    %v2319 = vunpack.c.l.b16 %v644
    %v2320 = vunpack.c.h.b16 %v644
    %v2321 = vunpack.c.l.b16 %v645
    %v2322 = vunpack.c.h.b16 %v645
    %v2323 = vunpack.c.l.b16 %v646
    %v2324 = vunpack.c.h.b16 %v646
    %v2325 = vunpack.c.l.b16 %v647
    %v2326 = vunpack.c.h.b16 %v647
    %v2327 = vunpack.c.l.b16 %v648
    %v2328 = vunpack.c.h.b16 %v648
    %v2329 = vunpack.c.l.b16 %v649
    %v2330 = vunpack.c.h.b16 %v649
    %v2331 = vunpack.c.l.b16 %v650
    %v2332 = vunpack.c.h.b16 %v650
    %v2333 = vunpack.c.l.b16 %v651
    %v2334 = vunpack.c.h.b16 %v651
    %v2335 = vunpack.c.l.b16 %v652
    %v2336 = vunpack.c.h.b16 %v652
    %v2337 = vunpack.c.l.b16 %v653
    %v2338 = vunpack.c.h.b16 %v653
    %v2339 = vunpack.c.l.b16 %v654
    %v2340 = vunpack.c.h.b16 %v654
    %v2341 = vunpack.c.l.b16 %v655
    %v2342 = vunpack.c.h.b16 %v655
    %v2343 = vunpack.c.l.b16 %v656
    %v2344 = vunpack.c.h.b16 %v656
    %v2345 = vunpack.c.l.b16 %v657
    %v2346 = vunpack.c.h.b16 %v657
    %v2347 = vunpack.c.l.b16 %v658
    %v2348 = vunpack.c.h.b16 %v658
    %v2349 = vunpack.c.l.b16 %v659
    %v2350 = vunpack.c.h.b16 %v659
    %v2351 = vunpack.c.l.b16 %v660
    %v2352 = vunpack.c.h.b16 %v660
    %v2353 = vunpack.c.l.b16 %v661
    %v2354 = vunpack.c.h.b16 %v661
    %v2355 = vunpack.c.l.b16 %v662
    %v2356 = vunpack.c.h.b16 %v662
    %v2357 = vunpack.c.l.b16 %v663
    %v2358 = vunpack.c.h.b16 %v663
    %v2359 = vunpack.c.l.b16 %v664
    %v2360 = vunpack.c.h.b16 %v664
    %v2361 = vunpack.c.l.b16 %v665
    %v2362 = vunpack.c.h.b16 %v665
    %v2363 = vunpack.c.l.b16 %v666
    %v2364 = vunpack.c.h.b16 %v666
    %v2365 = vunpack.c.l.b16 %v667
    %v2366 = vunpack.c.h.b16 %v667
    %v2367 = vunpack.c.l.b16 %v668
    %v2368 = vunpack.c.h.b16 %v668
    %v2369 = vunpack.c.l.b16 %v669
    %v2370 = vunpack.c.h.b16 %v669
    %v2371 = vunpack.c.l.b16 %v670
    %v2372 = vunpack.c.h.b16 %v670
    %v2373 = vunpack.c.l.b16 %v671
    %v2374 = vunpack.c.h.b16 %v671
    %v2375 = vunpack.c.l.b16 %v672
    %v2376 = vunpack.c.h.b16 %v672
    %v2377 = vunpack.c.l.b16 %v673
    %v2378 = vunpack.c.h.b16 %v673
    %v2379 = vunpack.c.l.b16 %v674
    %v2380 = vunpack.c.h.b16 %v674
    %v2381 = vunpack.c.l.b16 %v675
    %v2382 = vunpack.c.h.b16 %v675
    %v2383 = vunpack.c.l.b16 %v676
    %v2384 = vunpack.c.h.b16 %v676
    %v2385 = vunpack.c.l.b16 %v677
    %v2386 = vunpack.c.h.b16 %v677
    %v2387 = vunpack.c.l.b16 %v678
    %v2388 = vunpack.c.h.b16 %v678
    %v2389 = vunpack.c.l.b16 %v679
    %v2390 = vunpack.c.h.b16 %v679
    %v2391 = vunpack.c.l.b16 %v680
    %v2392 = vunpack.c.h.b16 %v680
    %v2393 = vunpack.c.l.b16 %v681
    %v2394 = vunpack.c.h.b16 %v681
    %v2395 = vunpack.c.l.b16 %v682
    %v2396 = vunpack.c.h.b16 %v682
    %v2397 = vunpack.c.l.b16 %v683
    %v2398 = vunpack.c.h.b16 %v683
    %v2399 = vunpack.c.l.b16 %v684
    %v2400 = vunpack.c.h.b16 %v684
    %v2401 = vunpack.c.l.b16 %v685
    %v2402 = vunpack.c.h.b16 %v685
    %v2403 = vunpack.c.l.b16 %v686
    %v2404 = vunpack.c.h.b16 %v686
    %v2405 = vunpack.c.l.b16 %v687
    %v2406 = vunpack.c.h.b16 %v687
    %v2407 = vunpack.c.l.b16 %v688
    %v2408 = vunpack.c.h.b16 %v688
    %v2409 = vunpack.c.l.b16 %v689
    %v2410 = vunpack.c.h.b16 %v689
    %v2411 = vunpack.c.l.b16 %v690
    %v2412 = vunpack.c.h.b16 %v690
    %v2413 = vunpack.c.l.b16 %v691
    %v2414 = vunpack.c.h.b16 %v691
    %v2415 = vunpack.c.l.b16 %v692
    %v2416 = vunpack.c.h.b16 %v692
    %v2417 = vunpack.c.l.b16 %v693
    %v2418 = vunpack.c.h.b16 %v693
    %v2419 = vunpack.c.l.b16 %v694
    %v2420 = vunpack.c.h.b16 %v694
    %v2421 = vunpack.c.l.b16 %v695
    %v2422 = vunpack.c.h.b16 %v695
    %v2423 = vunpack.c.l.b16 %v696
    %v2424 = vunpack.c.h.b16 %v696
    %v2425 = vunpack.c.l.b16 %v697
    %v2426 = vunpack.c.h.b16 %v697
    %v2427 = vunpack.c.l.b16 %v698
    %v2428 = vunpack.c.h.b16 %v698
    %v2429 = vunpack.c.l.b16 %v699
    %v2430 = vunpack.c.h.b16 %v699
    %v2431 = vunpack.c.l.b16 %v700
    %v2432 = vunpack.c.h.b16 %v700
    %v2433 = vunpack.c.l.b16 %v701
    %v2434 = vunpack.c.h.b16 %v701
    %v2435 = vunpack.c.l.b16 %v702
    %v2436 = vunpack.c.h.b16 %v702
    %v2437 = vunpack.c.l.b16 %v703
    %v2438 = vunpack.c.h.b16 %v703
    %v2439 = vunpack.c.l.b16 %v704
    %v2440 = vunpack.c.h.b16 %v704
    %v2441 = vunpack.c.l.b16 %v705
    %v2442 = vunpack.c.h.b16 %v705
    %v2443 = vunpack.c.l.b16 %v706
    %v2444 = vunpack.c.h.b16 %v706
    %v2445 = vunpack.c.l.b16 %v707
    %v2446 = vunpack.c.h.b16 %v707
    %v2447 = vunpack.c.l.b16 %v708
    %v2448 = vunpack.c.h.b16 %v708
    %v2449 = vunpack.c.l.b16 %v709
    %v2450 = vunpack.c.h.b16 %v709
    %v2451 = vunpack.c.l.b16 %v710
    %v2452 = vunpack.c.h.b16 %v710
    %v2453 = vunpack.c.l.b16 %v711
    %v2454 = vunpack.c.h.b16 %v711
    %v2455 = vunpack.c.l.b16 %v712
    %v2456 = vunpack.c.h.b16 %v712
    %v2457 = vunpack.c.l.b16 %v713
    %v2458 = vunpack.c.h.b16 %v713
    %v2459 = vunpack.c.l.b16 %v714
    %v2460 = vunpack.c.h.b16 %v714
    %v2461 = vunpack.c.l.b16 %v715
    %v2462 = vunpack.c.h.b16 %v715
    %v2463 = vunpack.c.l.b16 %v716
    %v2464 = vunpack.c.h.b16 %v716
    %v2465 = vunpack.c.l.b16 %v717
    %v2466 = vunpack.c.h.b16 %v717
    %v2467 = vpack.c.b16 %v1327, %v1315
    %v2468 = vpack.c.b16 %v1328, %v1316
    %v2469 = vpack.c.b16 %v1329, %v1317
    %v2470 = vpack.c.b16 %v1330, %v1318
    %v2471 = vpack.c.b16 %v1331, %v1319
    %v2472 = vpack.c.b16 %v1332, %v1320
    %v2473 = vpack.c.b16 %v1333, %v1321
    %v2474 = vpack.c.b16 %v1334, %v1322
    %v2475 = vpack.c.b16 %v1335, %v1323
    %v2476 = vpack.c.b16 %v1336, %v1324
    %v2477 = vpack.c.b16 %v1337, %v1325
    %v2478 = vpack.c.b16 %v1338, %v1326
    %v2479 = vpack.c.b16 %v1351, %v1339
    %v2480 = vpack.c.b16 %v1352, %v1340
    %v2481 = vpack.c.b16 %v1353, %v1341
    %v2482 = vpack.c.b16 %v1354, %v1342
    %v2483 = vpack.c.b16 %v1355, %v1343
    %v2484 = vpack.c.b16 %v1356, %v1344
    %v2485 = vpack.c.b16 %v1357, %v1345
    %v2486 = vpack.c.b16 %v1358, %v1346
    %v2487 = vpack.c.b16 %v1359, %v1347
    %v2488 = vpack.c.b16 %v1360, %v1348
    %v2489 = vpack.c.b16 %v1361, %v1349
    %v2490 = vpack.c.b16 %v1362, %v1350
    %v2491 = vpack.c.b16 %v1375, %v1363
    %v2492 = vpack.c.b16 %v1376, %v1364
    %v2493 = vpack.c.b16 %v1377, %v1365
    %v2494 = vpack.c.b16 %v1378, %v1366
    %v2495 = vpack.c.b16 %v1379, %v1367
    %v2496 = vpack.c.b16 %v1380, %v1368
    %v2497 = vpack.c.b16 %v1381, %v1369
    %v2498 = vpack.c.b16 %v1382, %v1370
    %v2499 = vpack.c.b16 %v1383, %v1371
    %v2500 = vpack.c.b16 %v1384, %v1372
    %v2501 = vpack.c.b16 %v1385, %v1373
    %v2502 = vpack.c.b16 %v1386, %v1374
    %v2503 = vpack.c.b16 %v1399, %v1387
    %v2504 = vpack.c.b16 %v1400, %v1388
    %v2505 = vpack.c.b16 %v1401, %v1389
    %v2506 = vpack.c.b16 %v1402, %v1390
    %v2507 = vpack.c.b16 %v1403, %v1391
    %v2508 = vpack.c.b16 %v1404, %v1392
    %v2509 = vpack.c.b16 %v1405, %v1393
    %v2510 = vpack.c.b16 %v1406, %v1394
    %v2511 = vpack.c.b16 %v1407, %v1395
    %v2512 = vpack.c.b16 %v1408, %v1396
    %v2513 = vpack.c.b16 %v1409, %v1397
    %v2514 = vpack.c.b16 %v1410, %v1398
    %v2515 = vpack.c.b16 %v1423, %v1411
    %v2516 = vpack.c.b16 %v1424, %v1412
    %v2517 = vpack.c.b16 %v1425, %v1413
    %v2518 = vpack.c.b16 %v1426, %v1414
    %v2519 = vpack.c.b16 %v1427, %v1415
    %v2520 = vpack.c.b16 %v1428, %v1416
    %v2521 = vpack.c.b16 %v1429, %v1417
    %v2522 = vpack.c.b16 %v1430, %v1418
    %v2523 = vpack.c.b16 %v1431, %v1419
    %v2524 = vpack.c.b16 %v1432, %v1420
    %v2525 = vpack.c.b16 %v1433, %v1421
    %v2526 = vpack.c.b16 %v1434, %v1422
    %v2527 = vpack.c.b16 %v1447, %v1435
    %v2528 = vpack.c.b16 %v1448, %v1436
    %v2529 = vpack.c.b16 %v1449, %v1437
    %v2530 = vpack.c.b16 %v1450, %v1438
    %v2531 = vpack.c.b16 %v1451, %v1439
    %v2532 = vpack.c.b16 %v1452, %v1440
    %v2533 = vpack.c.b16 %v1453, %v1441
    %v2534 = vpack.c.b16 %v1454, %v1442
    %v2535 = vpack.c.b16 %v1455, %v1443
    %v2536 = vpack.c.b16 %v1456, %v1444
    %v2537 = vpack.c.b16 %v1457, %v1445
    %v2538 = vpack.c.b16 %v1458, %v1446
    %v2539 = vpack.c.b16 %v1471, %v1459
    %v2540 = vpack.c.b16 %v1472, %v1460
    %v2541 = vpack.c.b16 %v1473, %v1461
    %v2542 = vpack.c.b16 %v1474, %v1462
    %v2543 = vpack.c.b16 %v1475, %v1463
    %v2544 = vpack.c.b16 %v1476, %v1464
    %v2545 = vpack.c.b16 %v1477, %v1465
    %v2546 = vpack.c.b16 %v1478, %v1466
    %v2547 = vpack.c.b16 %v1479, %v1467
    %v2548 = vpack.c.b16 %v1480, %v1468
    %v2549 = vpack.c.b16 %v1481, %v1469
    %v2550 = vpack.c.b16 %v1482, %v1470
    %v2551 = vpack.c.b16 %v1495, %v1483
    %v2552 = vpack.c.b16 %v1496, %v1484
    %v2553 = vpack.c.b16 %v1497, %v1485
    %v2554 = vpack.c.b16 %v1498, %v1486
    %v2555 = vpack.c.b16 %v1499, %v1487
    %v2556 = vpack.c.b16 %v1500, %v1488
    %v2557 = vpack.c.b16 %v1501, %v1489
    %v2558 = vpack.c.b16 %v1502, %v1490
    %v2559 = vpack.c.b16 %v1503, %v1491
    %v2560 = vpack.c.b16 %v1504, %v1492
    %v2561 = vpack.c.b16 %v1505, %v1493
    %v2562 = vpack.c.b16 %v1506, %v1494
    %v2563 = vpack.c.b16 %v1519, %v1507
    %v2564 = vpack.c.b16 %v1520, %v1508
    %v2565 = vpack.c.b16 %v1521, %v1509
    %v2566 = vpack.c.b16 %v1522, %v1510
    %v2567 = vpack.c.b16 %v1523, %v1511
    %v2568 = vpack.c.b16 %v1524, %v1512
    %v2569 = vpack.c.b16 %v1525, %v1513
    %v2570 = vpack.c.b16 %v1526, %v1514
    %v2571 = vpack.c.b16 %v1527, %v1515
    %v2572 = vpack.c.b16 %v1528, %v1516
    %v2573 = vpack.c.b16 %v1529, %v1517
    %v2574 = vpack.c.b16 %v1530, %v1518
    %v2575 = vpack.c.b16 %v1543, %v1531
    %v2576 = vpack.c.b16 %v1544, %v1532
    %v2577 = vpack.c.b16 %v1545, %v1533
    %v2578 = vpack.c.b16 %v1546, %v1534
    %v2579 = vpack.c.b16 %v1547, %v1535
    %v2580 = vpack.c.b16 %v1548, %v1536
    %v2581 = vpack.c.b16 %v1549, %v1537
    %v2582 = vpack.c.b16 %v1550, %v1538
    %v2583 = vpack.c.b16 %v1551, %v1539
    %v2584 = vpack.c.b16 %v1552, %v1540
    %v2585 = vpack.c.b16 %v1553, %v1541
    %v2586 = vpack.c.b16 %v1554, %v1542
    %v2587 = vpack.c.b16 %v1567, %v1555
    %v2588 = vpack.c.b16 %v1568, %v1556
    %v2589 = vpack.c.b16 %v1569, %v1557
    %v2590 = vpack.c.b16 %v1570, %v1558
    %v2591 = vpack.c.b16 %v1571, %v1559
    %v2592 = vpack.c.b16 %v1572, %v1560
    %v2593 = vpack.c.b16 %v1573, %v1561
    %v2594 = vpack.c.b16 %v1574, %v1562
    %v2595 = vpack.c.b16 %v1575, %v1563
    %v2596 = vpack.c.b16 %v1576, %v1564
    %v2597 = vpack.c.b16 %v1577, %v1565
    %v2598 = vpack.c.b16 %v1578, %v1566
    %v2599 = vpack.c.b16 %v1591, %v1579
    %v2600 = vpack.c.b16 %v1592, %v1580
    %v2601 = vpack.c.b16 %v1593, %v1581
    %v2602 = vpack.c.b16 %v1594, %v1582
    %v2603 = vpack.c.b16 %v1595, %v1583
    %v2604 = vpack.c.b16 %v1596, %v1584
    %v2605 = vpack.c.b16 %v1597, %v1585
    %v2606 = vpack.c.b16 %v1598, %v1586
    %v2607 = vpack.c.b16 %v1599, %v1587
    %v2608 = vpack.c.b16 %v1600, %v1588
    %v2609 = vpack.c.b16 %v1601, %v1589
    %v2610 = vpack.c.b16 %v1602, %v1590
    %v2611 = vpack.c.b16 %v1615, %v1603
    %v2612 = vpack.c.b16 %v1616, %v1604
    %v2613 = vpack.c.b16 %v1617, %v1605
    %v2614 = vpack.c.b16 %v1618, %v1606
    %v2615 = vpack.c.b16 %v1619, %v1607
    %v2616 = vpack.c.b16 %v1620, %v1608
    %v2617 = vpack.c.b16 %v1621, %v1609
    %v2618 = vpack.c.b16 %v1622, %v1610
    %v2619 = vpack.c.b16 %v1623, %v1611
    %v2620 = vpack.c.b16 %v1624, %v1612
    %v2621 = vpack.c.b16 %v1625, %v1613
    %v2622 = vpack.c.b16 %v1626, %v1614
    %v2623 = vpack.c.b16 %v1639, %v1627
    %v2624 = vpack.c.b16 %v1640, %v1628
    %v2625 = vpack.c.b16 %v1641, %v1629
    %v2626 = vpack.c.b16 %v1642, %v1630
    %v2627 = vpack.c.b16 %v1643, %v1631
    %v2628 = vpack.c.b16 %v1644, %v1632
    %v2629 = vpack.c.b16 %v1645, %v1633
    %v2630 = vpack.c.b16 %v1646, %v1634
    %v2631 = vpack.c.b16 %v1647, %v1635
    %v2632 = vpack.c.b16 %v1648, %v1636
    %v2633 = vpack.c.b16 %v1649, %v1637
    %v2634 = vpack.c.b16 %v1650, %v1638
    %v2635 = vpack.c.b16 %v1663, %v1651
    %v2636 = vpack.c.b16 %v1664, %v1652
    %v2637 = vpack.c.b16 %v1665, %v1653
    %v2638 = vpack.c.b16 %v1666, %v1654
    %v2639 = vpack.c.b16 %v1667, %v1655
    %v2640 = vpack.c.b16 %v1668, %v1656
    %v2641 = vpack.c.b16 %v1669, %v1657
    %v2642 = vpack.c.b16 %v1670, %v1658
    %v2643 = vpack.c.b16 %v1671, %v1659
    %v2644 = vpack.c.b16 %v1672, %v1660
    %v2645 = vpack.c.b16 %v1673, %v1661
    %v2646 = vpack.c.b16 %v1674, %v1662
    %v2647 = vpack.c.b16 %v1687, %v1675
    %v2648 = vpack.c.b16 %v1688, %v1676
    %v2649 = vpack.c.b16 %v1689, %v1677
    %v2650 = vpack.c.b16 %v1690, %v1678
    %v2651 = vpack.c.b16 %v1691, %v1679
    %v2652 = vpack.c.b16 %v1692, %v1680
    %v2653 = vpack.c.b16 %v1693, %v1681
    %v2654 = vpack.c.b16 %v1694, %v1682
    %v2655 = vpack.c.b16 %v1695, %v1683
    %v2656 = vpack.c.b16 %v1696, %v1684
    %v2657 = vpack.c.b16 %v1697, %v1685
    %v2658 = vpack.c.b16 %v1698, %v1686
    %v2659 = vpack.c.b16 %v1711, %v1699
    %v2660 = vpack.c.b16 %v1712, %v1700
    %v2661 = vpack.c.b16 %v1713, %v1701
    %v2662 = vpack.c.b16 %v1714, %v1702
    %v2663 = vpack.c.b16 %v1715, %v1703
    %v2664 = vpack.c.b16 %v1716, %v1704
    %v2665 = vpack.c.b16 %v1717, %v1705
    %v2666 = vpack.c.b16 %v1718, %v1706
    %v2667 = vpack.c.b16 %v1719, %v1707
    %v2668 = vpack.c.b16 %v1720, %v1708
    %v2669 = vpack.c.b16 %v1721, %v1709
    %v2670 = vpack.c.b16 %v1722, %v1710
    %v2671 = vpack.c.b16 %v1735, %v1723
    %v2672 = vpack.c.b16 %v1736, %v1724
    %v2673 = vpack.c.b16 %v1737, %v1725
    %v2674 = vpack.c.b16 %v1738, %v1726
    %v2675 = vpack.c.b16 %v1739, %v1727
    %v2676 = vpack.c.b16 %v1740, %v1728
    %v2677 = vpack.c.b16 %v1741, %v1729
    %v2678 = vpack.c.b16 %v1742, %v1730
    %v2679 = vpack.c.b16 %v1743, %v1731
    %v2680 = vpack.c.b16 %v1744, %v1732
    %v2681 = vpack.c.b16 %v1745, %v1733
    %v2682 = vpack.c.b16 %v1746, %v1734
    %v2683 = vpack.c.b16 %v1759, %v1747
    %v2684 = vpack.c.b16 %v1760, %v1748
    %v2685 = vpack.c.b16 %v1761, %v1749
    %v2686 = vpack.c.b16 %v1762, %v1750
    %v2687 = vpack.c.b16 %v1763, %v1751
    %v2688 = vpack.c.b16 %v1764, %v1752
    %v2689 = vpack.c.b16 %v1765, %v1753
    %v2690 = vpack.c.b16 %v1766, %v1754
    %v2691 = vpack.c.b16 %v1767, %v1755
    %v2692 = vpack.c.b16 %v1768, %v1756
    %v2693 = vpack.c.b16 %v1769, %v1757
    %v2694 = vpack.c.b16 %v1770, %v1758
    %v2695 = vpack.c.b16 %v1783, %v1771
    %v2696 = vpack.c.b16 %v1784, %v1772
    %v2697 = vpack.c.b16 %v1785, %v1773
    %v2698 = vpack.c.b16 %v1786, %v1774
    %v2699 = vpack.c.b16 %v1787, %v1775
    %v2700 = vpack.c.b16 %v1788, %v1776
    %v2701 = vpack.c.b16 %v1789, %v1777
    %v2702 = vpack.c.b16 %v1790, %v1778
    %v2703 = vpack.c.b16 %v1791, %v1779
    %v2704 = vpack.c.b16 %v1792, %v1780
    %v2705 = vpack.c.b16 %v1793, %v1781
    %v2706 = vpack.c.b16 %v1794, %v1782
    %v2707 = vpack.c.b16 %v1807, %v1795
    %v2708 = vpack.c.b16 %v1808, %v1796
    %v2709 = vpack.c.b16 %v1809, %v1797
    %v2710 = vpack.c.b16 %v1810, %v1798
    %v2711 = vpack.c.b16 %v1811, %v1799
    %v2712 = vpack.c.b16 %v1812, %v1800
    %v2713 = vpack.c.b16 %v1813, %v1801
    %v2714 = vpack.c.b16 %v1814, %v1802
    %v2715 = vpack.c.b16 %v1815, %v1803
    %v2716 = vpack.c.b16 %v1816, %v1804
    %v2717 = vpack.c.b16 %v1817, %v1805
    %v2718 = vpack.c.b16 %v1818, %v1806
    %v2719 = vpack.c.b16 %v1831, %v1819
    %v2720 = vpack.c.b16 %v1832, %v1820
    %v2721 = vpack.c.b16 %v1833, %v1821
    %v2722 = vpack.c.b16 %v1834, %v1822
    %v2723 = vpack.c.b16 %v1835, %v1823
    %v2724 = vpack.c.b16 %v1836, %v1824
    %v2725 = vpack.c.b16 %v1837, %v1825
    %v2726 = vpack.c.b16 %v1838, %v1826
    %v2727 = vpack.c.b16 %v1839, %v1827
    %v2728 = vpack.c.b16 %v1840, %v1828
    %v2729 = vpack.c.b16 %v1841, %v1829
    %v2730 = vpack.c.b16 %v1842, %v1830
    %v2731 = vpack.c.b16 %v1855, %v1843
    %v2732 = vpack.c.b16 %v1856, %v1844
    %v2733 = vpack.c.b16 %v1857, %v1845
    %v2734 = vpack.c.b16 %v1858, %v1846
    %v2735 = vpack.c.b16 %v1859, %v1847
    %v2736 = vpack.c.b16 %v1860, %v1848
    %v2737 = vpack.c.b16 %v1861, %v1849
    %v2738 = vpack.c.b16 %v1862, %v1850
    %v2739 = vpack.c.b16 %v1863, %v1851
    %v2740 = vpack.c.b16 %v1864, %v1852
    %v2741 = vpack.c.b16 %v1865, %v1853
    %v2742 = vpack.c.b16 %v1866, %v1854
    %v2743 = vpack.c.b16 %v1879, %v1867
    %v2744 = vpack.c.b16 %v1880, %v1868
    %v2745 = vpack.c.b16 %v1881, %v1869
    %v2746 = vpack.c.b16 %v1882, %v1870
    %v2747 = vpack.c.b16 %v1883, %v1871
    %v2748 = vpack.c.b16 %v1884, %v1872
    %v2749 = vpack.c.b16 %v1885, %v1873
    %v2750 = vpack.c.b16 %v1886, %v1874
    %v2751 = vpack.c.b16 %v1887, %v1875
    %v2752 = vpack.c.b16 %v1888, %v1876
    %v2753 = vpack.c.b16 %v1889, %v1877
    %v2754 = vpack.c.b16 %v1890, %v1878
    %v2755 = vpack.c.b16 %v1903, %v1891
    %v2756 = vpack.c.b16 %v1904, %v1892
    %v2757 = vpack.c.b16 %v1905, %v1893
    %v2758 = vpack.c.b16 %v1906, %v1894
    %v2759 = vpack.c.b16 %v1907, %v1895
    %v2760 = vpack.c.b16 %v1908, %v1896
    %v2761 = vpack.c.b16 %v1909, %v1897
    %v2762 = vpack.c.b16 %v1910, %v1898
    %v2763 = vpack.c.b16 %v1911, %v1899
    %v2764 = vpack.c.b16 %v1912, %v1900
    %v2765 = vpack.c.b16 %v1913, %v1901
    %v2766 = vpack.c.b16 %v1914, %v1902
    %v2767 = vpack.c.b16 %v1927, %v1915
    %v2768 = vpack.c.b16 %v1928, %v1916
    %v2769 = vpack.c.b16 %v1929, %v1917
    %v2770 = vpack.c.b16 %v1930, %v1918
    %v2771 = vpack.c.b16 %v1931, %v1919
    %v2772 = vpack.c.b16 %v1932, %v1920
    %v2773 = vpack.c.b16 %v1933, %v1921
    %v2774 = vpack.c.b16 %v1934, %v1922
    %v2775 = vpack.c.b16 %v1935, %v1923
    %v2776 = vpack.c.b16 %v1936, %v1924
    %v2777 = vpack.c.b16 %v1937, %v1925
    %v2778 = vpack.c.b16 %v1938, %v1926
    %v2779 = vpack.c.b16 %v1951, %v1939
    %v2780 = vpack.c.b16 %v1952, %v1940
    %v2781 = vpack.c.b16 %v1953, %v1941
    %v2782 = vpack.c.b16 %v1954, %v1942
    %v2783 = vpack.c.b16 %v1955, %v1943
    %v2784 = vpack.c.b16 %v1956, %v1944
    %v2785 = vpack.c.b16 %v1957, %v1945
    %v2786 = vpack.c.b16 %v1958, %v1946
    %v2787 = vpack.c.b16 %v1959, %v1947
    %v2788 = vpack.c.b16 %v1960, %v1948
    %v2789 = vpack.c.b16 %v1961, %v1949
    %v2790 = vpack.c.b16 %v1962, %v1950
    %v2791 = vpack.c.b16 %v1975, %v1963
    %v2792 = vpack.c.b16 %v1976, %v1964
    %v2793 = vpack.c.b16 %v1977, %v1965
    %v2794 = vpack.c.b16 %v1978, %v1966
    %v2795 = vpack.c.b16 %v1979, %v1967
    %v2796 = vpack.c.b16 %v1980, %v1968
    %v2797 = vpack.c.b16 %v1981, %v1969
    %v2798 = vpack.c.b16 %v1982, %v1970
    %v2799 = vpack.c.b16 %v1983, %v1971
    %v2800 = vpack.c.b16 %v1984, %v1972
    %v2801 = vpack.c.b16 %v1985, %v1973
    %v2802 = vpack.c.b16 %v1986, %v1974
    %v2803 = vpack.c.b16 %v1999, %v1987
    %v2804 = vpack.c.b16 %v2000, %v1988
    %v2805 = vpack.c.b16 %v2001, %v1989
    %v2806 = vpack.c.b16 %v2002, %v1990
    %v2807 = vpack.c.b16 %v2003, %v1991
    %v2808 = vpack.c.b16 %v2004, %v1992
    %v2809 = vpack.c.b16 %v2005, %v1993
    %v2810 = vpack.c.b16 %v2006, %v1994
    %v2811 = vpack.c.b16 %v2007, %v1995
    %v2812 = vpack.c.b16 %v2008, %v1996
    %v2813 = vpack.c.b16 %v2009, %v1997
    %v2814 = vpack.c.b16 %v2010, %v1998
    %v2815 = vpack.c.b16 %v2023, %v2011
    %v2816 = vpack.c.b16 %v2024, %v2012
    %v2817 = vpack.c.b16 %v2025, %v2013
    %v2818 = vpack.c.b16 %v2026, %v2014
    %v2819 = vpack.c.b16 %v2027, %v2015
    %v2820 = vpack.c.b16 %v2028, %v2016
    %v2821 = vpack.c.b16 %v2029, %v2017
    %v2822 = vpack.c.b16 %v2030, %v2018
    %v2823 = vpack.c.b16 %v2031, %v2019
    %v2824 = vpack.c.b16 %v2032, %v2020
    %v2825 = vpack.c.b16 %v2033, %v2021
    %v2826 = vpack.c.b16 %v2034, %v2022
    %v2827 = vpack.c.b16 %v2047, %v2035
    %v2828 = vpack.c.b16 %v2048, %v2036
    %v2829 = vpack.c.b16 %v2049, %v2037
    %v2830 = vpack.c.b16 %v2050, %v2038
    %v2831 = vpack.c.b16 %v2051, %v2039
    %v2832 = vpack.c.b16 %v2052, %v2040
    %v2833 = vpack.c.b16 %v2053, %v2041
    %v2834 = vpack.c.b16 %v2054, %v2042
    %v2835 = vpack.c.b16 %v2055, %v2043
    %v2836 = vpack.c.b16 %v2056, %v2044
    %v2837 = vpack.c.b16 %v2057, %v2045
    %v2838 = vpack.c.b16 %v2058, %v2046
    %v2839 = vpack.c.b16 %v2071, %v2059
    %v2840 = vpack.c.b16 %v2072, %v2060
    %v2841 = vpack.c.b16 %v2073, %v2061
    %v2842 = vpack.c.b16 %v2074, %v2062
    %v2843 = vpack.c.b16 %v2075, %v2063
    %v2844 = vpack.c.b16 %v2076, %v2064
    %v2845 = vpack.c.b16 %v2077, %v2065
    %v2846 = vpack.c.b16 %v2078, %v2066
    %v2847 = vpack.c.b16 %v2079, %v2067
    %v2848 = vpack.c.b16 %v2080, %v2068
    %v2849 = vpack.c.b16 %v2081, %v2069
    %v2850 = vpack.c.b16 %v2082, %v2070
    %v2851 = vpack.c.b16 %v2095, %v2083
    %v2852 = vpack.c.b16 %v2096, %v2084
    %v2853 = vpack.c.b16 %v2097, %v2085
    %v2854 = vpack.c.b16 %v2098, %v2086
    %v2855 = vpack.c.b16 %v2099, %v2087
    %v2856 = vpack.c.b16 %v2100, %v2088
    %v2857 = vpack.c.b16 %v2101, %v2089
    %v2858 = vpack.c.b16 %v2102, %v2090
    %v2859 = vpack.c.b16 %v2103, %v2091
    %v2860 = vpack.c.b16 %v2104, %v2092
    %v2861 = vpack.c.b16 %v2105, %v2093
    %v2862 = vpack.c.b16 %v2106, %v2094
    %v2863 = vpack.c.b16 %v2119, %v2107
    %v2864 = vpack.c.b16 %v2120, %v2108
    %v2865 = vpack.c.b16 %v2121, %v2109
    %v2866 = vpack.c.b16 %v2122, %v2110
    %v2867 = vpack.c.b16 %v2123, %v2111
    %v2868 = vpack.c.b16 %v2124, %v2112
    %v2869 = vpack.c.b16 %v2125, %v2113
    %v2870 = vpack.c.b16 %v2126, %v2114
    %v2871 = vpack.c.b16 %v2127, %v2115
    %v2872 = vpack.c.b16 %v2128, %v2116
    %v2873 = vpack.c.b16 %v2129, %v2117
    %v2874 = vpack.c.b16 %v2130, %v2118
    %v2875 = vpack.c.b16 %v2143, %v2131
    %v2876 = vpack.c.b16 %v2144, %v2132
    %v2877 = vpack.c.b16 %v2145, %v2133
    %v2878 = vpack.c.b16 %v2146, %v2134
    %v2879 = vpack.c.b16 %v2147, %v2135
    %v2880 = vpack.c.b16 %v2148, %v2136
    %v2881 = vpack.c.b16 %v2149, %v2137
    %v2882 = vpack.c.b16 %v2150, %v2138
    %v2883 = vpack.c.b16 %v2151, %v2139
    %v2884 = vpack.c.b16 %v2152, %v2140
    %v2885 = vpack.c.b16 %v2153, %v2141
    %v2886 = vpack.c.b16 %v2154, %v2142
    %v2887 = vpack.c.b16 %v2167, %v2155
    %v2888 = vpack.c.b16 %v2168, %v2156
    %v2889 = vpack.c.b16 %v2169, %v2157
    %v2890 = vpack.c.b16 %v2170, %v2158
    %v2891 = vpack.c.b16 %v2171, %v2159
    %v2892 = vpack.c.b16 %v2172, %v2160
    %v2893 = vpack.c.b16 %v2173, %v2161
    %v2894 = vpack.c.b16 %v2174, %v2162
    %v2895 = vpack.c.b16 %v2175, %v2163
    %v2896 = vpack.c.b16 %v2176, %v2164
    %v2897 = vpack.c.b16 %v2177, %v2165
    %v2898 = vpack.c.b16 %v2178, %v2166
    %v2899 = vpack.c.b16 %v2191, %v2179
    %v2900 = vpack.c.b16 %v2192, %v2180
    %v2901 = vpack.c.b16 %v2193, %v2181
    %v2902 = vpack.c.b16 %v2194, %v2182
    %v2903 = vpack.c.b16 %v2195, %v2183
    %v2904 = vpack.c.b16 %v2196, %v2184
    %v2905 = vpack.c.b16 %v2197, %v2185
    %v2906 = vpack.c.b16 %v2198, %v2186
    %v2907 = vpack.c.b16 %v2199, %v2187
    %v2908 = vpack.c.b16 %v2200, %v2188
    %v2909 = vpack.c.b16 %v2201, %v2189
    %v2910 = vpack.c.b16 %v2202, %v2190
    %v2911 = vpack.c.b16 %v2215, %v2203
    %v2912 = vpack.c.b16 %v2216, %v2204
    %v2913 = vpack.c.b16 %v2217, %v2205
    %v2914 = vpack.c.b16 %v2218, %v2206
    %v2915 = vpack.c.b16 %v2219, %v2207
    %v2916 = vpack.c.b16 %v2220, %v2208
    %v2917 = vpack.c.b16 %v2221, %v2209
    %v2918 = vpack.c.b16 %v2222, %v2210
    %v2919 = vpack.c.b16 %v2223, %v2211
    %v2920 = vpack.c.b16 %v2224, %v2212
    %v2921 = vpack.c.b16 %v2225, %v2213
    %v2922 = vpack.c.b16 %v2226, %v2214
    %v2923 = vpack.c.b16 %v2239, %v2227
    %v2924 = vpack.c.b16 %v2240, %v2228
    %v2925 = vpack.c.b16 %v2241, %v2229
    %v2926 = vpack.c.b16 %v2242, %v2230
    %v2927 = vpack.c.b16 %v2243, %v2231
    %v2928 = vpack.c.b16 %v2244, %v2232
    %v2929 = vpack.c.b16 %v2245, %v2233
    %v2930 = vpack.c.b16 %v2246, %v2234
    %v2931 = vpack.c.b16 %v2247, %v2235
    %v2932 = vpack.c.b16 %v2248, %v2236
    %v2933 = vpack.c.b16 %v2249, %v2237
    %v2934 = vpack.c.b16 %v2250, %v2238
    %v2935 = vpack.c.b16 %v2263, %v2251
    %v2936 = vpack.c.b16 %v2264, %v2252
    %v2937 = vpack.c.b16 %v2265, %v2253
    %v2938 = vpack.c.b16 %v2266, %v2254
    %v2939 = vpack.c.b16 %v2267, %v2255
    %v2940 = vpack.c.b16 %v2268, %v2256
    %v2941 = vpack.c.b16 %v2269, %v2257
    %v2942 = vpack.c.b16 %v2270, %v2258
    %v2943 = vpack.c.b16 %v2271, %v2259
    %v2944 = vpack.c.b16 %v2272, %v2260
    %v2945 = vpack.c.b16 %v2273, %v2261
    %v2946 = vpack.c.b16 %v2274, %v2262
    %v2947 = vpack.c.b16 %v2287, %v2275
    %v2948 = vpack.c.b16 %v2288, %v2276
    %v2949 = vpack.c.b16 %v2289, %v2277
    %v2950 = vpack.c.b16 %v2290, %v2278
    %v2951 = vpack.c.b16 %v2291, %v2279
    %v2952 = vpack.c.b16 %v2292, %v2280
    %v2953 = vpack.c.b16 %v2293, %v2281
    %v2954 = vpack.c.b16 %v2294, %v2282
    %v2955 = vpack.c.b16 %v2295, %v2283
    %v2956 = vpack.c.b16 %v2296, %v2284
    %v2957 = vpack.c.b16 %v2297, %v2285
    %v2958 = vpack.c.b16 %v2298, %v2286
    %v2959 = vpack.c.b16 %v2311, %v2299
    %v2960 = vpack.c.b16 %v2312, %v2300
    %v2961 = vpack.c.b16 %v2313, %v2301
    %v2962 = vpack.c.b16 %v2314, %v2302
    %v2963 = vpack.c.b16 %v2315, %v2303
    %v2964 = vpack.c.b16 %v2316, %v2304
    %v2965 = vpack.c.b16 %v2317, %v2305
    %v2966 = vpack.c.b16 %v2318, %v2306
    %v2967 = vpack.c.b16 %v2319, %v2307
    %v2968 = vpack.c.b16 %v2320, %v2308
    %v2969 = vpack.c.b16 %v2321, %v2309
    %v2970 = vpack.c.b16 %v2322, %v2310
    %v2971 = vpack.c.b16 %v2335, %v2323
    %v2972 = vpack.c.b16 %v2336, %v2324
    %v2973 = vpack.c.b16 %v2337, %v2325
    %v2974 = vpack.c.b16 %v2338, %v2326
    %v2975 = vpack.c.b16 %v2339, %v2327
    %v2976 = vpack.c.b16 %v2340, %v2328
    %v2977 = vpack.c.b16 %v2341, %v2329
    %v2978 = vpack.c.b16 %v2342, %v2330
    %v2979 = vpack.c.b16 %v2343, %v2331
    %v2980 = vpack.c.b16 %v2344, %v2332
    %v2981 = vpack.c.b16 %v2345, %v2333
    %v2982 = vpack.c.b16 %v2346, %v2334
    %v2983 = vpack.c.b16 %v2359, %v2347
    %v2984 = vpack.c.b16 %v2360, %v2348
    %v2985 = vpack.c.b16 %v2361, %v2349
    %v2986 = vpack.c.b16 %v2362, %v2350
    %v2987 = vpack.c.b16 %v2363, %v2351
    %v2988 = vpack.c.b16 %v2364, %v2352
    %v2989 = vpack.c.b16 %v2365, %v2353
    %v2990 = vpack.c.b16 %v2366, %v2354
    %v2991 = vpack.c.b16 %v2367, %v2355
    %v2992 = vpack.c.b16 %v2368, %v2356
    %v2993 = vpack.c.b16 %v2369, %v2357
    %v2994 = vpack.c.b16 %v2370, %v2358
    %v2995 = vpack.c.b16 %v2383, %v2371
    %v2996 = vpack.c.b16 %v2384, %v2372
    %v2997 = vpack.c.b16 %v2385, %v2373
    %v2998 = vpack.c.b16 %v2386, %v2374
    %v2999 = vpack.c.b16 %v2387, %v2375
    %v3000 = vpack.c.b16 %v2388, %v2376
    %v3001 = vpack.c.b16 %v2389, %v2377
    %v3002 = vpack.c.b16 %v2390, %v2378
    %v3003 = vpack.c.b16 %v2391, %v2379
    %v3004 = vpack.c.b16 %v2392, %v2380
    %v3005 = vpack.c.b16 %v2393, %v2381
    %v3006 = vpack.c.b16 %v2394, %v2382
    %v3007 = vpack.c.b16 %v2407, %v2395
    %v3008 = vpack.c.b16 %v2408, %v2396
    %v3009 = vpack.c.b16 %v2409, %v2397
    %v3010 = vpack.c.b16 %v2410, %v2398
    %v3011 = vpack.c.b16 %v2411, %v2399
    %v3012 = vpack.c.b16 %v2412, %v2400
    %v3013 = vpack.c.b16 %v2413, %v2401
    %v3014 = vpack.c.b16 %v2414, %v2402
    %v3015 = vpack.c.b16 %v2415, %v2403
    %v3016 = vpack.c.b16 %v2416, %v2404
    %v3017 = vpack.c.b16 %v2417, %v2405
    %v3018 = vpack.c.b16 %v2418, %v2406
    %v3019 = vpack.c.b16 %v2431, %v2419
    %v3020 = vpack.c.b16 %v2432, %v2420
    %v3021 = vpack.c.b16 %v2433, %v2421
    %v3022 = vpack.c.b16 %v2434, %v2422
    %v3023 = vpack.c.b16 %v2435, %v2423
    %v3024 = vpack.c.b16 %v2436, %v2424
    %v3025 = vpack.c.b16 %v2437, %v2425
    %v3026 = vpack.c.b16 %v2438, %v2426
    %v3027 = vpack.c.b16 %v2439, %v2427
    %v3028 = vpack.c.b16 %v2440, %v2428
    %v3029 = vpack.c.b16 %v2441, %v2429
    %v3030 = vpack.c.b16 %v2442, %v2430
    %v3031 = vpack.c.b16 %v2455, %v2443
    %v3032 = vpack.c.b16 %v2456, %v2444
    %v3033 = vpack.c.b16 %v2457, %v2445
    %v3034 = vpack.c.b16 %v2458, %v2446
    %v3035 = vpack.c.b16 %v2459, %v2447
    %v3036 = vpack.c.b16 %v2460, %v2448
    %v3037 = vpack.c.b16 %v2461, %v2449
    %v3038 = vpack.c.b16 %v2462, %v2450
    %v3039 = vpack.c.b16 %v2463, %v2451
    %v3040 = vpack.c.b16 %v2464, %v2452
    %v3041 = vpack.c.b16 %v2465, %v2453
    %v3042 = vpack.c.b16 %v2466, %v2454
    %3619 = vmatprep.subr.bf16.mxu0 %v2468
    %3620 = vmatpush1.bf16.msra.mxu0 %v2467
    %3621 = vmatprep.subr.bf16.mxu0 %v2480
    %3622 = vmatpush1.bf16.msra.mxu0 %v2479
    %3623 = vmatprep.subr.bf16.mxu0 %v2492
    %3624 = vmatpush1.bf16.msra.mxu0 %v2491
    %3625 = vmatprep.subr.bf16.mxu0 %v2504
    %3626 = vmatpush1.bf16.msra.mxu0 %v2503
    %3627 = vmatprep.subr.bf16.mxu0 %v2516
    %3628 = vmatpush1.bf16.msra.mxu0 %v2515
    %3629 = vmatprep.subr.bf16.mxu0 %v2528
    %3630 = vmatpush1.bf16.msra.mxu0 %v2527
    %3631 = vmatprep.subr.bf16.mxu0 %v2540
    %3632 = vmatpush1.bf16.msra.mxu0 %v2539
    %3633 = vmatprep.subr.bf16.mxu0 %v2552
    %3634 = vmatpush1.bf16.msra.mxu0 %v2551
    %3635 = vmatprep.subr.bf16.mxu0 %v2564
    %3636 = vmatpush1.bf16.msra.mxu0 %v2563
    %3637 = vmatprep.subr.bf16.mxu0 %v2576
    %3638 = vmatpush1.bf16.msra.mxu0 %v2575
    %3639 = vmatprep.subr.bf16.mxu0 %v2588
    %3640 = vmatpush1.bf16.msra.mxu0 %v2587
    %3641 = vmatprep.subr.bf16.mxu0 %v2600
    %3642 = vmatpush1.bf16.msra.mxu0 %v2599
    %3643 = vmatprep.subr.bf16.mxu0 %v2612
    %3644 = vmatpush1.bf16.msra.mxu0 %v2611
    %3645 = vmatprep.subr.bf16.mxu0 %v2624
    %3646 = vmatpush1.bf16.msra.mxu0 %v2623
    %3647 = vmatprep.subr.bf16.mxu0 %v2636
    %3648 = vmatpush1.bf16.msra.mxu0 %v2635
    %3649 = vmatprep.subr.bf16.mxu0 %v2648
    %3650 = vmatpush1.bf16.msra.mxu0 %v2647
    %3651 = vmatprep.mubr.bf16.mxu0 %v728
    %3652 = vmatmul.mubr.bf16.gmra.mrb[0].mxu0 %v727
    %v3653 = vpop.f32.mrb[0].mxu0
    %v3654 = vadd.f32 0.0, %v3653
    %v3655 = vpop.f32.mrb[0].mxu0
    %v3656 = vadd.f32 0.0, %v3655
    %v3657 = vpop.f32.mrb[0].mxu0
    %v3658 = vpop.f32.mrb[0].mxu0
    %3659 = vdwg.mxu0
    %3660 = vmatprep.subr.bf16.mxu0 %v2660
    %3661 = vmatpush1.bf16.msra.mxu0 %v2659
    %3662 = vmatprep.subr.bf16.mxu0 %v2672
    %3663 = vmatpush1.bf16.msra.mxu0 %v2671
    %3664 = vmatprep.subr.bf16.mxu0 %v2684
    %3665 = vmatpush1.bf16.msra.mxu0 %v2683
    %3666 = vmatprep.subr.bf16.mxu0 %v2696
    %3667 = vmatpush1.bf16.msra.mxu0 %v2695
    %3668 = vmatprep.subr.bf16.mxu0 %v2708
    %3669 = vmatpush1.bf16.msra.mxu0 %v2707
    %3670 = vmatprep.subr.bf16.mxu0 %v2720
    %3671 = vmatpush1.bf16.msra.mxu0 %v2719
    %3672 = vmatprep.subr.bf16.mxu0 %v2732
    %3673 = vmatpush1.bf16.msra.mxu0 %v2731
    %3674 = vmatprep.subr.bf16.mxu0 %v2744
    %3675 = vmatpush1.bf16.msra.mxu0 %v2743
    %3676 = vmatprep.subr.bf16.mxu0 %v2756
    %3677 = vmatpush1.bf16.msra.mxu0 %v2755
    %3678 = vmatprep.subr.bf16.mxu0 %v2768
    %3679 = vmatpush1.bf16.msra.mxu0 %v2767
    %3680 = vmatprep.subr.bf16.mxu0 %v2780
    %3681 = vmatpush1.bf16.msra.mxu0 %v2779
    %3682 = vmatprep.subr.bf16.mxu0 %v2792
    %3683 = vmatpush1.bf16.msra.mxu0 %v2791
    %3684 = vmatprep.subr.bf16.mxu0 %v2804
    %3685 = vmatpush1.bf16.msra.mxu0 %v2803
    %3686 = vmatprep.subr.bf16.mxu0 %v2816
    %3687 = vmatpush1.bf16.msra.mxu0 %v2815
    %3688 = vmatprep.subr.bf16.mxu0 %v2828
    %3689 = vmatpush1.bf16.msra.mxu0 %v2827
    %3690 = vmatprep.subr.bf16.mxu0 %v2840
    %3691 = vmatpush1.bf16.msra.mxu0 %v2839
    %3692 = vmatprep.mubr.bf16.mxu0 %v730
    %3693 = vmatmul.mubr.bf16.gmra.mrb[0].mxu0 %v729
    %v3694 = vpop.f32.mrb[0].mxu0
    %v3695 = vadd.f32 %v3654, %v3694
    %v3696 = vpop.f32.mrb[0].mxu0
    %v3697 = vadd.f32 %v3656, %v3696
    %v3698 = vpop.f32.mrb[0].mxu0
    %v3699 = vpop.f32.mrb[0].mxu0
    %3700 = vdwg.mxu0
    %3701 = vmatprep.subr.bf16.mxu0 %v2852
    %3702 = vmatpush1.bf16.msra.mxu0 %v2851
    %3703 = vmatprep.subr.bf16.mxu0 %v2864
    %3704 = vmatpush1.bf16.msra.mxu0 %v2863
    %3705 = vmatprep.subr.bf16.mxu0 %v2876
    %3706 = vmatpush1.bf16.msra.mxu0 %v2875
    %3707 = vmatprep.subr.bf16.mxu0 %v2888
    %3708 = vmatpush1.bf16.msra.mxu0 %v2887
    %3709 = vmatprep.subr.bf16.mxu0 %v2900
    %3710 = vmatpush1.bf16.msra.mxu0 %v2899
    %3711 = vmatprep.subr.bf16.mxu0 %v2912
    %3712 = vmatpush1.bf16.msra.mxu0 %v2911
    %3713 = vmatprep.subr.bf16.mxu0 %v2924
    %3714 = vmatpush1.bf16.msra.mxu0 %v2923
    %3715 = vmatprep.subr.bf16.mxu0 %v2936
    %3716 = vmatpush1.bf16.msra.mxu0 %v2935
    %3717 = vmatprep.subr.bf16.mxu0 %v2948
    %3718 = vmatpush1.bf16.msra.mxu0 %v2947
    %3719 = vmatprep.subr.bf16.mxu0 %v2960
    %3720 = vmatpush1.bf16.msra.mxu0 %v2959
    %3721 = vmatprep.subr.bf16.mxu0 %v2972
    %3722 = vmatpush1.bf16.msra.mxu0 %v2971
    %3723 = vmatprep.subr.bf16.mxu0 %v2984
    %3724 = vmatpush1.bf16.msra.mxu0 %v2983
    %3725 = vmatprep.subr.bf16.mxu0 %v2996
    %3726 = vmatpush1.bf16.msra.mxu0 %v2995
    %3727 = vmatprep.subr.bf16.mxu0 %v3008
    %3728 = vmatpush1.bf16.msra.mxu0 %v3007
    %3729 = vmatprep.subr.bf16.mxu0 %v3020
    %3730 = vmatpush1.bf16.msra.mxu0 %v3019
    %3731 = vmatprep.subr.bf16.mxu0 %v3032
    %3732 = vmatpush1.bf16.msra.mxu0 %v3031
    %3733 = vmatprep.mubr.bf16.mxu0 %v732
    %3734 = vmatmul.mubr.bf16.gmra.mrb[0].mxu0 %v731
    %v3735 = vpop.f32.mrb[0].mxu0
    %v3736 = vadd.f32 %v3695, %v3735
    %v3737 = vpop.f32.mrb[0].mxu0
    %v3738 = vadd.f32 %v3697, %v3737
    %v3739 = vpop.f32.mrb[0].mxu0
    %v3740 = vpop.f32.mrb[0].mxu0
    %3741 = vdwg.mxu0
    %3742 = vmatprep.subr.bf16.mxu0 %v2470
    %3743 = vmatpush1.bf16.msra.mxu0 %v2469
    %3744 = vmatprep.subr.bf16.mxu0 %v2482
    %3745 = vmatpush1.bf16.msra.mxu0 %v2481
    %3746 = vmatprep.subr.bf16.mxu0 %v2494
    %3747 = vmatpush1.bf16.msra.mxu0 %v2493
    %3748 = vmatprep.subr.bf16.mxu0 %v2506
    %3749 = vmatpush1.bf16.msra.mxu0 %v2505
    %3750 = vmatprep.subr.bf16.mxu0 %v2518
    %3751 = vmatpush1.bf16.msra.mxu0 %v2517
    %3752 = vmatprep.subr.bf16.mxu0 %v2530
    %3753 = vmatpush1.bf16.msra.mxu0 %v2529
    %3754 = vmatprep.subr.bf16.mxu0 %v2542
    %3755 = vmatpush1.bf16.msra.mxu0 %v2541
    %3756 = vmatprep.subr.bf16.mxu0 %v2554
    %3757 = vmatpush1.bf16.msra.mxu0 %v2553
    %3758 = vmatprep.subr.bf16.mxu0 %v2566
    %3759 = vmatpush1.bf16.msra.mxu0 %v2565
    %3760 = vmatprep.subr.bf16.mxu0 %v2578
    %3761 = vmatpush1.bf16.msra.mxu0 %v2577
    %3762 = vmatprep.subr.bf16.mxu0 %v2590
    %3763 = vmatpush1.bf16.msra.mxu0 %v2589
    %3764 = vmatprep.subr.bf16.mxu0 %v2602
    %3765 = vmatpush1.bf16.msra.mxu0 %v2601
    %3766 = vmatprep.subr.bf16.mxu0 %v2614
    %3767 = vmatpush1.bf16.msra.mxu0 %v2613
    %3768 = vmatprep.subr.bf16.mxu0 %v2626
    %3769 = vmatpush1.bf16.msra.mxu0 %v2625
    %3770 = vmatprep.subr.bf16.mxu0 %v2638
    %3771 = vmatpush1.bf16.msra.mxu0 %v2637
    %3772 = vmatprep.subr.bf16.mxu0 %v2650
    %3773 = vmatpush1.bf16.msra.mxu0 %v2649
    %3774 = vmatprep.mubr.bf16.mxu0 %v728
    %3775 = vmatmul.mubr.bf16.gmra.mrb[0].mxu0 %v727
    %v3776 = vpop.f32.mrb[0].mxu0
    %v3777 = vadd.f32 0.0, %v3776
    %v3778 = vpop.f32.mrb[0].mxu0
    %v3779 = vadd.f32 0.0, %v3778
    %v3780 = vpop.f32.mrb[0].mxu0
    %v3781 = vpop.f32.mrb[0].mxu0
    %3782 = vdwg.mxu0
    %3783 = vmatprep.subr.bf16.mxu0 %v2662
    %3784 = vmatpush1.bf16.msra.mxu0 %v2661
    %3785 = vmatprep.subr.bf16.mxu0 %v2674
    %3786 = vmatpush1.bf16.msra.mxu0 %v2673
    %3787 = vmatprep.subr.bf16.mxu0 %v2686
    %3788 = vmatpush1.bf16.msra.mxu0 %v2685
    %3789 = vmatprep.subr.bf16.mxu0 %v2698
    %3790 = vmatpush1.bf16.msra.mxu0 %v2697
    %3791 = vmatprep.subr.bf16.mxu0 %v2710
    %3792 = vmatpush1.bf16.msra.mxu0 %v2709
    %3793 = vmatprep.subr.bf16.mxu0 %v2722
    %3794 = vmatpush1.bf16.msra.mxu0 %v2721
    %3795 = vmatprep.subr.bf16.mxu0 %v2734
    %3796 = vmatpush1.bf16.msra.mxu0 %v2733
    %3797 = vmatprep.subr.bf16.mxu0 %v2746
    %3798 = vmatpush1.bf16.msra.mxu0 %v2745
    %3799 = vmatprep.subr.bf16.mxu0 %v2758
    %3800 = vmatpush1.bf16.msra.mxu0 %v2757
    %3801 = vmatprep.subr.bf16.mxu0 %v2770
    %3802 = vmatpush1.bf16.msra.mxu0 %v2769
    %3803 = vmatprep.subr.bf16.mxu0 %v2782
    %3804 = vmatpush1.bf16.msra.mxu0 %v2781
    %3805 = vmatprep.subr.bf16.mxu0 %v2794
    %3806 = vmatpush1.bf16.msra.mxu0 %v2793
    %3807 = vmatprep.subr.bf16.mxu0 %v2806
    %3808 = vmatpush1.bf16.msra.mxu0 %v2805
    %3809 = vmatprep.subr.bf16.mxu0 %v2818
    %3810 = vmatpush1.bf16.msra.mxu0 %v2817
    %3811 = vmatprep.subr.bf16.mxu0 %v2830
    %3812 = vmatpush1.bf16.msra.mxu0 %v2829
    %3813 = vmatprep.subr.bf16.mxu0 %v2842
    %3814 = vmatpush1.bf16.msra.mxu0 %v2841
    %3815 = vmatprep.mubr.bf16.mxu0 %v730
    %3816 = vmatmul.mubr.bf16.gmra.mrb[0].mxu0 %v729
    %v3817 = vpop.f32.mrb[0].mxu0
    %v3818 = vadd.f32 %v3777, %v3817
    %v3819 = vpop.f32.mrb[0].mxu0
    %v3820 = vadd.f32 %v3779, %v3819
    %v3821 = vpop.f32.mrb[0].mxu0
    %v3822 = vpop.f32.mrb[0].mxu0
    %3823 = vdwg.mxu0
    %3824 = vmatprep.subr.bf16.mxu0 %v2854
    %3825 = vmatpush1.bf16.msra.mxu0 %v2853
    %3826 = vmatprep.subr.bf16.mxu0 %v2866
    %3827 = vmatpush1.bf16.msra.mxu0 %v2865
    %3828 = vmatprep.subr.bf16.mxu0 %v2878
    %3829 = vmatpush1.bf16.msra.mxu0 %v2877
    %3830 = vmatprep.subr.bf16.mxu0 %v2890
    %3831 = vmatpush1.bf16.msra.mxu0 %v2889
    %3832 = vmatprep.subr.bf16.mxu0 %v2902
    %3833 = vmatpush1.bf16.msra.mxu0 %v2901
    %3834 = vmatprep.subr.bf16.mxu0 %v2914
    %3835 = vmatpush1.bf16.msra.mxu0 %v2913
    %3836 = vmatprep.subr.bf16.mxu0 %v2926
    %3837 = vmatpush1.bf16.msra.mxu0 %v2925
    %3838 = vmatprep.subr.bf16.mxu0 %v2938
    %3839 = vmatpush1.bf16.msra.mxu0 %v2937
    %3840 = vmatprep.subr.bf16.mxu0 %v2950
    %3841 = vmatpush1.bf16.msra.mxu0 %v2949
    %3842 = vmatprep.subr.bf16.mxu0 %v2962
    %3843 = vmatpush1.bf16.msra.mxu0 %v2961
    %3844 = vmatprep.subr.bf16.mxu0 %v2974
    %3845 = vmatpush1.bf16.msra.mxu0 %v2973
    %3846 = vmatprep.subr.bf16.mxu0 %v2986
    %3847 = vmatpush1.bf16.msra.mxu0 %v2985
    %3848 = vmatprep.subr.bf16.mxu0 %v2998
    %3849 = vmatpush1.bf16.msra.mxu0 %v2997
    %3850 = vmatprep.subr.bf16.mxu0 %v3010
    %3851 = vmatpush1.bf16.msra.mxu0 %v3009
    %3852 = vmatprep.subr.bf16.mxu0 %v3022
    %3853 = vmatpush1.bf16.msra.mxu0 %v3021
    %3854 = vmatprep.subr.bf16.mxu0 %v3034
    %3855 = vmatpush1.bf16.msra.mxu0 %v3033
    %3856 = vmatprep.mubr.bf16.mxu0 %v732
    %3857 = vmatmul.mubr.bf16.gmra.mrb[0].mxu0 %v731
    %v3858 = vpop.f32.mrb[0].mxu0
    %v3859 = vadd.f32 %v3818, %v3858
    %v3860 = vpop.f32.mrb[0].mxu0
    %v3861 = vadd.f32 %v3820, %v3860
    %v3862 = vpop.f32.mrb[0].mxu0
    %v3863 = vpop.f32.mrb[0].mxu0
    %3864 = vdwg.mxu0
    %3865 = vmatprep.subr.bf16.mxu0 %v2472
    %3866 = vmatpush1.bf16.msra.mxu0 %v2471
    %3867 = vmatprep.subr.bf16.mxu0 %v2484
    %3868 = vmatpush1.bf16.msra.mxu0 %v2483
    %3869 = vmatprep.subr.bf16.mxu0 %v2496
    %3870 = vmatpush1.bf16.msra.mxu0 %v2495
    %3871 = vmatprep.subr.bf16.mxu0 %v2508
    %3872 = vmatpush1.bf16.msra.mxu0 %v2507
    %3873 = vmatprep.subr.bf16.mxu0 %v2520
    %3874 = vmatpush1.bf16.msra.mxu0 %v2519
    %3875 = vmatprep.subr.bf16.mxu0 %v2532
    %3876 = vmatpush1.bf16.msra.mxu0 %v2531
    %3877 = vmatprep.subr.bf16.mxu0 %v2544
    %3878 = vmatpush1.bf16.msra.mxu0 %v2543
    %3879 = vmatprep.subr.bf16.mxu0 %v2556
    %3880 = vmatpush1.bf16.msra.mxu0 %v2555
    %3881 = vmatprep.subr.bf16.mxu0 %v2568
    %3882 = vmatpush1.bf16.msra.mxu0 %v2567
    %3883 = vmatprep.subr.bf16.mxu0 %v2580
    %3884 = vmatpush1.bf16.msra.mxu0 %v2579
    %3885 = vmatprep.subr.bf16.mxu0 %v2592
    %3886 = vmatpush1.bf16.msra.mxu0 %v2591
    %3887 = vmatprep.subr.bf16.mxu0 %v2604
    %3888 = vmatpush1.bf16.msra.mxu0 %v2603
    %3889 = vmatprep.subr.bf16.mxu0 %v2616
    %3890 = vmatpush1.bf16.msra.mxu0 %v2615
    %3891 = vmatprep.subr.bf16.mxu0 %v2628
    %3892 = vmatpush1.bf16.msra.mxu0 %v2627
    %3893 = vmatprep.subr.bf16.mxu0 %v2640
    %3894 = vmatpush1.bf16.msra.mxu0 %v2639
    %3895 = vmatprep.subr.bf16.mxu0 %v2652
    %3896 = vmatpush1.bf16.msra.mxu0 %v2651
    %3897 = vmatprep.mubr.bf16.mxu0 %v728
    %3898 = vmatmul.mubr.bf16.gmra.mrb[0].mxu0 %v727
    %v3899 = vpop.f32.mrb[0].mxu0
    %v3900 = vadd.f32 0.0, %v3899
    %v3901 = vpop.f32.mrb[0].mxu0
    %v3902 = vadd.f32 0.0, %v3901
    %v3903 = vpop.f32.mrb[0].mxu0
    %v3904 = vpop.f32.mrb[0].mxu0
    %3905 = vdwg.mxu0
    %3906 = vmatprep.subr.bf16.mxu0 %v2664
    %3907 = vmatpush1.bf16.msra.mxu0 %v2663
    %3908 = vmatprep.subr.bf16.mxu0 %v2676
    %3909 = vmatpush1.bf16.msra.mxu0 %v2675
    %3910 = vmatprep.subr.bf16.mxu0 %v2688
    %3911 = vmatpush1.bf16.msra.mxu0 %v2687
    %3912 = vmatprep.subr.bf16.mxu0 %v2700
    %3913 = vmatpush1.bf16.msra.mxu0 %v2699
    %3914 = vmatprep.subr.bf16.mxu0 %v2712
    %3915 = vmatpush1.bf16.msra.mxu0 %v2711
    %3916 = vmatprep.subr.bf16.mxu0 %v2724
    %3917 = vmatpush1.bf16.msra.mxu0 %v2723
    %3918 = vmatprep.subr.bf16.mxu0 %v2736
    %3919 = vmatpush1.bf16.msra.mxu0 %v2735
    %3920 = vmatprep.subr.bf16.mxu0 %v2748
    %3921 = vmatpush1.bf16.msra.mxu0 %v2747
    %3922 = vmatprep.subr.bf16.mxu0 %v2760
    %3923 = vmatpush1.bf16.msra.mxu0 %v2759
    %3924 = vmatprep.subr.bf16.mxu0 %v2772
    %3925 = vmatpush1.bf16.msra.mxu0 %v2771
    %3926 = vmatprep.subr.bf16.mxu0 %v2784
    %3927 = vmatpush1.bf16.msra.mxu0 %v2783
    %3928 = vmatprep.subr.bf16.mxu0 %v2796
    %3929 = vmatpush1.bf16.msra.mxu0 %v2795
    %3930 = vmatprep.subr.bf16.mxu0 %v2808
    %3931 = vmatpush1.bf16.msra.mxu0 %v2807
    %3932 = vmatprep.subr.bf16.mxu0 %v2820
    %3933 = vmatpush1.bf16.msra.mxu0 %v2819
    %3934 = vmatprep.subr.bf16.mxu0 %v2832
    %3935 = vmatpush1.bf16.msra.mxu0 %v2831
    %3936 = vmatprep.subr.bf16.mxu0 %v2844
    %3937 = vmatpush1.bf16.msra.mxu0 %v2843
    %3938 = vmatprep.mubr.bf16.mxu0 %v730
    %3939 = vmatmul.mubr.bf16.gmra.mrb[0].mxu0 %v729
    %v3940 = vpop.f32.mrb[0].mxu0
    %v3941 = vadd.f32 %v3900, %v3940
    %v3942 = vpop.f32.mrb[0].mxu0
    %v3943 = vadd.f32 %v3902, %v3942
    %v3944 = vpop.f32.mrb[0].mxu0
    %v3945 = vpop.f32.mrb[0].mxu0
    %3946 = vdwg.mxu0
    %3947 = vmatprep.subr.bf16.mxu0 %v2856
    %3948 = vmatpush1.bf16.msra.mxu0 %v2855
    %3949 = vmatprep.subr.bf16.mxu0 %v2868
    %3950 = vmatpush1.bf16.msra.mxu0 %v2867
    %3951 = vmatprep.subr.bf16.mxu0 %v2880
    %3952 = vmatpush1.bf16.msra.mxu0 %v2879
    %3953 = vmatprep.subr.bf16.mxu0 %v2892
    %3954 = vmatpush1.bf16.msra.mxu0 %v2891
    %3955 = vmatprep.subr.bf16.mxu0 %v2904
    %3956 = vmatpush1.bf16.msra.mxu0 %v2903
    %3957 = vmatprep.subr.bf16.mxu0 %v2916
    %3958 = vmatpush1.bf16.msra.mxu0 %v2915
    %3959 = vmatprep.subr.bf16.mxu0 %v2928
    %3960 = vmatpush1.bf16.msra.mxu0 %v2927
    %3961 = vmatprep.subr.bf16.mxu0 %v2940
    %3962 = vmatpush1.bf16.msra.mxu0 %v2939
    %3963 = vmatprep.subr.bf16.mxu0 %v2952
    %3964 = vmatpush1.bf16.msra.mxu0 %v2951
    %3965 = vmatprep.subr.bf16.mxu0 %v2964
    %3966 = vmatpush1.bf16.msra.mxu0 %v2963
    %3967 = vmatprep.subr.bf16.mxu0 %v2976
    %3968 = vmatpush1.bf16.msra.mxu0 %v2975
    %3969 = vmatprep.subr.bf16.mxu0 %v2988
    %3970 = vmatpush1.bf16.msra.mxu0 %v2987
    %3971 = vmatprep.subr.bf16.mxu0 %v3000
    %3972 = vmatpush1.bf16.msra.mxu0 %v2999
    %3973 = vmatprep.subr.bf16.mxu0 %v3012
    %3974 = vmatpush1.bf16.msra.mxu0 %v3011
    %3975 = vmatprep.subr.bf16.mxu0 %v3024
    %3976 = vmatpush1.bf16.msra.mxu0 %v3023
    %3977 = vmatprep.subr.bf16.mxu0 %v3036
    %3978 = vmatpush1.bf16.msra.mxu0 %v3035
    %3979 = vmatprep.mubr.bf16.mxu0 %v732
    %3980 = vmatmul.mubr.bf16.gmra.mrb[0].mxu0 %v731
    %v3981 = vpop.f32.mrb[0].mxu0
    %v3982 = vadd.f32 %v3941, %v3981
    %v3983 = vpop.f32.mrb[0].mxu0
    %v3984 = vadd.f32 %v3943, %v3983
    %v3985 = vpop.f32.mrb[0].mxu0
    %v3986 = vpop.f32.mrb[0].mxu0
    %3987 = vdwg.mxu0
    %3988 = vmatprep.subr.bf16.mxu0 %v2474
    %3989 = vmatpush1.bf16.msra.mxu0 %v2473
    %3990 = vmatprep.subr.bf16.mxu0 %v2486
    %3991 = vmatpush1.bf16.msra.mxu0 %v2485
    %3992 = vmatprep.subr.bf16.mxu0 %v2498
    %3993 = vmatpush1.bf16.msra.mxu0 %v2497
    %3994 = vmatprep.subr.bf16.mxu0 %v2510
    %3995 = vmatpush1.bf16.msra.mxu0 %v2509
    %3996 = vmatprep.subr.bf16.mxu0 %v2522
    %3997 = vmatpush1.bf16.msra.mxu0 %v2521
    %3998 = vmatprep.subr.bf16.mxu0 %v2534
    %3999 = vmatpush1.bf16.msra.mxu0 %v2533
    %4000 = vmatprep.subr.bf16.mxu0 %v2546
    %4001 = vmatpush1.bf16.msra.mxu0 %v2545
    %4002 = vmatprep.subr.bf16.mxu0 %v2558
    %4003 = vmatpush1.bf16.msra.mxu0 %v2557
    %4004 = vmatprep.subr.bf16.mxu0 %v2570
    %4005 = vmatpush1.bf16.msra.mxu0 %v2569
    %4006 = vmatprep.subr.bf16.mxu0 %v2582
    %4007 = vmatpush1.bf16.msra.mxu0 %v2581
    %4008 = vmatprep.subr.bf16.mxu0 %v2594
    %4009 = vmatpush1.bf16.msra.mxu0 %v2593
    %4010 = vmatprep.subr.bf16.mxu0 %v2606
    %4011 = vmatpush1.bf16.msra.mxu0 %v2605
    %4012 = vmatprep.subr.bf16.mxu0 %v2618
    %4013 = vmatpush1.bf16.msra.mxu0 %v2617
    %4014 = vmatprep.subr.bf16.mxu0 %v2630
    %4015 = vmatpush1.bf16.msra.mxu0 %v2629
    %4016 = vmatprep.subr.bf16.mxu0 %v2642
    %4017 = vmatpush1.bf16.msra.mxu0 %v2641
    %4018 = vmatprep.subr.bf16.mxu0 %v2654
    %4019 = vmatpush1.bf16.msra.mxu0 %v2653
    %4020 = vmatprep.mubr.bf16.mxu0 %v728
    %4021 = vmatmul.mubr.bf16.gmra.mrb[0].mxu0 %v727
    %v4022 = vpop.f32.mrb[0].mxu0
    %v4023 = vadd.f32 0.0, %v4022
    %v4024 = vpop.f32.mrb[0].mxu0
    %v4025 = vadd.f32 0.0, %v4024
    %v4026 = vpop.f32.mrb[0].mxu0
    %v4027 = vpop.f32.mrb[0].mxu0
    %4028 = vdwg.mxu0
    %4029 = vmatprep.subr.bf16.mxu0 %v2666
    %4030 = vmatpush1.bf16.msra.mxu0 %v2665
    %4031 = vmatprep.subr.bf16.mxu0 %v2678
    %4032 = vmatpush1.bf16.msra.mxu0 %v2677
    %4033 = vmatprep.subr.bf16.mxu0 %v2690
    %4034 = vmatpush1.bf16.msra.mxu0 %v2689
    %4035 = vmatprep.subr.bf16.mxu0 %v2702
    %4036 = vmatpush1.bf16.msra.mxu0 %v2701
    %4037 = vmatprep.subr.bf16.mxu0 %v2714
    %4038 = vmatpush1.bf16.msra.mxu0 %v2713
    %4039 = vmatprep.subr.bf16.mxu0 %v2726
    %4040 = vmatpush1.bf16.msra.mxu0 %v2725
    %4041 = vmatprep.subr.bf16.mxu0 %v2738
    %4042 = vmatpush1.bf16.msra.mxu0 %v2737
    %4043 = vmatprep.subr.bf16.mxu0 %v2750
    %4044 = vmatpush1.bf16.msra.mxu0 %v2749
    %4045 = vmatprep.subr.bf16.mxu0 %v2762
    %4046 = vmatpush1.bf16.msra.mxu0 %v2761
    %4047 = vmatprep.subr.bf16.mxu0 %v2774
    %4048 = vmatpush1.bf16.msra.mxu0 %v2773
    %4049 = vmatprep.subr.bf16.mxu0 %v2786
    %4050 = vmatpush1.bf16.msra.mxu0 %v2785
    %4051 = vmatprep.subr.bf16.mxu0 %v2798
    %4052 = vmatpush1.bf16.msra.mxu0 %v2797
    %4053 = vmatprep.subr.bf16.mxu0 %v2810
    %4054 = vmatpush1.bf16.msra.mxu0 %v2809
    %4055 = vmatprep.subr.bf16.mxu0 %v2822
    %4056 = vmatpush1.bf16.msra.mxu0 %v2821
    %4057 = vmatprep.subr.bf16.mxu0 %v2834
    %4058 = vmatpush1.bf16.msra.mxu0 %v2833
    %4059 = vmatprep.subr.bf16.mxu0 %v2846
    %4060 = vmatpush1.bf16.msra.mxu0 %v2845
    %4061 = vmatprep.mubr.bf16.mxu0 %v730
    %4062 = vmatmul.mubr.bf16.gmra.mrb[0].mxu0 %v729
    %v4063 = vpop.f32.mrb[0].mxu0
    %v4064 = vadd.f32 %v4023, %v4063
    %v4065 = vpop.f32.mrb[0].mxu0
    %v4066 = vadd.f32 %v4025, %v4065
    %v4067 = vpop.f32.mrb[0].mxu0
    %v4068 = vpop.f32.mrb[0].mxu0
    %4069 = vdwg.mxu0
    %4070 = vmatprep.subr.bf16.mxu0 %v2858
    %4071 = vmatpush1.bf16.msra.mxu0 %v2857
    %4072 = vmatprep.subr.bf16.mxu0 %v2870
    %4073 = vmatpush1.bf16.msra.mxu0 %v2869
    %4074 = vmatprep.subr.bf16.mxu0 %v2882
    %4075 = vmatpush1.bf16.msra.mxu0 %v2881
    %4076 = vmatprep.subr.bf16.mxu0 %v2894
    %4077 = vmatpush1.bf16.msra.mxu0 %v2893
    %4078 = vmatprep.subr.bf16.mxu0 %v2906
    %4079 = vmatpush1.bf16.msra.mxu0 %v2905
    %4080 = vmatprep.subr.bf16.mxu0 %v2918
    %4081 = vmatpush1.bf16.msra.mxu0 %v2917
    %4082 = vmatprep.subr.bf16.mxu0 %v2930
    %4083 = vmatpush1.bf16.msra.mxu0 %v2929
    %4084 = vmatprep.subr.bf16.mxu0 %v2942
    %4085 = vmatpush1.bf16.msra.mxu0 %v2941
    %4086 = vmatprep.subr.bf16.mxu0 %v2954
    %4087 = vmatpush1.bf16.msra.mxu0 %v2953
    %4088 = vmatprep.subr.bf16.mxu0 %v2966
    %4089 = vmatpush1.bf16.msra.mxu0 %v2965
    %4090 = vmatprep.subr.bf16.mxu0 %v2978
    %4091 = vmatpush1.bf16.msra.mxu0 %v2977
    %4092 = vmatprep.subr.bf16.mxu0 %v2990
    %4093 = vmatpush1.bf16.msra.mxu0 %v2989
    %4094 = vmatprep.subr.bf16.mxu0 %v3002
    %4095 = vmatpush1.bf16.msra.mxu0 %v3001
    %4096 = vmatprep.subr.bf16.mxu0 %v3014
    %4097 = vmatpush1.bf16.msra.mxu0 %v3013
    %4098 = vmatprep.subr.bf16.mxu0 %v3026
    %4099 = vmatpush1.bf16.msra.mxu0 %v3025
    %4100 = vmatprep.subr.bf16.mxu0 %v3038
    %4101 = vmatpush1.bf16.msra.mxu0 %v3037
    %4102 = vmatprep.mubr.bf16.mxu0 %v732
    %4103 = vmatmul.mubr.bf16.gmra.mrb[0].mxu0 %v731
    %v4104 = vpop.f32.mrb[0].mxu0
    %v4105 = vadd.f32 %v4064, %v4104
    %v4106 = vpop.f32.mrb[0].mxu0
    %v4107 = vadd.f32 %v4066, %v4106
    %v4108 = vpop.f32.mrb[0].mxu0
    %v4109 = vpop.f32.mrb[0].mxu0
    %4110 = vdwg.mxu0
    %4111 = vmatprep.subr.bf16.mxu0 %v2476
    %4112 = vmatpush1.bf16.msra.mxu0 %v2475
    %4113 = vmatprep.subr.bf16.mxu0 %v2488
    %4114 = vmatpush1.bf16.msra.mxu0 %v2487
    %4115 = vmatprep.subr.bf16.mxu0 %v2500
    %4116 = vmatpush1.bf16.msra.mxu0 %v2499
    %4117 = vmatprep.subr.bf16.mxu0 %v2512
    %4118 = vmatpush1.bf16.msra.mxu0 %v2511
    %4119 = vmatprep.subr.bf16.mxu0 %v2524
    %4120 = vmatpush1.bf16.msra.mxu0 %v2523
    %4121 = vmatprep.subr.bf16.mxu0 %v2536
    %4122 = vmatpush1.bf16.msra.mxu0 %v2535
    %4123 = vmatprep.subr.bf16.mxu0 %v2548
    %4124 = vmatpush1.bf16.msra.mxu0 %v2547
    %4125 = vmatprep.subr.bf16.mxu0 %v2560
    %4126 = vmatpush1.bf16.msra.mxu0 %v2559
    %4127 = vmatprep.subr.bf16.mxu0 %v2572
    %4128 = vmatpush1.bf16.msra.mxu0 %v2571
    %4129 = vmatprep.subr.bf16.mxu0 %v2584
    %4130 = vmatpush1.bf16.msra.mxu0 %v2583
    %4131 = vmatprep.subr.bf16.mxu0 %v2596
    %4132 = vmatpush1.bf16.msra.mxu0 %v2595
    %4133 = vmatprep.subr.bf16.mxu0 %v2608
    %4134 = vmatpush1.bf16.msra.mxu0 %v2607
    %4135 = vmatprep.subr.bf16.mxu0 %v2620
    %4136 = vmatpush1.bf16.msra.mxu0 %v2619
    %4137 = vmatprep.subr.bf16.mxu0 %v2632
    %4138 = vmatpush1.bf16.msra.mxu0 %v2631
    %4139 = vmatprep.subr.bf16.mxu0 %v2644
    %4140 = vmatpush1.bf16.msra.mxu0 %v2643
    %4141 = vmatprep.subr.bf16.mxu0 %v2656
    %4142 = vmatpush1.bf16.msra.mxu0 %v2655
    %4143 = vmatprep.mubr.bf16.mxu0 %v728
    %4144 = vmatmul.mubr.bf16.gmra.mrb[0].mxu0 %v727
    %v4145 = vpop.f32.mrb[0].mxu0
    %v4146 = vadd.f32 0.0, %v4145
    %v4147 = vpop.f32.mrb[0].mxu0
    %v4148 = vadd.f32 0.0, %v4147
    %v4149 = vpop.f32.mrb[0].mxu0
    %v4150 = vpop.f32.mrb[0].mxu0
    %4151 = vdwg.mxu0
    %4152 = vmatprep.subr.bf16.mxu0 %v2668
    %4153 = vmatpush1.bf16.msra.mxu0 %v2667
    %4154 = vmatprep.subr.bf16.mxu0 %v2680
    %4155 = vmatpush1.bf16.msra.mxu0 %v2679
    %4156 = vmatprep.subr.bf16.mxu0 %v2692
    %4157 = vmatpush1.bf16.msra.mxu0 %v2691
    %4158 = vmatprep.subr.bf16.mxu0 %v2704
    %4159 = vmatpush1.bf16.msra.mxu0 %v2703
    %4160 = vmatprep.subr.bf16.mxu0 %v2716
    %4161 = vmatpush1.bf16.msra.mxu0 %v2715
    %4162 = vmatprep.subr.bf16.mxu0 %v2728
    %4163 = vmatpush1.bf16.msra.mxu0 %v2727
    %4164 = vmatprep.subr.bf16.mxu0 %v2740
    %4165 = vmatpush1.bf16.msra.mxu0 %v2739
    %4166 = vmatprep.subr.bf16.mxu0 %v2752
    %4167 = vmatpush1.bf16.msra.mxu0 %v2751
    %4168 = vmatprep.subr.bf16.mxu0 %v2764
    %4169 = vmatpush1.bf16.msra.mxu0 %v2763
    %4170 = vmatprep.subr.bf16.mxu0 %v2776
    %4171 = vmatpush1.bf16.msra.mxu0 %v2775
    %4172 = vmatprep.subr.bf16.mxu0 %v2788
    %4173 = vmatpush1.bf16.msra.mxu0 %v2787
    %4174 = vmatprep.subr.bf16.mxu0 %v2800
    %4175 = vmatpush1.bf16.msra.mxu0 %v2799
    %4176 = vmatprep.subr.bf16.mxu0 %v2812
    %4177 = vmatpush1.bf16.msra.mxu0 %v2811
    %4178 = vmatprep.subr.bf16.mxu0 %v2824
    %4179 = vmatpush1.bf16.msra.mxu0 %v2823
    %4180 = vmatprep.subr.bf16.mxu0 %v2836
    %4181 = vmatpush1.bf16.msra.mxu0 %v2835
    %4182 = vmatprep.subr.bf16.mxu0 %v2848
    %4183 = vmatpush1.bf16.msra.mxu0 %v2847
    %4184 = vmatprep.mubr.bf16.mxu0 %v730
    %4185 = vmatmul.mubr.bf16.gmra.mrb[0].mxu0 %v729
    %v4186 = vpop.f32.mrb[0].mxu0
    %v4187 = vadd.f32 %v4146, %v4186
    %v4188 = vpop.f32.mrb[0].mxu0
    %v4189 = vadd.f32 %v4148, %v4188
    %v4190 = vpop.f32.mrb[0].mxu0
    %v4191 = vpop.f32.mrb[0].mxu0
    %4192 = vdwg.mxu0
    %4193 = vmatprep.subr.bf16.mxu0 %v2860
    %4194 = vmatpush1.bf16.msra.mxu0 %v2859
    %4195 = vmatprep.subr.bf16.mxu0 %v2872
    %4196 = vmatpush1.bf16.msra.mxu0 %v2871
    %4197 = vmatprep.subr.bf16.mxu0 %v2884
    %4198 = vmatpush1.bf16.msra.mxu0 %v2883
    %4199 = vmatprep.subr.bf16.mxu0 %v2896
    %4200 = vmatpush1.bf16.msra.mxu0 %v2895
    %4201 = vmatprep.subr.bf16.mxu0 %v2908
    %4202 = vmatpush1.bf16.msra.mxu0 %v2907
    %4203 = vmatprep.subr.bf16.mxu0 %v2920
    %4204 = vmatpush1.bf16.msra.mxu0 %v2919
    %4205 = vmatprep.subr.bf16.mxu0 %v2932
    %4206 = vmatpush1.bf16.msra.mxu0 %v2931
    %4207 = vmatprep.subr.bf16.mxu0 %v2944
    %4208 = vmatpush1.bf16.msra.mxu0 %v2943
    %4209 = vmatprep.subr.bf16.mxu0 %v2956
    %4210 = vmatpush1.bf16.msra.mxu0 %v2955
    %4211 = vmatprep.subr.bf16.mxu0 %v2968
    %4212 = vmatpush1.bf16.msra.mxu0 %v2967
    %4213 = vmatprep.subr.bf16.mxu0 %v2980
    %4214 = vmatpush1.bf16.msra.mxu0 %v2979
    %4215 = vmatprep.subr.bf16.mxu0 %v2992
    %4216 = vmatpush1.bf16.msra.mxu0 %v2991
    %4217 = vmatprep.subr.bf16.mxu0 %v3004
    %4218 = vmatpush1.bf16.msra.mxu0 %v3003
    %4219 = vmatprep.subr.bf16.mxu0 %v3016
    %4220 = vmatpush1.bf16.msra.mxu0 %v3015
    %4221 = vmatprep.subr.bf16.mxu0 %v3028
    %4222 = vmatpush1.bf16.msra.mxu0 %v3027
    %4223 = vmatprep.subr.bf16.mxu0 %v3040
    %4224 = vmatpush1.bf16.msra.mxu0 %v3039
    %4225 = vmatprep.mubr.bf16.mxu0 %v732
    %4226 = vmatmul.mubr.bf16.gmra.mrb[0].mxu0 %v731
    %v4227 = vpop.f32.mrb[0].mxu0
    %v4228 = vadd.f32 %v4187, %v4227
    %v4229 = vpop.f32.mrb[0].mxu0
    %v4230 = vadd.f32 %v4189, %v4229
    %v4231 = vpop.f32.mrb[0].mxu0
    %v4232 = vpop.f32.mrb[0].mxu0
    %4233 = vdwg.mxu0
    %4234 = vmatprep.subr.bf16.mxu0 %v2478
    %4235 = vmatpush1.bf16.msra.mxu0 %v2477
    %4236 = vmatprep.subr.bf16.mxu0 %v2490
    %4237 = vmatpush1.bf16.msra.mxu0 %v2489
    %4238 = vmatprep.subr.bf16.mxu0 %v2502
    %4239 = vmatpush1.bf16.msra.mxu0 %v2501
    %4240 = vmatprep.subr.bf16.mxu0 %v2514
    %4241 = vmatpush1.bf16.msra.mxu0 %v2513
    %4242 = vmatprep.subr.bf16.mxu0 %v2526
    %4243 = vmatpush1.bf16.msra.mxu0 %v2525
    %4244 = vmatprep.subr.bf16.mxu0 %v2538
    %4245 = vmatpush1.bf16.msra.mxu0 %v2537
    %4246 = vmatprep.subr.bf16.mxu0 %v2550
    %4247 = vmatpush1.bf16.msra.mxu0 %v2549
    %4248 = vmatprep.subr.bf16.mxu0 %v2562
    %4249 = vmatpush1.bf16.msra.mxu0 %v2561
    %4250 = vmatprep.subr.bf16.mxu0 %v2574
    %4251 = vmatpush1.bf16.msra.mxu0 %v2573
    %4252 = vmatprep.subr.bf16.mxu0 %v2586
    %4253 = vmatpush1.bf16.msra.mxu0 %v2585
    %4254 = vmatprep.subr.bf16.mxu0 %v2598
    %4255 = vmatpush1.bf16.msra.mxu0 %v2597
    %4256 = vmatprep.subr.bf16.mxu0 %v2610
    %4257 = vmatpush1.bf16.msra.mxu0 %v2609
    %4258 = vmatprep.subr.bf16.mxu0 %v2622
    %4259 = vmatpush1.bf16.msra.mxu0 %v2621
    %4260 = vmatprep.subr.bf16.mxu0 %v2634
    %4261 = vmatpush1.bf16.msra.mxu0 %v2633
    %4262 = vmatprep.subr.bf16.mxu0 %v2646
    %4263 = vmatpush1.bf16.msra.mxu0 %v2645
    %4264 = vmatprep.subr.bf16.mxu0 %v2658
    %4265 = vmatpush1.bf16.msra.mxu0 %v2657
    %4266 = vmatprep.mubr.bf16.mxu0 %v728
    %4267 = vmatmul.mubr.bf16.gmra.mrb[0].mxu0 %v727
    %v4268 = vpop.f32.mrb[0].mxu0
    %v4269 = vadd.f32 0.0, %v4268
    %v4270 = vpop.f32.mrb[0].mxu0
    %v4271 = vadd.f32 0.0, %v4270
    %v4272 = vpop.f32.mrb[0].mxu0
    %v4273 = vpop.f32.mrb[0].mxu0
    %4274 = vdwg.mxu0
    %4275 = vmatprep.subr.bf16.mxu0 %v2670
    %4276 = vmatpush1.bf16.msra.mxu0 %v2669
    %4277 = vmatprep.subr.bf16.mxu0 %v2682
    %4278 = vmatpush1.bf16.msra.mxu0 %v2681
    %4279 = vmatprep.subr.bf16.mxu0 %v2694
    %4280 = vmatpush1.bf16.msra.mxu0 %v2693
    %4281 = vmatprep.subr.bf16.mxu0 %v2706
    %4282 = vmatpush1.bf16.msra.mxu0 %v2705
    %4283 = vmatprep.subr.bf16.mxu0 %v2718
    %4284 = vmatpush1.bf16.msra.mxu0 %v2717
    %4285 = vmatprep.subr.bf16.mxu0 %v2730
    %4286 = vmatpush1.bf16.msra.mxu0 %v2729
    %4287 = vmatprep.subr.bf16.mxu0 %v2742
    %4288 = vmatpush1.bf16.msra.mxu0 %v2741
    %4289 = vmatprep.subr.bf16.mxu0 %v2754
    %4290 = vmatpush1.bf16.msra.mxu0 %v2753
    %4291 = vmatprep.subr.bf16.mxu0 %v2766
    %4292 = vmatpush1.bf16.msra.mxu0 %v2765
    %4293 = vmatprep.subr.bf16.mxu0 %v2778
    %4294 = vmatpush1.bf16.msra.mxu0 %v2777
    %4295 = vmatprep.subr.bf16.mxu0 %v2790
    %4296 = vmatpush1.bf16.msra.mxu0 %v2789
    %4297 = vmatprep.subr.bf16.mxu0 %v2802
    %4298 = vmatpush1.bf16.msra.mxu0 %v2801
    %4299 = vmatprep.subr.bf16.mxu0 %v2814
    %4300 = vmatpush1.bf16.msra.mxu0 %v2813
    %4301 = vmatprep.subr.bf16.mxu0 %v2826
    %4302 = vmatpush1.bf16.msra.mxu0 %v2825
    %4303 = vmatprep.subr.bf16.mxu0 %v2838
    %4304 = vmatpush1.bf16.msra.mxu0 %v2837
    %4305 = vmatprep.subr.bf16.mxu0 %v2850
    %4306 = vmatpush1.bf16.msra.mxu0 %v2849
    %4307 = vmatprep.mubr.bf16.mxu0 %v730
    %4308 = vmatmul.mubr.bf16.gmra.mrb[0].mxu0 %v729
    %v4309 = vpop.f32.mrb[0].mxu0
    %v4310 = vadd.f32 %v4269, %v4309
    %v4311 = vpop.f32.mrb[0].mxu0
    %v4312 = vadd.f32 %v4271, %v4311
    %v4313 = vpop.f32.mrb[0].mxu0
    %v4314 = vpop.f32.mrb[0].mxu0
    %4315 = vdwg.mxu0
    %4316 = vmatprep.subr.bf16.mxu0 %v2862
    %4317 = vmatpush1.bf16.msra.mxu0 %v2861
    %4318 = vmatprep.subr.bf16.mxu0 %v2874
    %4319 = vmatpush1.bf16.msra.mxu0 %v2873
    %4320 = vmatprep.subr.bf16.mxu0 %v2886
    %4321 = vmatpush1.bf16.msra.mxu0 %v2885
    %4322 = vmatprep.subr.bf16.mxu0 %v2898
    %4323 = vmatpush1.bf16.msra.mxu0 %v2897
    %4324 = vmatprep.subr.bf16.mxu0 %v2910
    %4325 = vmatpush1.bf16.msra.mxu0 %v2909
    %4326 = vmatprep.subr.bf16.mxu0 %v2922
    %4327 = vmatpush1.bf16.msra.mxu0 %v2921
    %4328 = vmatprep.subr.bf16.mxu0 %v2934
    %4329 = vmatpush1.bf16.msra.mxu0 %v2933
    %4330 = vmatprep.subr.bf16.mxu0 %v2946
    %4331 = vmatpush1.bf16.msra.mxu0 %v2945
    %4332 = vmatprep.subr.bf16.mxu0 %v2958
    %4333 = vmatpush1.bf16.msra.mxu0 %v2957
    %4334 = vmatprep.subr.bf16.mxu0 %v2970
    %4335 = vmatpush1.bf16.msra.mxu0 %v2969
    %4336 = vmatprep.subr.bf16.mxu0 %v2982
    %4337 = vmatpush1.bf16.msra.mxu0 %v2981
    %4338 = vmatprep.subr.bf16.mxu0 %v2994
    %4339 = vmatpush1.bf16.msra.mxu0 %v2993
    %4340 = vmatprep.subr.bf16.mxu0 %v3006
    %4341 = vmatpush1.bf16.msra.mxu0 %v3005
    %4342 = vmatprep.subr.bf16.mxu0 %v3018
    %4343 = vmatpush1.bf16.msra.mxu0 %v3017
    %4344 = vmatprep.subr.bf16.mxu0 %v3030
    %4345 = vmatpush1.bf16.msra.mxu0 %v3029
    %4346 = vmatprep.subr.bf16.mxu0 %v3042
    %4347 = vmatpush1.bf16.msra.mxu0 %v3041
    %4348 = vmatprep.mubr.bf16.mxu0 %v732
    %4349 = vmatmul.mubr.bf16.gmra.mrb[0].mxu0 %v731
    %v4350 = vpop.f32.mrb[0].mxu0
    %v4351 = vadd.f32 %v4310, %v4350
    %v4352 = vpop.f32.mrb[0].mxu0
    %v4353 = vadd.f32 %v4312, %v4352
    %v4354 = vpop.f32.mrb[0].mxu0
    %v4355 = vpop.f32.mrb[0].mxu0
    %4356 = vdwg.mxu0
    %v4357 = vmul.f32 %v3736, 0.5
    %v4358 = vmul.f32 %v3738, 0.5
    %v4359 = vmul.f32 %v3859, 0.5
    %v4360 = vmul.f32 %v3861, 0.5
    %v4361 = vmul.f32 %v3982, 0.5
    %v4362 = vmul.f32 %v3984, 0.5
    %v4363 = vmul.f32 %v4105, 0.5
    %v4364 = vmul.f32 %v4107, 0.5
    %v4365 = vmul.f32 %v4228, 0.5
    %v4366 = vmul.f32 %v4230, 0.5
    %v4367 = vmul.f32 %v4351, 0.5
    %v4368 = vmul.f32 %v4353, 0.5
    %v4369 = vtanh.pop %v4357
    %v4370 = vtanh.pop %v4358
    %v4371 = vtanh.pop %v4359
    %v4372 = vtanh.pop %v4360
    %v4373 = vtanh.pop %v4361
    %v4374 = vtanh.pop %v4362
    %v4375 = vtanh.pop %v4363
    %v4376 = vtanh.pop %v4364
    %v4377 = vtanh.pop %v4365
    %v4378 = vtanh.pop %v4366
    %v4379 = vtanh.pop %v4367
    %v4380 = vtanh.pop %v4368
    %v4381 = vadd.f32 %v4369, 1.0
    %v4382 = vadd.f32 %v4370, 1.0
    %v4383 = vadd.f32 %v4371, 1.0
    %v4384 = vadd.f32 %v4372, 1.0
    %v4385 = vadd.f32 %v4373, 1.0
    %v4386 = vadd.f32 %v4374, 1.0
    %v4387 = vadd.f32 %v4375, 1.0
    %v4388 = vadd.f32 %v4376, 1.0
    %v4389 = vadd.f32 %v4377, 1.0
    %v4390 = vadd.f32 %v4378, 1.0
    %v4391 = vadd.f32 %v4379, 1.0
    %v4392 = vadd.f32 %v4380, 1.0
    %v4393 = vmul.f32 %v4381, 0.5
    %v4394 = vmul.f32 %v4382, 0.5
    %v4395 = vmul.f32 %v4383, 0.5
    %v4396 = vmul.f32 %v4384, 0.5
    %v4397 = vmul.f32 %v4385, 0.5
    %v4398 = vmul.f32 %v4386, 0.5
    %v4399 = vmul.f32 %v4387, 0.5
    %v4400 = vmul.f32 %v4388, 0.5
    %v4401 = vmul.f32 %v4389, 0.5
    %v4402 = vmul.f32 %v4390, 0.5
    %v4403 = vmul.f32 %v4391, 0.5
    %v4404 = vmul.f32 %v4392, 0.5
    %v4405 = vadd.f32 %v4393, %v4396
    %v4406 = vadd.f32 %v4394, %v4397
    %v4407 = vadd.f32 %v4395, %v4398
    %v4408 = vadd.f32 %v4405, %v4399
    %v4409 = vadd.f32 %v4406, %v4400
    %v4410 = vadd.f32 %v4407, %v4401
    %v4411 = vadd.f32 %v4408, %v4402
    %v4412 = vadd.f32 %v4409, %v4403
    %v4413 = vadd.f32 %v4410, %v4404
    %v4414 = vmul.f32 %v4411, 0.25
    %v4415 = vmul.f32 %v4412, 0.25
    %v4416 = vmul.f32 %v4413, 0.25
    %v4417 = vpack.c.bf16 %v4414, %v4414
    %v4418 = vpack.c.bf16 %v4415, %v4415
    %v4419 = vpack.c.bf16 %v4416, %v4416
    %v4420 = vld [vmem:[#allocation4] sm:$0xff]
    %v4421 = vld [vmem:[#allocation4 + $0x8] sm:$0xff]
    %v4422 = vld [vmem:[#allocation4 + $0x10] sm:$0xff]
    %v4423 = vld [vmem:[#allocation4 + $0x18] sm:$0xff]
    %v4424 = vld [vmem:[#allocation4 + $0x20] sm:$0xff]
    %v4425 = vld [vmem:[#allocation4 + $0x28] sm:$0xff]
    %v4426 = vld [vmem:[#allocation4 + $0x30] sm:$0xff]
    %v4427 = vld [vmem:[#allocation4 + $0x38] sm:$0xff]
    %v4428 = vld [vmem:[#allocation4 + $0x40] sm:$0xff]
    %v4429 = vld [vmem:[#allocation4 + $0x48] sm:$0xff]
    %v4430 = vld [vmem:[#allocation4 + $0x50] sm:$0xff]
    %v4431 = vld [vmem:[#allocation4 + $0x58] sm:$0xff]
    %v4432 = vld [vmem:[#allocation4 + $0x60] sm:$0xff]
    %v4433 = vld [vmem:[#allocation4 + $0x68] sm:$0xff]
    %v4434 = vld [vmem:[#allocation4 + $0x70] sm:$0xff]
    %v4435 = vld [vmem:[#allocation4 + $0x78] sm:$0xff]
    %v4436 = vld [vmem:[#allocation4 + $0x80] sm:$0xff]
    %v4437 = vld [vmem:[#allocation4 + $0x88] sm:$0xff]
    %v4438 = vld [vmem:[#allocation4 + $0x90] sm:$0xff]
    %v4439 = vld [vmem:[#allocation4 + $0x98] sm:$0xff]
    %v4440 = vld [vmem:[#allocation4 + $0xa0] sm:$0xff]
    %v4441 = vld [vmem:[#allocation4 + $0xa8] sm:$0xff]
    %v4442 = vld [vmem:[#allocation4 + $0xb0] sm:$0xff]
    %v4443 = vld [vmem:[#allocation4 + $0xb8] sm:$0xff]
    %v4444 = vld [vmem:[#allocation4 + $0xc0] sm:$0xff]
    %v4445 = vld [vmem:[#allocation4 + $0xc8] sm:$0xff]
    %v4446 = vld [vmem:[#allocation4 + $0xd0] sm:$0xff]
    %v4447 = vld [vmem:[#allocation4 + $0xd8] sm:$0xff]
    %v4448 = vld [vmem:[#allocation4 + $0xe0] sm:$0xff]
    %v4449 = vld [vmem:[#allocation4 + $0xe8] sm:$0xff]
    %v4450 = vld [vmem:[#allocation4 + $0xf0] sm:$0xff]
    %v4451 = vld [vmem:[#allocation4 + $0xf8] sm:$0xff]
    %v4452 = vld [vmem:[#allocation4 + $0x100] sm:$0xff]
    %v4453 = vld [vmem:[#allocation4 + $0x108] sm:$0xff]
    %v4454 = vld [vmem:[#allocation4 + $0x110] sm:$0xff]
    %v4455 = vld [vmem:[#allocation4 + $0x118] sm:$0xff]
    %v4456 = vld [vmem:[#allocation4 + $0x120] sm:$0xff]
    %v4457 = vld [vmem:[#allocation4 + $0x128] sm:$0xff]
    %v4458 = vld [vmem:[#allocation4 + $0x130] sm:$0xff]
    %v4459 = vld [vmem:[#allocation4 + $0x138] sm:$0xff]
    %v4460 = vld [vmem:[#allocation4 + $0x140] sm:$0xff]
    %v4461 = vld [vmem:[#allocation4 + $0x148] sm:$0xff]
    %v4462 = vld [vmem:[#allocation4 + $0x150] sm:$0xff]
    %v4463 = vld [vmem:[#allocation4 + $0x158] sm:$0xff]
    %v4464 = vld [vmem:[#allocation4 + $0x160] sm:$0xff]
    %v4465 = vld [vmem:[#allocation4 + $0x168] sm:$0xff]
    %v4466 = vld [vmem:[#allocation4 + $0x170] sm:$0xff]
    %v4467 = vld [vmem:[#allocation4 + $0x178] sm:$0xff]
    %v4468 = vld [vmem:[#allocation4 + $0x180] sm:$0xff]
    %v4469 = vld [vmem:[#allocation4 + $0x188] sm:$0xff]
    %v4470 = vld [vmem:[#allocation4 + $0x190] sm:$0xff]
    %v4471 = vld [vmem:[#allocation4 + $0x198] sm:$0xff]
    %v4472 = vld [vmem:[#allocation4 + $0x1a0] sm:$0xff]
    %v4473 = vld [vmem:[#allocation4 + $0x1a8] sm:$0xff]
    %v4474 = vld [vmem:[#allocation4 + $0x1b0] sm:$0xff]
    %v4475 = vld [vmem:[#allocation4 + $0x1b8] sm:$0xff]
    %v4476 = vld [vmem:[#allocation4 + $0x1c0] sm:$0xff]
    %v4477 = vld [vmem:[#allocation4 + $0x1c8] sm:$0xff]
    %v4478 = vld [vmem:[#allocation4 + $0x1d0] sm:$0xff]
    %v4479 = vld [vmem:[#allocation4 + $0x1d8] sm:$0xff]
    %v4480 = vld [vmem:[#allocation4 + $0x1e0] sm:$0xff]
    %v4481 = vld [vmem:[#allocation4 + $0x1e8] sm:$0xff]
    %v4482 = vld [vmem:[#allocation4 + $0x1f0] sm:$0xff]
    %v4483 = vld [vmem:[#allocation4 + $0x1f8] sm:$0xff]
    %v4484 = vld [vmem:[#allocation4 + $0x200] sm:$0xff]
    %v4485 = vld [vmem:[#allocation4 + $0x208] sm:$0xff]
    %v4486 = vld [vmem:[#allocation4 + $0x210] sm:$0xff]
    %v4487 = vld [vmem:[#allocation4 + $0x218] sm:$0xff]
    %v4488 = vld [vmem:[#allocation4 + $0x220] sm:$0xff]
    %v4489 = vld [vmem:[#allocation4 + $0x228] sm:$0xff]
    %v4490 = vld [vmem:[#allocation4 + $0x230] sm:$0xff]
    %v4491 = vld [vmem:[#allocation4 + $0x238] sm:$0xff]
    %v4492 = vld [vmem:[#allocation4 + $0x240] sm:$0xff]
    %v4493 = vld [vmem:[#allocation4 + $0x248] sm:$0xff]
    %v4494 = vld [vmem:[#allocation4 + $0x250] sm:$0xff]
    %v4495 = vld [vmem:[#allocation4 + $0x258] sm:$0xff]
    %v4496 = vld [vmem:[#allocation4 + $0x260] sm:$0xff]
    %v4497 = vld [vmem:[#allocation4 + $0x268] sm:$0xff]
    %v4498 = vld [vmem:[#allocation4 + $0x270] sm:$0xff]
    %v4499 = vld [vmem:[#allocation4 + $0x278] sm:$0xff]
    %v4500 = vld [vmem:[#allocation4 + $0x280] sm:$0xff]
    %v4501 = vld [vmem:[#allocation4 + $0x288] sm:$0xff]
    %v4502 = vld [vmem:[#allocation4 + $0x290] sm:$0xff]
    %v4503 = vld [vmem:[#allocation4 + $0x298] sm:$0xff]
    %v4504 = vld [vmem:[#allocation4 + $0x2a0] sm:$0xff]
    %v4505 = vld [vmem:[#allocation4 + $0x2a8] sm:$0xff]
    %v4506 = vld [vmem:[#allocation4 + $0x2b0] sm:$0xff]
    %v4507 = vld [vmem:[#allocation4 + $0x2b8] sm:$0xff]
    %v4508 = vld [vmem:[#allocation4 + $0x2c0] sm:$0xff]
    %v4509 = vld [vmem:[#allocation4 + $0x2c8] sm:$0xff]
    %v4510 = vld [vmem:[#allocation4 + $0x2d0] sm:$0xff]
    %v4511 = vld [vmem:[#allocation4 + $0x2d8] sm:$0xff]
    %v4512 = vld [vmem:[#allocation4 + $0x2e0] sm:$0xff]
    %v4513 = vld [vmem:[#allocation4 + $0x2e8] sm:$0xff]
    %v4514 = vld [vmem:[#allocation4 + $0x2f0] sm:$0xff]
    %v4515 = vld [vmem:[#allocation4 + $0x2f8] sm:$0xff]
    %v4612 = vunpack.c.l.b16 %v4420
    %v4613 = vunpack.c.h.b16 %v4420
    %v4614 = vunpack.c.l.b16 %v4421
    %v4615 = vunpack.c.h.b16 %v4421
    %v4616 = vunpack.c.l.b16 %v4422
    %v4617 = vunpack.c.h.b16 %v4422
    %v4618 = vunpack.c.l.b16 %v4423
    %v4619 = vunpack.c.h.b16 %v4423
    %v4620 = vunpack.c.l.b16 %v4424
    %v4621 = vunpack.c.h.b16 %v4424
    %v4622 = vunpack.c.l.b16 %v4425
    %v4623 = vunpack.c.h.b16 %v4425
    %v4624 = vunpack.c.l.b16 %v4426
    %v4625 = vunpack.c.h.b16 %v4426
    %v4626 = vunpack.c.l.b16 %v4427
    %v4627 = vunpack.c.h.b16 %v4427
    %v4628 = vunpack.c.l.b16 %v4428
    %v4629 = vunpack.c.h.b16 %v4428
    %v4630 = vunpack.c.l.b16 %v4429
    %v4631 = vunpack.c.h.b16 %v4429
    %v4632 = vunpack.c.l.b16 %v4430
    %v4633 = vunpack.c.h.b16 %v4430
    %v4634 = vunpack.c.l.b16 %v4431
    %v4635 = vunpack.c.h.b16 %v4431
    %v4636 = vunpack.c.l.b16 %v4432
    %v4637 = vunpack.c.h.b16 %v4432
    %v4638 = vunpack.c.l.b16 %v4433
    %v4639 = vunpack.c.h.b16 %v4433
    %v4640 = vunpack.c.l.b16 %v4434
    %v4641 = vunpack.c.h.b16 %v4434
    %v4642 = vunpack.c.l.b16 %v4435
    %v4643 = vunpack.c.h.b16 %v4435
    %v4644 = vunpack.c.l.b16 %v4436
    %v4645 = vunpack.c.h.b16 %v4436
    %v4646 = vunpack.c.l.b16 %v4437
    %v4647 = vunpack.c.h.b16 %v4437
    %v4648 = vunpack.c.l.b16 %v4438
    %v4649 = vunpack.c.h.b16 %v4438
    %v4650 = vunpack.c.l.b16 %v4439
    %v4651 = vunpack.c.h.b16 %v4439
    %v4652 = vunpack.c.l.b16 %v4440
    %v4653 = vunpack.c.h.b16 %v4440
    %v4654 = vunpack.c.l.b16 %v4441
    %v4655 = vunpack.c.h.b16 %v4441
    %v4656 = vunpack.c.l.b16 %v4442
    %v4657 = vunpack.c.h.b16 %v4442
    %v4658 = vunpack.c.l.b16 %v4443
    %v4659 = vunpack.c.h.b16 %v4443
    %v4660 = vunpack.c.l.b16 %v4444
    %v4661 = vunpack.c.h.b16 %v4444
    %v4662 = vunpack.c.l.b16 %v4445
    %v4663 = vunpack.c.h.b16 %v4445
    %v4664 = vunpack.c.l.b16 %v4446
    %v4665 = vunpack.c.h.b16 %v4446
    %v4666 = vunpack.c.l.b16 %v4447
    %v4667 = vunpack.c.h.b16 %v4447
    %v4668 = vunpack.c.l.b16 %v4448
    %v4669 = vunpack.c.h.b16 %v4448
    %v4670 = vunpack.c.l.b16 %v4449
    %v4671 = vunpack.c.h.b16 %v4449
    %v4672 = vunpack.c.l.b16 %v4450
    %v4673 = vunpack.c.h.b16 %v4450
    %v4674 = vunpack.c.l.b16 %v4451
    %v4675 = vunpack.c.h.b16 %v4451
    %v4676 = vunpack.c.l.b16 %v4452
    %v4677 = vunpack.c.h.b16 %v4452
    %v4678 = vunpack.c.l.b16 %v4453
    %v4679 = vunpack.c.h.b16 %v4453
    %v4680 = vunpack.c.l.b16 %v4454
    %v4681 = vunpack.c.h.b16 %v4454
    %v4682 = vunpack.c.l.b16 %v4455
    %v4683 = vunpack.c.h.b16 %v4455
    %v4684 = vunpack.c.l.b16 %v4456
    %v4685 = vunpack.c.h.b16 %v4456
    %v4686 = vunpack.c.l.b16 %v4457
    %v4687 = vunpack.c.h.b16 %v4457
    %v4688 = vunpack.c.l.b16 %v4458
    %v4689 = vunpack.c.h.b16 %v4458
    %v4690 = vunpack.c.l.b16 %v4459
    %v4691 = vunpack.c.h.b16 %v4459
    %v4692 = vunpack.c.l.b16 %v4460
    %v4693 = vunpack.c.h.b16 %v4460
    %v4694 = vunpack.c.l.b16 %v4461
    %v4695 = vunpack.c.h.b16 %v4461
    %v4696 = vunpack.c.l.b16 %v4462
    %v4697 = vunpack.c.h.b16 %v4462
    %v4698 = vunpack.c.l.b16 %v4463
    %v4699 = vunpack.c.h.b16 %v4463
    %v4700 = vunpack.c.l.b16 %v4464
    %v4701 = vunpack.c.h.b16 %v4464
    %v4702 = vunpack.c.l.b16 %v4465
    %v4703 = vunpack.c.h.b16 %v4465
    %v4704 = vunpack.c.l.b16 %v4466
    %v4705 = vunpack.c.h.b16 %v4466
    %v4706 = vunpack.c.l.b16 %v4467
    %v4707 = vunpack.c.h.b16 %v4467
    %v4708 = vunpack.c.l.b16 %v4468
    %v4709 = vunpack.c.h.b16 %v4468
    %v4710 = vunpack.c.l.b16 %v4469
    %v4711 = vunpack.c.h.b16 %v4469
    %v4712 = vunpack.c.l.b16 %v4470
    %v4713 = vunpack.c.h.b16 %v4470
    %v4714 = vunpack.c.l.b16 %v4471
    %v4715 = vunpack.c.h.b16 %v4471
    %v4716 = vunpack.c.l.b16 %v4472
    %v4717 = vunpack.c.h.b16 %v4472
    %v4718 = vunpack.c.l.b16 %v4473
    %v4719 = vunpack.c.h.b16 %v4473
    %v4720 = vunpack.c.l.b16 %v4474
    %v4721 = vunpack.c.h.b16 %v4474
    %v4722 = vunpack.c.l.b16 %v4475
    %v4723 = vunpack.c.h.b16 %v4475
    %v4724 = vunpack.c.l.b16 %v4476
    %v4725 = vunpack.c.h.b16 %v4476
    %v4726 = vunpack.c.l.b16 %v4477
    %v4727 = vunpack.c.h.b16 %v4477
    %v4728 = vunpack.c.l.b16 %v4478
    %v4729 = vunpack.c.h.b16 %v4478
    %v4730 = vunpack.c.l.b16 %v4479
    %v4731 = vunpack.c.h.b16 %v4479
    %v4732 = vunpack.c.l.b16 %v4480
    %v4733 = vunpack.c.h.b16 %v4480
    %v4734 = vunpack.c.l.b16 %v4481
    %v4735 = vunpack.c.h.b16 %v4481
    %v4736 = vunpack.c.l.b16 %v4482
    %v4737 = vunpack.c.h.b16 %v4482
    %v4738 = vunpack.c.l.b16 %v4483
    %v4739 = vunpack.c.h.b16 %v4483
    %v4740 = vunpack.c.l.b16 %v4484
    %v4741 = vunpack.c.h.b16 %v4484
    %v4742 = vunpack.c.l.b16 %v4485
    %v4743 = vunpack.c.h.b16 %v4485
    %v4744 = vunpack.c.l.b16 %v4486
    %v4745 = vunpack.c.h.b16 %v4486
    %v4746 = vunpack.c.l.b16 %v4487
    %v4747 = vunpack.c.h.b16 %v4487
    %v4748 = vunpack.c.l.b16 %v4488
    %v4749 = vunpack.c.h.b16 %v4488
    %v4750 = vunpack.c.l.b16 %v4489
    %v4751 = vunpack.c.h.b16 %v4489
    %v4752 = vunpack.c.l.b16 %v4490
    %v4753 = vunpack.c.h.b16 %v4490
    %v4754 = vunpack.c.l.b16 %v4491
    %v4755 = vunpack.c.h.b16 %v4491
    %v4756 = vunpack.c.l.b16 %v4492
    %v4757 = vunpack.c.h.b16 %v4492
    %v4758 = vunpack.c.l.b16 %v4493
    %v4759 = vunpack.c.h.b16 %v4493
    %v4760 = vunpack.c.l.b16 %v4494
    %v4761 = vunpack.c.h.b16 %v4494
    %v4762 = vunpack.c.l.b16 %v4495
    %v4763 = vunpack.c.h.b16 %v4495
    %v4764 = vunpack.c.l.b16 %v4496
    %v4765 = vunpack.c.h.b16 %v4496
    %v4766 = vunpack.c.l.b16 %v4497
    %v4767 = vunpack.c.h.b16 %v4497
    %v4768 = vunpack.c.l.b16 %v4498
    %v4769 = vunpack.c.h.b16 %v4498
    %v4770 = vunpack.c.l.b16 %v4499
    %v4771 = vunpack.c.h.b16 %v4499
    %v4772 = vunpack.c.l.b16 %v4500
    %v4773 = vunpack.c.h.b16 %v4500
    %v4774 = vunpack.c.l.b16 %v4501
    %v4775 = vunpack.c.h.b16 %v4501
    %v4776 = vunpack.c.l.b16 %v4502
    %v4777 = vunpack.c.h.b16 %v4502
    %v4778 = vunpack.c.l.b16 %v4503
    %v4779 = vunpack.c.h.b16 %v4503
    %v4780 = vunpack.c.l.b16 %v4504
    %v4781 = vunpack.c.h.b16 %v4504
    %v4782 = vunpack.c.l.b16 %v4505
    %v4783 = vunpack.c.h.b16 %v4505
    %v4784 = vunpack.c.l.b16 %v4506
    %v4785 = vunpack.c.h.b16 %v4506
    %v4786 = vunpack.c.l.b16 %v4507
    %v4787 = vunpack.c.h.b16 %v4507
    %v4788 = vunpack.c.l.b16 %v4508
    %v4789 = vunpack.c.h.b16 %v4508
    %v4790 = vunpack.c.l.b16 %v4509
    %v4791 = vunpack.c.h.b16 %v4509
    %v4792 = vunpack.c.l.b16 %v4510
    %v4793 = vunpack.c.h.b16 %v4510
    %v4794 = vunpack.c.l.b16 %v4511
    %v4795 = vunpack.c.h.b16 %v4511
    %v4796 = vunpack.c.l.b16 %v4512
    %v4797 = vunpack.c.h.b16 %v4512
    %v4798 = vunpack.c.l.b16 %v4513
    %v4799 = vunpack.c.h.b16 %v4513
    %v4800 = vunpack.c.l.b16 %v4514
    %v4801 = vunpack.c.h.b16 %v4514
    %v4802 = vunpack.c.l.b16 %v4515
    %v4803 = vunpack.c.h.b16 %v4515
    %v4804 = vpack.c.b16 %v4616, %v4612
    %v4805 = vpack.c.b16 %v4617, %v4613
    %v4806 = vpack.c.b16 %v4618, %v4614
    %v4807 = vpack.c.b16 %v4619, %v4615
    %v4808 = vpack.c.b16 %v4624, %v4620
    %v4809 = vpack.c.b16 %v4625, %v4621
    %v4810 = vpack.c.b16 %v4626, %v4622
    %v4811 = vpack.c.b16 %v4627, %v4623
    %v4812 = vpack.c.b16 %v4632, %v4628
    %v4813 = vpack.c.b16 %v4633, %v4629
    %v4814 = vpack.c.b16 %v4634, %v4630
    %v4815 = vpack.c.b16 %v4635, %v4631
    %v4816 = vpack.c.b16 %v4640, %v4636
    %v4817 = vpack.c.b16 %v4641, %v4637
    %v4818 = vpack.c.b16 %v4642, %v4638
    %v4819 = vpack.c.b16 %v4643, %v4639
    %v4820 = vpack.c.b16 %v4648, %v4644
    %v4821 = vpack.c.b16 %v4649, %v4645
    %v4822 = vpack.c.b16 %v4650, %v4646
    %v4823 = vpack.c.b16 %v4651, %v4647
    %v4824 = vpack.c.b16 %v4656, %v4652
    %v4825 = vpack.c.b16 %v4657, %v4653
    %v4826 = vpack.c.b16 %v4658, %v4654
    %v4827 = vpack.c.b16 %v4659, %v4655
    %v4828 = vpack.c.b16 %v4664, %v4660
    %v4829 = vpack.c.b16 %v4665, %v4661
    %v4830 = vpack.c.b16 %v4666, %v4662
    %v4831 = vpack.c.b16 %v4667, %v4663
    %v4832 = vpack.c.b16 %v4672, %v4668
    %v4833 = vpack.c.b16 %v4673, %v4669
    %v4834 = vpack.c.b16 %v4674, %v4670
    %v4835 = vpack.c.b16 %v4675, %v4671
    %v4836 = vpack.c.b16 %v4680, %v4676
    %v4837 = vpack.c.b16 %v4681, %v4677
    %v4838 = vpack.c.b16 %v4682, %v4678
    %v4839 = vpack.c.b16 %v4683, %v4679
    %v4840 = vpack.c.b16 %v4688, %v4684
    %v4841 = vpack.c.b16 %v4689, %v4685
    %v4842 = vpack.c.b16 %v4690, %v4686
    %v4843 = vpack.c.b16 %v4691, %v4687
    %v4844 = vpack.c.b16 %v4696, %v4692
    %v4845 = vpack.c.b16 %v4697, %v4693
    %v4846 = vpack.c.b16 %v4698, %v4694
    %v4847 = vpack.c.b16 %v4699, %v4695
    %v4848 = vpack.c.b16 %v4704, %v4700
    %v4849 = vpack.c.b16 %v4705, %v4701
    %v4850 = vpack.c.b16 %v4706, %v4702
    %v4851 = vpack.c.b16 %v4707, %v4703
    %v4852 = vpack.c.b16 %v4712, %v4708
    %v4853 = vpack.c.b16 %v4713, %v4709
    %v4854 = vpack.c.b16 %v4714, %v4710
    %v4855 = vpack.c.b16 %v4715, %v4711
    %v4856 = vpack.c.b16 %v4720, %v4716
    %v4857 = vpack.c.b16 %v4721, %v4717
    %v4858 = vpack.c.b16 %v4722, %v4718
    %v4859 = vpack.c.b16 %v4723, %v4719
    %v4860 = vpack.c.b16 %v4728, %v4724
    %v4861 = vpack.c.b16 %v4729, %v4725
    %v4862 = vpack.c.b16 %v4730, %v4726
    %v4863 = vpack.c.b16 %v4731, %v4727
    %v4864 = vpack.c.b16 %v4736, %v4732
    %v4865 = vpack.c.b16 %v4737, %v4733
    %v4866 = vpack.c.b16 %v4738, %v4734
    %v4867 = vpack.c.b16 %v4739, %v4735
    %v4868 = vpack.c.b16 %v4744, %v4740
    %v4869 = vpack.c.b16 %v4745, %v4741
    %v4870 = vpack.c.b16 %v4746, %v4742
    %v4871 = vpack.c.b16 %v4747, %v4743
    %v4872 = vpack.c.b16 %v4752, %v4748
    %v4873 = vpack.c.b16 %v4753, %v4749
    %v4874 = vpack.c.b16 %v4754, %v4750
    %v4875 = vpack.c.b16 %v4755, %v4751
    %v4876 = vpack.c.b16 %v4760, %v4756
    %v4877 = vpack.c.b16 %v4761, %v4757
    %v4878 = vpack.c.b16 %v4762, %v4758
    %v4879 = vpack.c.b16 %v4763, %v4759
    %v4880 = vpack.c.b16 %v4768, %v4764
    %v4881 = vpack.c.b16 %v4769, %v4765
    %v4882 = vpack.c.b16 %v4770, %v4766
    %v4883 = vpack.c.b16 %v4771, %v4767
    %v4884 = vpack.c.b16 %v4776, %v4772
    %v4885 = vpack.c.b16 %v4777, %v4773
    %v4886 = vpack.c.b16 %v4778, %v4774
    %v4887 = vpack.c.b16 %v4779, %v4775
    %v4888 = vpack.c.b16 %v4784, %v4780
    %v4889 = vpack.c.b16 %v4785, %v4781
    %v4890 = vpack.c.b16 %v4786, %v4782
    %v4891 = vpack.c.b16 %v4787, %v4783
    %v4892 = vpack.c.b16 %v4792, %v4788
    %v4893 = vpack.c.b16 %v4793, %v4789
    %v4894 = vpack.c.b16 %v4794, %v4790
    %v4895 = vpack.c.b16 %v4795, %v4791
    %v4896 = vpack.c.b16 %v4800, %v4796
    %v4897 = vpack.c.b16 %v4801, %v4797
    %v4898 = vpack.c.b16 %v4802, %v4798
    %v4899 = vpack.c.b16 %v4803, %v4799
    %4996 = vmatprep.subr.bf16.mxu0 %v4805
    %4997 = vmatpush1.bf16.msra.mxu0 %v4804
    %4998 = vmatprep.subr.bf16.mxu0 %v4809
    %4999 = vmatpush1.bf16.msra.mxu0 %v4808
    %5000 = vmatprep.subr.bf16.mxu0 %v4813
    %5001 = vmatpush1.bf16.msra.mxu0 %v4812
    %5002 = vmatprep.subr.bf16.mxu0 %v4817
    %5003 = vmatpush1.bf16.msra.mxu0 %v4816
    %5004 = vmatprep.subr.bf16.mxu0 %v4821
    %5005 = vmatpush1.bf16.msra.mxu0 %v4820
    %5006 = vmatprep.subr.bf16.mxu0 %v4825
    %5007 = vmatpush1.bf16.msra.mxu0 %v4824
    %5008 = vmatprep.subr.bf16.mxu0 %v4829
    %5009 = vmatpush1.bf16.msra.mxu0 %v4828
    %5010 = vmatprep.subr.bf16.mxu0 %v4833
    %5011 = vmatpush1.bf16.msra.mxu0 %v4832
    %5012 = vmatprep.subr.bf16.mxu0 %v4837
    %5013 = vmatpush1.bf16.msra.mxu0 %v4836
    %5014 = vmatprep.subr.bf16.mxu0 %v4841
    %5015 = vmatpush1.bf16.msra.mxu0 %v4840
    %5016 = vmatprep.subr.bf16.mxu0 %v4845
    %5017 = vmatpush1.bf16.msra.mxu0 %v4844
    %5018 = vmatprep.subr.bf16.mxu0 %v4849
    %5019 = vmatpush1.bf16.msra.mxu0 %v4848
    %5020 = vmatprep.subr.bf16.mxu0 %v4853
    %5021 = vmatpush1.bf16.msra.mxu0 %v4852
    %5022 = vmatprep.subr.bf16.mxu0 %v4857
    %5023 = vmatpush1.bf16.msra.mxu0 %v4856
    %5024 = vmatprep.subr.bf16.mxu0 %v4861
    %5025 = vmatpush1.bf16.msra.mxu0 %v4860
    %5026 = vmatprep.subr.bf16.mxu0 %v4865
    %5027 = vmatpush1.bf16.msra.mxu0 %v4864
    %5028 = vmatprep.mubr.bf16.mxu0 %v4418
    %5029 = vmatmul.mubr.bf16.gmra.mrb[0].mxu0 %v4417
    %v5030 = vpop.f32.mrb[0].mxu0
    %v5031 = vadd.f32 0.0, %v5030
    %v5032 = vpop.f32.mrb[0].mxu0
    %v5033 = vadd.f32 0.0, %v5032
    %v5034 = vpop.f32.mrb[0].mxu0
    %v5035 = vpop.f32.mrb[0].mxu0
    %5036 = vdwg.mxu0
    %5037 = vmatprep.subr.bf16.mxu0 %v4869
    %5038 = vmatpush1.bf16.msra.mxu0 %v4868
    %5039 = vmatprep.subr.bf16.mxu0 %v4873
    %5040 = vmatpush1.bf16.msra.mxu0 %v4872
    %5041 = vmatprep.subr.bf16.mxu0 %v4877
    %5042 = vmatpush1.bf16.msra.mxu0 %v4876
    %5043 = vmatprep.subr.bf16.mxu0 %v4881
    %5044 = vmatpush1.bf16.msra.mxu0 %v4880
    %5045 = vmatprep.subr.bf16.mxu0 %v4885
    %5046 = vmatpush1.bf16.msra.mxu0 %v4884
    %5047 = vmatprep.subr.bf16.mxu0 %v4889
    %5048 = vmatpush1.bf16.msra.mxu0 %v4888
    %5049 = vmatprep.subr.bf16.mxu0 %v4893
    %5050 = vmatpush1.bf16.msra.mxu0 %v4892
    %5051 = vmatprep.subr.bf16.mxu0 %v4897
    %5052 = vmatpush1.bf16.msra.mxu0 %v4896
    %5053 = vmatprep.subr.bf16.mxu0 0
    %5054 = vmatpush1.bf16.msra.mxu0 0
    %5055 = vmatprep.subr.bf16.mxu0 0
    %5056 = vmatpush1.bf16.msra.mxu0 0
    %5057 = vmatprep.subr.bf16.mxu0 0
    %5058 = vmatpush1.bf16.msra.mxu0 0
    %5059 = vmatprep.subr.bf16.mxu0 0
    %5060 = vmatpush1.bf16.msra.mxu0 0
    %5061 = vmatprep.subr.bf16.mxu0 0
    %5062 = vmatpush1.bf16.msra.mxu0 0
    %5063 = vmatprep.subr.bf16.mxu0 0
    %5064 = vmatpush1.bf16.msra.mxu0 0
    %5065 = vmatprep.subr.bf16.mxu0 0
    %5066 = vmatpush1.bf16.msra.mxu0 0
    %5067 = vmatprep.subr.bf16.mxu0 0
    %5068 = vmatpush1.bf16.msra.mxu0 0
    %5069 = vmatprep.mubr.bf16.mxu0 0
    %5070 = vmatmul.mubr.bf16.gmra.mrb[0].mxu0 %v4419
    %v5071 = vpop.f32.mrb[0].mxu0
    %v5072 = vadd.f32 %v5031, %v5071
    %v5073 = vpop.f32.mrb[0].mxu0
    %v5074 = vadd.f32 %v5033, %v5073
    %v5075 = vpop.f32.mrb[0].mxu0
    %v5076 = vpop.f32.mrb[0].mxu0
    %5077 = vdwg.mxu0
    %5078 = vmatprep.subr.bf16.mxu0 %v4807
    %5079 = vmatpush1.bf16.msra.mxu0 %v4806
    %5080 = vmatprep.subr.bf16.mxu0 %v4811
    %5081 = vmatpush1.bf16.msra.mxu0 %v4810
    %5082 = vmatprep.subr.bf16.mxu0 %v4815
    %5083 = vmatpush1.bf16.msra.mxu0 %v4814
    %5084 = vmatprep.subr.bf16.mxu0 %v4819
    %5085 = vmatpush1.bf16.msra.mxu0 %v4818
    %5086 = vmatprep.subr.bf16.mxu0 %v4823
    %5087 = vmatpush1.bf16.msra.mxu0 %v4822
    %5088 = vmatprep.subr.bf16.mxu0 %v4827
    %5089 = vmatpush1.bf16.msra.mxu0 %v4826
    %5090 = vmatprep.subr.bf16.mxu0 %v4831
    %5091 = vmatpush1.bf16.msra.mxu0 %v4830
    %5092 = vmatprep.subr.bf16.mxu0 %v4835
    %5093 = vmatpush1.bf16.msra.mxu0 %v4834
    %5094 = vmatprep.subr.bf16.mxu0 %v4839
    %5095 = vmatpush1.bf16.msra.mxu0 %v4838
    %5096 = vmatprep.subr.bf16.mxu0 %v4843
    %5097 = vmatpush1.bf16.msra.mxu0 %v4842
    %5098 = vmatprep.subr.bf16.mxu0 %v4847
    %5099 = vmatpush1.bf16.msra.mxu0 %v4846
    %5100 = vmatprep.subr.bf16.mxu0 %v4851
    %5101 = vmatpush1.bf16.msra.mxu0 %v4850
    %5102 = vmatprep.subr.bf16.mxu0 %v4855
    %5103 = vmatpush1.bf16.msra.mxu0 %v4854
    %5104 = vmatprep.subr.bf16.mxu0 %v4859
    %5105 = vmatpush1.bf16.msra.mxu0 %v4858
    %5106 = vmatprep.subr.bf16.mxu0 %v4863
    %5107 = vmatpush1.bf16.msra.mxu0 %v4862
    %5108 = vmatprep.subr.bf16.mxu0 %v4867
    %5109 = vmatpush1.bf16.msra.mxu0 %v4866
    %5110 = vmatprep.mubr.bf16.mxu0 %v4418
    %5111 = vmatmul.mubr.bf16.gmra.mrb[0].mxu0 %v4417
    %v5112 = vpop.f32.mrb[0].mxu0
    %v5113 = vadd.f32 0.0, %v5112
    %v5114 = vpop.f32.mrb[0].mxu0
    %v5115 = vadd.f32 0.0, %v5114
    %v5116 = vpop.f32.mrb[0].mxu0
    %v5117 = vpop.f32.mrb[0].mxu0
    %5118 = vdwg.mxu0
    %5119 = vmatprep.subr.bf16.mxu0 %v4871
    %5120 = vmatpush1.bf16.msra.mxu0 %v4870
    %5121 = vmatprep.subr.bf16.mxu0 %v4875
    %5122 = vmatpush1.bf16.msra.mxu0 %v4874
    %5123 = vmatprep.subr.bf16.mxu0 %v4879
    %5124 = vmatpush1.bf16.msra.mxu0 %v4878
    %5125 = vmatprep.subr.bf16.mxu0 %v4883
    %5126 = vmatpush1.bf16.msra.mxu0 %v4882
    %5127 = vmatprep.subr.bf16.mxu0 %v4887
    %5128 = vmatpush1.bf16.msra.mxu0 %v4886
    %5129 = vmatprep.subr.bf16.mxu0 %v4891
    %5130 = vmatpush1.bf16.msra.mxu0 %v4890
    %5131 = vmatprep.subr.bf16.mxu0 %v4895
    %5132 = vmatpush1.bf16.msra.mxu0 %v4894
    %5133 = vmatprep.subr.bf16.mxu0 %v4899
    %5134 = vmatpush1.bf16.msra.mxu0 %v4898
    %5135 = vmatprep.subr.bf16.mxu0 0
    %5136 = vmatpush1.bf16.msra.mxu0 0
    %5137 = vmatprep.subr.bf16.mxu0 0
    %5138 = vmatpush1.bf16.msra.mxu0 0
    %5139 = vmatprep.subr.bf16.mxu0 0
    %5140 = vmatpush1.bf16.msra.mxu0 0
    %5141 = vmatprep.subr.bf16.mxu0 0
    %5142 = vmatpush1.bf16.msra.mxu0 0
    %5143 = vmatprep.subr.bf16.mxu0 0
    %5144 = vmatpush1.bf16.msra.mxu0 0
    %5145 = vmatprep.subr.bf16.mxu0 0
    %5146 = vmatpush1.bf16.msra.mxu0 0
    %5147 = vmatprep.subr.bf16.mxu0 0
    %5148 = vmatpush1.bf16.msra.mxu0 0
    %5149 = vmatprep.subr.bf16.mxu0 0
    %5150 = vmatpush1.bf16.msra.mxu0 0
    %5151 = vmatprep.mubr.bf16.mxu0 0
    %5152 = vmatmul.mubr.bf16.gmra.mrb[0].mxu0 %v4419
    %v5153 = vpop.f32.mrb[0].mxu0
    %v5154 = vadd.f32 %v5113, %v5153
    %v5155 = vpop.f32.mrb[0].mxu0
    %v5156 = vadd.f32 %v5115, %v5155
    %v5157 = vpop.f32.mrb[0].mxu0
    %v5158 = vpop.f32.mrb[0].mxu0
    %5159 = vdwg.mxu0
    %v5160 = vmul.f32 %v5072, 0.5
    %v5161 = vmul.f32 %v5074, 0.5
    %v5162 = vmul.f32 %v5154, 0.5
    %v5163 = vmul.f32 %v5156, 0.5
    %v5164 = vtanh.pop %v5160
    %v5165 = vtanh.pop %v5161
    %v5166 = vtanh.pop %v5162
    %v5167 = vtanh.pop %v5163
    %v5168 = vadd.f32 %v5164, 1.0
    %v5169 = vadd.f32 %v5165, 1.0
    %v5170 = vadd.f32 %v5166, 1.0
    %v5171 = vadd.f32 %v5167, 1.0
    %v5172 = vmul.f32 %v5168, 0.5
    %v5173 = vmul.f32 %v5169, 0.5
    %v5174 = vmul.f32 %v5170, 0.5
    %v5175 = vmul.f32 %v5171, 0.5
    %v5176 = vadd.f32 %v5172, %v5173
    %v5177 = vadd.f32 %v5176, %v5174
    %v5178 = vadd.f32 %v5177, %v5175
    %v5179 = vmul.f32 %v5178, 0.25
    %v5180 = vpack.c.bf16 %v5179, %v5179
    %v5181 = vld [vmem:[#allocation6] sm:$0xf]
    %v5182 = vld [vmem:[#allocation6 + $0x4] sm:$0xf]
    %v5183 = vld [vmem:[#allocation6 + $0x8] sm:$0xf]
    %v5184 = vld [vmem:[#allocation6 + $0xc] sm:$0xf]
    %v5185 = vld [vmem:[#allocation6 + $0x10] sm:$0xf]
    %v5186 = vld [vmem:[#allocation6 + $0x14] sm:$0xf]
    %v5187 = vld [vmem:[#allocation6 + $0x18] sm:$0xf]
    %v5188 = vld [vmem:[#allocation6 + $0x1c] sm:$0xf]
    %v5189 = vld [vmem:[#allocation6 + $0x20] sm:$0xf]
    %v5190 = vld [vmem:[#allocation6 + $0x24] sm:$0xf]
    %v5191 = vld [vmem:[#allocation6 + $0x28] sm:$0xf]
    %v5192 = vld [vmem:[#allocation6 + $0x2c] sm:$0xf]
    %v5193 = vld [vmem:[#allocation6 + $0x30] sm:$0xf]
    %v5194 = vld [vmem:[#allocation6 + $0x34] sm:$0xf]
    %v5195 = vld [vmem:[#allocation6 + $0x38] sm:$0xf]
    %v5196 = vld [vmem:[#allocation6 + $0x3c] sm:$0xf]
    %v5197 = vld [vmem:[#allocation7] sm:$0x1]
    %v5199 = vlaneseq
    %v5200 = vshrl.u32 %v5199, 7
    %v5201 = vsub.s32 0, %v5200
    %v5202 = vrot.slane %v5197, %v5201
    %v5220 = vunpack.c.l.b16 %v5181
    %v5221 = vunpack.c.l.b16 %v5182
    %v5222 = vunpack.c.l.b16 %v5183
    %v5223 = vunpack.c.l.b16 %v5184
    %v5224 = vunpack.c.l.b16 %v5185
    %v5225 = vunpack.c.l.b16 %v5186
    %v5226 = vunpack.c.l.b16 %v5187
    %v5227 = vunpack.c.l.b16 %v5188
    %v5228 = vunpack.c.l.b16 %v5189
    %v5229 = vunpack.c.l.b16 %v5190
    %v5230 = vunpack.c.l.b16 %v5191
    %v5231 = vunpack.c.l.b16 %v5192
    %v5232 = vunpack.c.l.b16 %v5193
    %v5233 = vunpack.c.l.b16 %v5194
    %v5234 = vunpack.c.l.b16 %v5195
    %v5235 = vunpack.c.l.b16 %v5196
    %v5236 = vpack.c.b16 %v5221, %v5220
    %v5237 = vpack.c.b16 %v5223, %v5222
    %v5238 = vpack.c.b16 %v5225, %v5224
    %v5239 = vpack.c.b16 %v5227, %v5226
    %v5240 = vpack.c.b16 %v5229, %v5228
    %v5241 = vpack.c.b16 %v5231, %v5230
    %v5242 = vpack.c.b16 %v5233, %v5232
    %v5243 = vpack.c.b16 %v5235, %v5234
    %5252 = vmatprep.subr.bf16.mxu0 0
    %5253 = vmatpush1.bf16.msra.mxu0 %v5236
    %5254 = vmatprep.subr.bf16.mxu0 0
    %5255 = vmatpush1.bf16.msra.mxu0 %v5237
    %5256 = vmatprep.subr.bf16.mxu0 0
    %5257 = vmatpush1.bf16.msra.mxu0 %v5238
    %5258 = vmatprep.subr.bf16.mxu0 0
    %5259 = vmatpush1.bf16.msra.mxu0 %v5239
    %5260 = vmatprep.subr.bf16.mxu0 0
    %5261 = vmatpush1.bf16.msra.mxu0 %v5240
    %5262 = vmatprep.subr.bf16.mxu0 0
    %5263 = vmatpush1.bf16.msra.mxu0 %v5241
    %5264 = vmatprep.subr.bf16.mxu0 0
    %5265 = vmatpush1.bf16.msra.mxu0 %v5242
    %5266 = vmatprep.subr.bf16.mxu0 0
    %5267 = vmatpush1.bf16.msra.mxu0 %v5243
    %5268 = vmatprep.subr.bf16.mxu0 0
    %5269 = vmatpush1.bf16.msra.mxu0 0
    %5270 = vmatprep.subr.bf16.mxu0 0
    %5271 = vmatpush1.bf16.msra.mxu0 0
    %5272 = vmatprep.subr.bf16.mxu0 0
    %5273 = vmatpush1.bf16.msra.mxu0 0
    %5274 = vmatprep.subr.bf16.mxu0 0
    %5275 = vmatpush1.bf16.msra.mxu0 0
    %5276 = vmatprep.subr.bf16.mxu0 0
    %5277 = vmatpush1.bf16.msra.mxu0 0
    %5278 = vmatprep.subr.bf16.mxu0 0
    %5279 = vmatpush1.bf16.msra.mxu0 0
    %5280 = vmatprep.subr.bf16.mxu0 0
    %5281 = vmatpush1.bf16.msra.mxu0 0
    %5282 = vmatprep.subr.bf16.mxu0 0
    %5283 = vmatpush1.bf16.msra.mxu0 0
    %5284 = vmatprep.mubr.bf16.mxu0 0
    %5285 = vmatmul.mubr.bf16.gmra.mrb[0].mxu0 %v5180
    %v5286 = vpop.f32.mrb[0].mxu0
    %v5287 = vadd.f32 %v5202, %v5286
    %v5288 = vpop.f32.mrb[0].mxu0
    %v5289 = vpop.f32.mrb[0].mxu0
    %v5290 = vpop.f32.mrb[0].mxu0
    %5291 = vdwg.mxu0
    %v5292 = vpack.c.bf16 %v5287, %v5287
    %v5293 = vld [vmem:[#allocation9] sm:$0xf]
    %v5294 = vld [vmem:[#allocation9 + $0x4] sm:$0xf]
    %v5295 = vld [vmem:[#allocation9 + $0x8] sm:$0xf]
    %v5296 = vld [vmem:[#allocation9 + $0xc] sm:$0xf]
    %v5297 = vld [vmem:[#allocation9 + $0x10] sm:$0xf]
    %v5298 = vld [vmem:[#allocation9 + $0x14] sm:$0xf]
    %v5299 = vld [vmem:[#allocation9 + $0x18] sm:$0xf]
    %v5300 = vld [vmem:[#allocation9 + $0x1c] sm:$0xf]
    %v5301 = vld [vmem:[#allocation9 + $0x20] sm:$0xf]
    %v5302 = vld [vmem:[#allocation9 + $0x24] sm:$0xf]
    %v5303 = vld [vmem:[#allocation9 + $0x28] sm:$0xf]
    %v5304 = vld [vmem:[#allocation9 + $0x2c] sm:$0xf]
    %v5305 = vld [vmem:[#allocation9 + $0x30] sm:$0xf]
    %v5306 = vld [vmem:[#allocation9 + $0x34] sm:$0xf]
    %v5307 = vld [vmem:[#allocation9 + $0x38] sm:$0xf]
    %v5308 = vld [vmem:[#allocation9 + $0x3c] sm:$0xf]
    %v5309 = vld [vmem:[#allocation10] sm:$0x1]
    %v5311 = vlaneseq
    %v5312 = vshrl.u32 %v5311, 7
    %v5313 = vsub.s32 0, %v5312
    %v5314 = vrot.slane %v5309, %v5313
    %v5332 = vunpack.c.l.b16 %v5293
    %v5333 = vunpack.c.l.b16 %v5294
    %v5334 = vunpack.c.l.b16 %v5295
    %v5335 = vunpack.c.l.b16 %v5296
    %v5336 = vunpack.c.l.b16 %v5297
    %v5337 = vunpack.c.l.b16 %v5298
    %v5338 = vunpack.c.l.b16 %v5299
    %v5339 = vunpack.c.l.b16 %v5300
    %v5340 = vunpack.c.l.b16 %v5301
    %v5341 = vunpack.c.l.b16 %v5302
    %v5342 = vunpack.c.l.b16 %v5303
    %v5343 = vunpack.c.l.b16 %v5304
    %v5344 = vunpack.c.l.b16 %v5305
    %v5345 = vunpack.c.l.b16 %v5306
    %v5346 = vunpack.c.l.b16 %v5307
    %v5347 = vunpack.c.l.b16 %v5308
    %v5348 = vpack.c.b16 %v5333, %v5332
    %v5349 = vpack.c.b16 %v5335, %v5334
    %v5350 = vpack.c.b16 %v5337, %v5336
    %v5351 = vpack.c.b16 %v5339, %v5338
    %v5352 = vpack.c.b16 %v5341, %v5340
    %v5353 = vpack.c.b16 %v5343, %v5342
    %v5354 = vpack.c.b16 %v5345, %v5344
    %v5355 = vpack.c.b16 %v5347, %v5346
    %5364 = vmatprep.subr.bf16.mxu0 0
    %5365 = vmatpush1.bf16.msra.mxu0 %v5348
    %5366 = vmatprep.subr.bf16.mxu0 0
    %5367 = vmatpush1.bf16.msra.mxu0 %v5349
    %5368 = vmatprep.subr.bf16.mxu0 0
    %5369 = vmatpush1.bf16.msra.mxu0 %v5350
    %5370 = vmatprep.subr.bf16.mxu0 0
    %5371 = vmatpush1.bf16.msra.mxu0 %v5351
    %5372 = vmatprep.subr.bf16.mxu0 0
    %5373 = vmatpush1.bf16.msra.mxu0 %v5352
    %5374 = vmatprep.subr.bf16.mxu0 0
    %5375 = vmatpush1.bf16.msra.mxu0 %v5353
    %5376 = vmatprep.subr.bf16.mxu0 0
    %5377 = vmatpush1.bf16.msra.mxu0 %v5354
    %5378 = vmatprep.subr.bf16.mxu0 0
    %5379 = vmatpush1.bf16.msra.mxu0 %v5355
    %5380 = vmatprep.subr.bf16.mxu0 0
    %5381 = vmatpush1.bf16.msra.mxu0 0
    %5382 = vmatprep.subr.bf16.mxu0 0
    %5383 = vmatpush1.bf16.msra.mxu0 0
    %5384 = vmatprep.subr.bf16.mxu0 0
    %5385 = vmatpush1.bf16.msra.mxu0 0
    %5386 = vmatprep.subr.bf16.mxu0 0
    %5387 = vmatpush1.bf16.msra.mxu0 0
    %5388 = vmatprep.subr.bf16.mxu0 0
    %5389 = vmatpush1.bf16.msra.mxu0 0
    %5390 = vmatprep.subr.bf16.mxu0 0
    %5391 = vmatpush1.bf16.msra.mxu0 0
    %5392 = vmatprep.subr.bf16.mxu0 0
    %5393 = vmatpush1.bf16.msra.mxu0 0
    %5394 = vmatprep.subr.bf16.mxu0 0
    %5395 = vmatpush1.bf16.msra.mxu0 0
    %5396 = vmatprep.mubr.bf16.mxu0 0
    %5397 = vmatmul.mubr.bf16.gmra.mrb[0].mxu0 %v5292
    %v5398 = vpop.f32.mrb[0].mxu0
    %v5399 = vadd.f32 %v5314, %v5398
    %v5400 = vpop.f32.mrb[0].mxu0
    %v5401 = vpop.f32.mrb[0].mxu0
    %v5402 = vpop.f32.mrb[0].mxu0
    %5403 = vdwg.mxu0
    %v5404 = vpack.c.bf16 %v5399, %v5399
    %v5405 = vld [vmem:[#allocation12] sm:$0xf]
    %v5406 = vld [vmem:[#allocation12 + $0x4] sm:$0xf]
    %v5407 = vld [vmem:[#allocation12 + $0x8] sm:$0xf]
    %v5408 = vld [vmem:[#allocation12 + $0xc] sm:$0xf]
    %v5409 = vld [vmem:[#allocation12 + $0x10] sm:$0xf]
    %v5410 = vld [vmem:[#allocation12 + $0x14] sm:$0xf]
    %v5411 = vld [vmem:[#allocation12 + $0x18] sm:$0xf]
    %v5412 = vld [vmem:[#allocation12 + $0x1c] sm:$0xf]
    %v5413 = vld [vmem:[#allocation12 + $0x20] sm:$0xf]
    %v5414 = vld [vmem:[#allocation12 + $0x24] sm:$0xf]
    %v5415 = vld [vmem:[#allocation12 + $0x28] sm:$0xf]
    %v5416 = vld [vmem:[#allocation12 + $0x2c] sm:$0xf]
    %v5417 = vld [vmem:[#allocation12 + $0x30] sm:$0xf]
    %v5418 = vld [vmem:[#allocation12 + $0x34] sm:$0xf]
    %v5419 = vld [vmem:[#allocation12 + $0x38] sm:$0xf]
    %v5420 = vld [vmem:[#allocation12 + $0x3c] sm:$0xf]
    %v5421 = vld [vmem:[#allocation13] sm:$0x1]
    %v5423 = vlaneseq
    %v5424 = vshrl.u32 %v5423, 7
    %v5425 = vsub.s32 0, %v5424
    %v5426 = vrot.slane %v5421, %v5425
    %v5444 = vunpack.c.l.b16 %v5405
    %v5445 = vunpack.c.l.b16 %v5406
    %v5446 = vunpack.c.l.b16 %v5407
    %v5447 = vunpack.c.l.b16 %v5408
    %v5448 = vunpack.c.l.b16 %v5409
    %v5449 = vunpack.c.l.b16 %v5410
    %v5450 = vunpack.c.l.b16 %v5411
    %v5451 = vunpack.c.l.b16 %v5412
    %v5452 = vunpack.c.l.b16 %v5413
    %v5453 = vunpack.c.l.b16 %v5414
    %v5454 = vunpack.c.l.b16 %v5415
    %v5455 = vunpack.c.l.b16 %v5416
    %v5456 = vunpack.c.l.b16 %v5417
    %v5457 = vunpack.c.l.b16 %v5418
    %v5458 = vunpack.c.l.b16 %v5419
    %v5459 = vunpack.c.l.b16 %v5420
    %v5460 = vpack.c.b16 %v5445, %v5444
    %v5461 = vpack.c.b16 %v5447, %v5446
    %v5462 = vpack.c.b16 %v5449, %v5448
    %v5463 = vpack.c.b16 %v5451, %v5450
    %v5464 = vpack.c.b16 %v5453, %v5452
    %v5465 = vpack.c.b16 %v5455, %v5454
    %v5466 = vpack.c.b16 %v5457, %v5456
    %v5467 = vpack.c.b16 %v5459, %v5458
    %5476 = vmatprep.subr.bf16.mxu0 0
    %5477 = vmatpush1.bf16.msra.mxu0 %v5460
    %5478 = vmatprep.subr.bf16.mxu0 0
    %5479 = vmatpush1.bf16.msra.mxu0 %v5461
    %5480 = vmatprep.subr.bf16.mxu0 0
    %5481 = vmatpush1.bf16.msra.mxu0 %v5462
    %5482 = vmatprep.subr.bf16.mxu0 0
    %5483 = vmatpush1.bf16.msra.mxu0 %v5463
    %5484 = vmatprep.subr.bf16.mxu0 0
    %5485 = vmatpush1.bf16.msra.mxu0 %v5464
    %5486 = vmatprep.subr.bf16.mxu0 0
    %5487 = vmatpush1.bf16.msra.mxu0 %v5465
    %5488 = vmatprep.subr.bf16.mxu0 0
    %5489 = vmatpush1.bf16.msra.mxu0 %v5466
    %5490 = vmatprep.subr.bf16.mxu0 0
    %5491 = vmatpush1.bf16.msra.mxu0 %v5467
    %5492 = vmatprep.subr.bf16.mxu0 0
    %5493 = vmatpush1.bf16.msra.mxu0 0
    %5494 = vmatprep.subr.bf16.mxu0 0
    %5495 = vmatpush1.bf16.msra.mxu0 0
    %5496 = vmatprep.subr.bf16.mxu0 0
    %5497 = vmatpush1.bf16.msra.mxu0 0
    %5498 = vmatprep.subr.bf16.mxu0 0
    %5499 = vmatpush1.bf16.msra.mxu0 0
    %5500 = vmatprep.subr.bf16.mxu0 0
    %5501 = vmatpush1.bf16.msra.mxu0 0
    %5502 = vmatprep.subr.bf16.mxu0 0
    %5503 = vmatpush1.bf16.msra.mxu0 0
    %5504 = vmatprep.subr.bf16.mxu0 0
    %5505 = vmatpush1.bf16.msra.mxu0 0
    %5506 = vmatprep.subr.bf16.mxu0 0
    %5507 = vmatpush1.bf16.msra.mxu0 0
    %5508 = vmatprep.mubr.bf16.mxu0 0
    %5509 = vmatmul.mubr.bf16.gmra.mrb[0].mxu0 %v5404
    %v5510 = vpop.f32.mrb[0].mxu0
    %v5511 = vadd.f32 %v5426, %v5510
    %v5512 = vpop.f32.mrb[0].mxu0
    %v5513 = vpop.f32.mrb[0].mxu0
    %v5514 = vpop.f32.mrb[0].mxu0
    %5515 = vdwg.mxu0
    %v5516 = vlaneseq
    %v5517 = vand.u32 %v5516, 127
    %vm5518 = vcmp.lt.s32.totalorder %v5517, 10
    %v5519 = vsel %vm5518, %v5511, -1e+30
    %5520 = vmax.xlane.f32.xlu0 %v5519
    %v5521 = vpop.xlane.xlu0 %5520
    %v5522 = vsub.f32 %v5519, %v5521
    %v5523 = vmul.f32 %v5522, 1.442695
    %v5524 = vpow.pop %v5523
    %5525 = vadd.xlane.f32.xlu0 %v5524
    %v5526 = vpop.xlane.xlu0 %5525
    %v5527 = vlog2.pop %v5526
    %v5528 = vmul.f32 %v5527, 0.6931472
    %v5529 = vadd.f32 %v5521, %v5528
    %v5530 = vsub.f32 %v5519, %v5529
    %v5531 = vld [vmem:[%s9] sm:$0xff]
    %v5532 = vmul.f32 %v5531, %v5530
    %v5533 = vsub.f32 0.0, %v5532
    %5534 = vst [vmem:[%s10] sm:$0xff] %v5533
    // Predicated region
    $region74: #{lenet_loss.1} parent=1 // pred_check
      _
    $region75: #{lenet_loss.1} parent=1 // pred_check_branch
      %5536 = sbr.rel (0) target = $region77
    $region76: #{lenet_loss.1} parent=1 // pred_region
      _
    $region77: #{lenet_loss.1} parent=1 // pred_fallthru
      _
    // Predicated region
    $region78: #{lenet_loss.1} parent=1 // pred_check
      _
    $region79: #{lenet_loss.1} parent=1 // pred_check_branch
      %5538 = sbr.rel (0) target = $region81
    $region80: #{lenet_loss.1} parent=1 // pred_region
      _
    $region81: #{lenet_loss.1} parent=1 // pred_fallthru
      _
    %5539 = vsyncpa [#allocation3], 1
    %5540 = vsyncpa [#allocation5], 1
    %5541 = vsyncpa [#allocation8], 1
    %5542 = vsyncpa [#allocation11], 1
    %5543 = vsyncpa [#allocation14], 1

</llo_original>
